<compile_context>
chip_gen: v7x
topology: tpu7x:2x2x1
jax: 0.10.0
libtpu: 0.0.40
codegen_flags: <defaults>
</compile_context>

<pallas_src>
import functools

import numpy as np
import jax
import jax.numpy as jnp
from jax import lax
from jax.experimental import pallas as pl
from jax.experimental.pallas import tpu as pltpu


BATCH = 2
IN_CH = 1          # mode='normal' hardcodes Conv2d(1, 64, 3, padding=1)
HW = 28            # FMNIST size; the pool chain 2,2,2(pad1),4 must reduce spatial to 1x1
CLASSES = 10
CLASSES_PAD = 128  # lane-dense logits slab; sliced back to 10 in the wrapper
BN_EPS = 1e-5


# ============================================================================
# Kernel A: fused conv3x3 (im2col matmul) + folded-BN bias + ReLU + max-pool
#   p_ref : (n_members * m_rows, K)   im2col patches, pool-member-major rows
#   w_ref : (K, Cout)                 BN-folded conv weight
#   b_ref : (1, Cout)                 BN-folded bias
#   o_ref : (m_rows, Cout)            pooled activation, rows ordered (n, ph, pw)
# ============================================================================
def conv_block_kernel(p_ref, w_ref, b_ref, o_ref, *, n_members, m_rows):
    z = jnp.dot(p_ref[...], w_ref[...], preferred_element_type=jnp.float32)
    z = jnp.maximum(z + b_ref[...], 0.0)                  # conv + bias(+BN) + ReLU
    out = z[0:m_rows, :]                                  # max over pool-window members
    for t in range(1, n_members):
        out = jnp.maximum(out, z[t * m_rows:(t + 1) * m_rows, :])
    o_ref[...] = out


def conv_block_pallas(patches, w_fold, b_fold, n_members):
    rows, k = patches.shape
    m_rows = rows // n_members
    cout = w_fold.shape[1]
    kern = functools.partial(conv_block_kernel, n_members=n_members, m_rows=m_rows)
    return pl.pallas_call(
        kern,
        out_shape=jax.ShapeDtypeStruct((m_rows, cout), jnp.float32),
        grid=(1,),
        in_specs=[
            pl.BlockSpec((rows, k), lambda i: (0, 0)),
            pl.BlockSpec((k, cout), lambda i: (0, 0)),
            pl.BlockSpec((1, cout), lambda i: (0, 0)),
        ],
        out_specs=pl.BlockSpec((m_rows, cout), lambda i: (0, 0)),
        compiler_params=pltpu.CompilerParams(dimension_semantics=("arbitrary",)),
    )(patches, w_fold, b_fold)


# ============================================================================
# Kernel B: last conv block fused with the classifier head
#   conv4 + bn4 + ReLU + mpool4(4)  ->  feat (N, 128)   (= feat_net output / x_errs)
#   fc1 (+bnorm_fc folded) + ReLU + fc2 (zero-padded to 128 lanes) -> logits
# ============================================================================
def tail_kernel(p_ref, w4_ref, b4_ref, w1_ref, b1_ref, w2_ref, b2_ref,
                feat_ref, logit_ref, *, n_members, m_rows):
    z = jnp.dot(p_ref[...], w4_ref[...], preferred_element_type=jnp.float32)
    z = jnp.maximum(z + b4_ref[...], 0.0)
    feat = z[0:m_rows, :]
    for t in range(1, n_members):
        feat = jnp.maximum(feat, z[t * m_rows:(t + 1) * m_rows, :])
    feat_ref[...] = feat                                  # feat_net output
    h = jnp.dot(feat, w1_ref[...], preferred_element_type=jnp.float32) + b1_ref[...]
    h = jnp.maximum(h, 0.0)                               # relu(bnorm_fc(fc1(.))), BN folded
    logit_ref[...] = jnp.dot(h, w2_ref[...], preferred_element_type=jnp.float32) + b2_ref[...]


def tail_pallas(patches, w4, b4, w1, b1, w2p, b2p, n_members):
    rows, k = patches.shape
    m_rows = rows // n_members
    c4, ch, cp = w4.shape[1], w1.shape[1], w2p.shape[1]
    kern = functools.partial(tail_kernel, n_members=n_members, m_rows=m_rows)
    return pl.pallas_call(
        kern,
        out_shape=(jax.ShapeDtypeStruct((m_rows, c4), jnp.float32),
                   jax.ShapeDtypeStruct((m_rows, cp), jnp.float32)),
        grid=(1,),
        in_specs=[
            pl.BlockSpec((rows, k), lambda i: (0, 0)),
            pl.BlockSpec((k, c4), lambda i: (0, 0)),
            pl.BlockSpec((1, c4), lambda i: (0, 0)),
            pl.BlockSpec((c4, ch), lambda i: (0, 0)),
            pl.BlockSpec((1, ch), lambda i: (0, 0)),
            pl.BlockSpec((ch, cp), lambda i: (0, 0)),
            pl.BlockSpec((1, cp), lambda i: (0, 0)),
        ],
        out_specs=(pl.BlockSpec((m_rows, c4), lambda i: (0, 0)),
                   pl.BlockSpec((m_rows, cp), lambda i: (0, 0))),
        compiler_params=pltpu.CompilerParams(dimension_semantics=("arbitrary",)),
    )(patches, w4, b4, w1, b1, w2p, b2p)


# ============================================================================
# Wrapper glue (static data movement only)
# ============================================================================
def im2col_3x3(a):
    """(N, H, W, C) -> (N, H, W, 9*C), zero 'same' padding; last dim is (dr,dc,C)-major,
    matching a PyTorch (Cout,Cin,3,3) weight reshaped via transpose(2,3,1,0)."""
    n, h, w, c = a.shape
    ap = jnp.pad(a, ((0, 0), (1, 1), (1, 1), (0, 0)))
    cols = [ap[:, dr:dr + h, dc:dc + w, :] for dr in range(3) for dc in range(3)]
    return jnp.concatenate(cols, axis=-1)


def pool_member_patches(patches, pool_k, pool_s, pool_p):
    """For each of the pool_k**2 pool-window members, gather the im2col patch at that member's
    conv position.  Rows come out member-major: (pool_k**2 * N*Hp*Wp, K).
    Out-of-range members (MaxPool2d pads with -inf) are clamped to a valid in-window position,
    which leaves the max unchanged."""
    n, h, w, k = patches.shape
    hp = (h + 2 * pool_p - pool_k) // pool_s + 1
    wp = (w + 2 * pool_p - pool_k) // pool_s + 1
    blocks = []
    for ti in range(pool_k):
        r_idx = np.clip(np.arange(hp) * pool_s - pool_p + ti, 0, h - 1)
        for tj in range(pool_k):
            c_idx = np.clip(np.arange(wp) * pool_s - pool_p + tj, 0, w - 1)
            blk = jnp.take(jnp.take(patches, r_idx, axis=1), c_idx, axis=2)
            blocks.append(blk.reshape(n * hp * wp, k))
    return jnp.concatenate(blocks, axis=0), (hp, wp)


def fold_bn(w_mat, b, bn):
    """Fold eval-mode BatchNorm into a (K, Cout) weight matrix and (Cout,) bias."""
    gamma, beta, mean, var = bn
    s = gamma * lax.rsqrt(var + BN_EPS)
    return w_mat * s[None, :], (((b - mean) * s) + beta)[None, :]


def forward(x_nchw, params):
    """Net_vanilla_CNN_normal.forward (mode='normal', eval-mode BN). Returns (logits, x_errs)."""
    n = x_nchw.shape[0]
    a = jnp.transpose(x_nchw, (0, 2, 3, 1))                      # NCHW -> NHWC (layout plumbing)

    # ---- feat_net blocks 1..3: each one fused pallas_call over the whole batch ----
    for name, bn_name, (pk, ps, pp) in (("1", "bn1", (2, 2, 0)),
                                        ("2", "bn2", (2, 2, 0)),
                                        ("3", "bn3", (2, 2, 1))):
        w, b = fold_bn(params["w" + name], params["b" + name], params[bn_name])
        pm, (hp, wp) = pool_member_patches(im2col_3x3(a), pk, ps, pp)
        a = conv_block_pallas(pm, w, b, pk * pk).reshape(n, hp, wp, -1)

    # ---- block 4 (conv4+bn4+ReLU+mpool4) fused with fc1 + bnorm_fc + ReLU + fc2 ----
    w4, b4 = fold_bn(params["w4"], params["b4"], params["bn4"])
    w1f, b1f = fold_bn(params["fc1_w"], params["fc1_b"], params["bn_fc"])
    w2p = jnp.zeros((w1f.shape[1], CLASSES_PAD), jnp.float32).at[:, :CLASSES].set(params["fc2_w"])
    b2p = jnp.zeros((1, CLASSES_PAD), jnp.float32).at[0, :CLASSES].set(params["fc2_b"])
    pm, _ = pool_member_patches(im2col_3x3(a), 4, 4, 0)          # 4x4 pool -> 1x1 spatial
    feat, logits_pad = tail_pallas(pm, w4, b4, w1f, b1f, w2p, b2p, 16)

    logits = logits_pad[:, :CLASSES]                             # (N, 10)
    x_errs = feat.reshape(n, -1, 1, 1)                           # (N, 128, 1, 1) NCHW
    return logits, x_errs


# ============================================================================
# Pure-JAX reference (XLA) for correctness checking
# ============================================================================
def reference_forward(x_nchw, params):
    hi = lax.Precision.HIGHEST

    def block(a, w_mat, b, bn, pk, ps, pp):
        cin = a.shape[-1]
        w_hwio = w_mat.reshape(3, 3, cin, -1)
        y = lax.conv_general_dilated(a, w_hwio, (1, 1), "SAME",
                                     dimension_numbers=("NHWC", "HWIO", "NHWC"),
                                     precision=hi) + b
        gamma, beta, mean, var = bn
        y = (y - mean) * (gamma * lax.rsqrt(var + BN_EPS)) + beta
        y = jnp.maximum(y, 0.0)
        return lax.reduce_window(y, -jnp.inf, lax.max, (1, pk, pk, 1), (1, ps, ps, 1),
                                 [(0, 0), (pp, pp), (pp, pp), (0, 0)])

    a = jnp.transpose(x_nchw, (0, 2, 3, 1))
    a = block(a, params["w1"], params["b1"], params["bn1"], 2, 2, 0)
    a = block(a, params["w2"], params["b2"], params["bn2"], 2, 2, 0)
    a = block(a, params["w3"], params["b3"], params["bn3"], 2, 2, 1)
    a = block(a, params["w4"], params["b4"], params["bn4"], 4, 4, 0)
    feat = a.reshape(a.shape[0], -1)                             # (N, 128), spatial is 1x1
    g, bt, mu, vr = params["bn_fc"]
    h = jnp.dot(feat, params["fc1_w"], precision=hi) + params["fc1_b"]
    h = jnp.maximum((h - mu) * (g * lax.rsqrt(vr + BN_EPS)) + bt, 0.0)
    logits = jnp.dot(h, params["fc2_w"], precision=hi) + params["fc2_b"]
    return logits, feat


# ============================================================================
# Parameter construction (deterministic, PyTorch layouts mapped to matmul form)
# ============================================================================
def init_params(key):
    ks = jax.random.split(key, 10)

    def conv_params(k, cin, cout):
        kw, kb = jax.random.split(k)
        # PyTorch Conv2d weight (Cout, Cin, 3, 3) -> (9*Cin, Cout) matrix, (dr,dc,cin)-major rows
        w_pt = jax.random.normal(kw, (cout, cin, 3, 3), jnp.float32) * float(np.sqrt(2.0 / (cin * 9)))
        b = 0.01 * jax.random.normal(kb, (cout,), jnp.float32)
        w_mat = jnp.transpose(w_pt, (2, 3, 1, 0)).reshape(cin * 9, cout)
        return w_mat, b

    def bn_params(k, c):
        k1, k2, k3, k4 = jax.random.split(k, 4)
        gamma = 1.0 + 0.1 * jax.random.normal(k1, (c,), jnp.float32)
        beta = 0.1 * jax.random.normal(k2, (c,), jnp.float32)
        mean = 0.1 * jax.random.normal(k3, (c,), jnp.float32)
        var = 1.0 + 0.1 * jax.random.uniform(k4, (c,), jnp.float32)
        return (gamma, beta, mean, var)

    w1, b1 = conv_params(ks[0], IN_CH, 64)
    w2, b2 = conv_params(ks[1], 64, 128)
    w3, b3 = conv_params(ks[2], 128, 128)
    w4, b4 = conv_params(ks[3], 128, 128)

    k1w, k1b, k2w, k2b = jax.random.split(ks[4], 4)
    # fc1 = Conv2d(128,128,1) weight (out,in,1,1) -> stored directly as (in, out) matrix
    fc1_w = jax.random.normal(k1w, (128, 128), jnp.float32) * float(np.sqrt(2.0 / 128))
    fc1_b = 0.01 * jax.random.normal(k1b, (128,), jnp.float32)
    # fc2 = Conv2d(128,10,1) -> (in=128, out=10) matrix
    fc2_w = jax.random.normal(k2w, (128, CLASSES), jnp.float32) * float(np.sqrt(1.0 / 128))
    fc2_b = 0.01 * jax.random.normal(k2b, (CLASSES,), jnp.float32)

    return {
        "w1": w1, "b1": b1, "bn1": bn_params(ks[5], 64),
        "w2": w2, "b2": b2, "bn2": bn_params(ks[6], 128),
        "w3": w3, "b3": b3, "bn3": bn_params(ks[7], 128),
        "w4": w4, "b4": b4, "bn4": bn_params(ks[8], 128),
        "fc1_w": fc1_w, "fc1_b": fc1_b, "bn_fc": bn_params(ks[9], 128),
        "fc2_w": fc2_w, "fc2_b": fc2_b,
    }


if __name__ == "__main__":
    root = jax.random.PRNGKey(0)
    k_x, k_p = jax.random.split(root)
    x = jax.random.normal(k_x, (BATCH, IN_CH, HW, HW), jnp.float32)     # NCHW, FMNIST-sized
    params = init_params(k_p)

    logits, x_errs = jax.jit(forward)(x, params)
    jax.block_until_ready((logits, x_errs))

    assert logits.shape == (BATCH, CLASSES), logits.shape
    assert x_errs.shape == (BATCH, 128, 1, 1), x_errs.shape
    assert bool(jnp.all(jnp.isfinite(logits))) and bool(jnp.all(jnp.isfinite(x_errs)))

    # cross-check against a pure-JAX reference (loose tol: MXU f32 matmul vs XLA HIGHEST conv)
    ref_logits, ref_feat = reference_forward(x, params)
    np.testing.assert_allclose(np.asarray(logits), np.asarray(ref_logits), rtol=5e-2, atol=5e-2)
    np.testing.assert_allclose(np.asarray(x_errs[:, :, 0, 0]), np.asarray(ref_feat),
                               rtol=5e-2, atol=5e-2)

    print("KERNEL_OK")
</pallas_src>

<mosaic_0001>
module attributes {stable_mosaic.version = 11 : i64} {
  func.func @conv_block_kernel(%arg0: i32, %arg1: memref<1568x9xf32, #tpu.memory_space<vmem>>, %arg2: memref<9x64xf32, #tpu.memory_space<vmem>>, %arg3: memref<1x64xf32, #tpu.memory_space<vmem>>, %arg4: memref<392x64xf32, #tpu.memory_space<vmem>>) attributes {dimension_semantics = [#tpu.dimension_semantics<arbitrary>], iteration_bounds = array<i64: 1>, scalar_prefetch = 0 : i64, scratch_operands = 0 : i64, tpu.core_type = #tpu.core_type<tc>, window_params = [{pipeline_mode = #tpu.pipeline_mode<synchronous>, transform_indices = @transform_0, window_bounds = array<i64: 1568, 9>}, {pipeline_mode = #tpu.pipeline_mode<synchronous>, transform_indices = @transform_1, window_bounds = array<i64: 9, 64>}, {pipeline_mode = #tpu.pipeline_mode<synchronous>, transform_indices = @transform_2, window_bounds = array<i64: 1, 64>}, {pipeline_mode = #tpu.pipeline_mode<synchronous>, transform_indices = @transform_3, window_bounds = array<i64: 392, 64>}]} {
    %c0 = arith.constant 0 : index
    %c0_0 = arith.constant 0 : index
    %0 = vector.load %arg1[%c0, %c0_0] : memref<1568x9xf32, #tpu.memory_space<vmem>>, vector<1568x9xf32>
    %c0_1 = arith.constant 0 : index
    %c0_2 = arith.constant 0 : index
    %1 = vector.load %arg2[%c0_1, %c0_2] : memref<9x64xf32, #tpu.memory_space<vmem>>, vector<9x64xf32>
    %cst = arith.constant dense<0.000000e+00> : vector<1568x64xf32>
    %2 = tpu.matmul %0, %1, %cst {dimension_numbers = #tpu.dot_dimension_numbers<[1], [0], [0], [1], [0, 0, 1, 1], [], []>} : vector<1568x9xf32>, vector<9x64xf32>, vector<1568x64xf32> -> vector<1568x64xf32>
    %c0_3 = arith.constant 0 : index
    %c0_4 = arith.constant 0 : index
    %3 = vector.load %arg3[%c0_3, %c0_4] : memref<1x64xf32, #tpu.memory_space<vmem>>, vector<1x64xf32>
    %4 = vector.broadcast %3 : vector<1x64xf32> to vector<1568x64xf32>
    %5 = arith.addf %2, %4 : vector<1568x64xf32>
    %cst_5 = arith.constant 0.000000e+00 : f32
    %6 = vector.broadcast %cst_5 : f32 to vector<1568x64xf32>
    %7 = arith.maximumf %5, %6 : vector<1568x64xf32>
    %8 = vector.extract_strided_slice %7 {offsets = [0, 0], sizes = [392, 64], strides = [1, 1]} : vector<1568x64xf32> to vector<392x64xf32>
    %9 = vector.extract_strided_slice %7 {offsets = [392, 0], sizes = [392, 64], strides = [1, 1]} : vector<1568x64xf32> to vector<392x64xf32>
    %10 = arith.maximumf %8, %9 : vector<392x64xf32>
    %11 = vector.extract_strided_slice %7 {offsets = [784, 0], sizes = [392, 64], strides = [1, 1]} : vector<1568x64xf32> to vector<392x64xf32>
    %12 = arith.maximumf %10, %11 : vector<392x64xf32>
    %13 = vector.extract_strided_slice %7 {offsets = [1176, 0], sizes = [392, 64], strides = [1, 1]} : vector<1568x64xf32> to vector<392x64xf32>
    %14 = arith.maximumf %12, %13 : vector<392x64xf32>
    %c0_6 = arith.constant 0 : index
    %c0_7 = arith.constant 0 : index
    %15 = vector.load %arg4[%c0_6, %c0_7] : memref<392x64xf32, #tpu.memory_space<vmem>>, vector<392x64xf32>
    tpu.vector_store %arg4[%c0_6, %c0_7], %14 {strides = array<i32>} : memref<392x64xf32, #tpu.memory_space<vmem>>, vector<392x64xf32>,
    return
  }
  func.func @transform_0(%arg0: i32) -> (i32, i32) {
    %c0_i32 = arith.constant 0 : i32
    %c0_i32_0 = arith.constant 0 : i32
    %c0_i32_1 = arith.constant 0 : i32
    return %c0_i32, %c0_i32_0 : i32, i32
  }
  func.func @transform_1(%arg0: i32) -> (i32, i32) {
    %c0_i32 = arith.constant 0 : i32
    %c0_i32_0 = arith.constant 0 : i32
    %c0_i32_1 = arith.constant 0 : i32
    return %c0_i32, %c0_i32_0 : i32, i32
  }
  func.func @transform_2(%arg0: i32) -> (i32, i32) {
    %c0_i32 = arith.constant 0 : i32
    %c0_i32_0 = arith.constant 0 : i32
    %c0_i32_1 = arith.constant 0 : i32
    return %c0_i32, %c0_i32_0 : i32, i32
  }
  func.func @transform_3(%arg0: i32) -> (i32, i32) {
    %c0_i32 = arith.constant 0 : i32
    %c0_i32_0 = arith.constant 0 : i32
    %c0_i32_1 = arith.constant 0 : i32
    return %c0_i32, %c0_i32_0 : i32, i32
  }
}

module attributes {stable_mosaic.version = 11 : i64} {
  func.func @conv_block_kernel(%arg0: i32, %arg1: memref<392x576xf32, #tpu.memory_space<vmem>>, %arg2: memref<576x128xf32, #tpu.memory_space<vmem>>, %arg3: memref<1x128xf32, #tpu.memory_space<vmem>>, %arg4: memref<98x128xf32, #tpu.memory_space<vmem>>) attributes {dimension_semantics = [#tpu.dimension_semantics<arbitrary>], iteration_bounds = array<i64: 1>, scalar_prefetch = 0 : i64, scratch_operands = 0 : i64, tpu.core_type = #tpu.core_type<tc>, window_params = [{pipeline_mode = #tpu.pipeline_mode<synchronous>, transform_indices = @transform_0, window_bounds = array<i64: 392, 576>}, {pipeline_mode = #tpu.pipeline_mode<synchronous>, transform_indices = @transform_1, window_bounds = array<i64: 576, 128>}, {pipeline_mode = #tpu.pipeline_mode<synchronous>, transform_indices = @transform_2, window_bounds = array<i64: 1, 128>}, {pipeline_mode = #tpu.pipeline_mode<synchronous>, transform_indices = @transform_3, window_bounds = array<i64: 98, 128>}]} {
    %c0 = arith.constant 0 : index
    %c0_0 = arith.constant 0 : index
    %0 = vector.load %arg1[%c0, %c0_0] : memref<392x576xf32, #tpu.memory_space<vmem>>, vector<392x576xf32>
    %c0_1 = arith.constant 0 : index
    %c0_2 = arith.constant 0 : index
    %1 = vector.load %arg2[%c0_1, %c0_2] : memref<576x128xf32, #tpu.memory_space<vmem>>, vector<576x128xf32>
    %cst = arith.constant dense<0.000000e+00> : vector<392x128xf32>
    %2 = tpu.matmul %0, %1, %cst {dimension_numbers = #tpu.dot_dimension_numbers<[1], [0], [0], [1], [0, 0, 1, 1], [], []>} : vector<392x576xf32>, vector<576x128xf32>, vector<392x128xf32> -> vector<392x128xf32>
    %c0_3 = arith.constant 0 : index
    %c0_4 = arith.constant 0 : index
    %3 = vector.load %arg3[%c0_3, %c0_4] : memref<1x128xf32, #tpu.memory_space<vmem>>, vector<1x128xf32>
    %4 = vector.broadcast %3 : vector<1x128xf32> to vector<392x128xf32>
    %5 = arith.addf %2, %4 : vector<392x128xf32>
    %cst_5 = arith.constant 0.000000e+00 : f32
    %6 = vector.broadcast %cst_5 : f32 to vector<392x128xf32>
    %7 = arith.maximumf %5, %6 : vector<392x128xf32>
    %8 = vector.extract_strided_slice %7 {offsets = [0, 0], sizes = [98, 128], strides = [1, 1]} : vector<392x128xf32> to vector<98x128xf32>
    %9 = vector.extract_strided_slice %7 {offsets = [98, 0], sizes = [98, 128], strides = [1, 1]} : vector<392x128xf32> to vector<98x128xf32>
    %10 = arith.maximumf %8, %9 : vector<98x128xf32>
    %11 = vector.extract_strided_slice %7 {offsets = [196, 0], sizes = [98, 128], strides = [1, 1]} : vector<392x128xf32> to vector<98x128xf32>
    %12 = arith.maximumf %10, %11 : vector<98x128xf32>
    %13 = vector.extract_strided_slice %7 {offsets = [294, 0], sizes = [98, 128], strides = [1, 1]} : vector<392x128xf32> to vector<98x128xf32>
    %14 = arith.maximumf %12, %13 : vector<98x128xf32>
    %c0_6 = arith.constant 0 : index
    %c0_7 = arith.constant 0 : index
    %15 = vector.load %arg4[%c0_6, %c0_7] : memref<98x128xf32, #tpu.memory_space<vmem>>, vector<98x128xf32>
    tpu.vector_store %arg4[%c0_6, %c0_7], %14 {strides = array<i32>} : memref<98x128xf32, #tpu.memory_space<vmem>>, vector<98x128xf32>,
    return
  }
  func.func @transform_0(%arg0: i32) -> (i32, i32) {
    %c0_i32 = arith.constant 0 : i32
    %c0_i32_0 = arith.constant 0 : i32
    %c0_i32_1 = arith.constant 0 : i32
    return %c0_i32, %c0_i32_0 : i32, i32
  }
  func.func @transform_1(%arg0: i32) -> (i32, i32) {
    %c0_i32 = arith.constant 0 : i32
    %c0_i32_0 = arith.constant 0 : i32
    %c0_i32_1 = arith.constant 0 : i32
    return %c0_i32, %c0_i32_0 : i32, i32
  }
  func.func @transform_2(%arg0: i32) -> (i32, i32) {
    %c0_i32 = arith.constant 0 : i32
    %c0_i32_0 = arith.constant 0 : i32
    %c0_i32_1 = arith.constant 0 : i32
    return %c0_i32, %c0_i32_0 : i32, i32
  }
  func.func @transform_3(%arg0: i32) -> (i32, i32) {
    %c0_i32 = arith.constant 0 : i32
    %c0_i32_0 = arith.constant 0 : i32
    %c0_i32_1 = arith.constant 0 : i32
    return %c0_i32, %c0_i32_0 : i32, i32
  }
}

module attributes {stable_mosaic.version = 11 : i64} {
  func.func @conv_block_kernel(%arg0: i32, %arg1: memref<128x1152xf32, #tpu.memory_space<vmem>>, %arg2: memref<1152x128xf32, #tpu.memory_space<vmem>>, %arg3: memref<1x128xf32, #tpu.memory_space<vmem>>, %arg4: memref<32x128xf32, #tpu.memory_space<vmem>>) attributes {dimension_semantics = [#tpu.dimension_semantics<arbitrary>], iteration_bounds = array<i64: 1>, scalar_prefetch = 0 : i64, scratch_operands = 0 : i64, tpu.core_type = #tpu.core_type<tc>, window_params = [{pipeline_mode = #tpu.pipeline_mode<synchronous>, transform_indices = @transform_0, window_bounds = array<i64: 128, 1152>}, {pipeline_mode = #tpu.pipeline_mode<synchronous>, transform_indices = @transform_1, window_bounds = array<i64: 1152, 128>}, {pipeline_mode = #tpu.pipeline_mode<synchronous>, transform_indices = @transform_2, window_bounds = array<i64: 1, 128>}, {pipeline_mode = #tpu.pipeline_mode<synchronous>, transform_indices = @transform_3, window_bounds = array<i64: 32, 128>}]} {
    %c0 = arith.constant 0 : index
    %c0_0 = arith.constant 0 : index
    %0 = vector.load %arg1[%c0, %c0_0] : memref<128x1152xf32, #tpu.memory_space<vmem>>, vector<128x1152xf32>
    %c0_1 = arith.constant 0 : index
    %c0_2 = arith.constant 0 : index
    %1 = vector.load %arg2[%c0_1, %c0_2] : memref<1152x128xf32, #tpu.memory_space<vmem>>, vector<1152x128xf32>
    %cst = arith.constant dense<0.000000e+00> : vector<128x128xf32>
    %2 = tpu.matmul %0, %1, %cst {dimension_numbers = #tpu.dot_dimension_numbers<[1], [0], [0], [1], [0, 0, 1, 1], [], []>} : vector<128x1152xf32>, vector<1152x128xf32>, vector<128x128xf32> -> vector<128x128xf32>
    %c0_3 = arith.constant 0 : index
    %c0_4 = arith.constant 0 : index
    %3 = vector.load %arg3[%c0_3, %c0_4] : memref<1x128xf32, #tpu.memory_space<vmem>>, vector<1x128xf32>
    %4 = vector.broadcast %3 : vector<1x128xf32> to vector<128x128xf32>
    %5 = arith.addf %2, %4 : vector<128x128xf32>
    %cst_5 = arith.constant 0.000000e+00 : f32
    %6 = vector.broadcast %cst_5 : f32 to vector<128x128xf32>
    %7 = arith.maximumf %5, %6 : vector<128x128xf32>
    %8 = vector.extract_strided_slice %7 {offsets = [0, 0], sizes = [32, 128], strides = [1, 1]} : vector<128x128xf32> to vector<32x128xf32>
    %9 = vector.extract_strided_slice %7 {offsets = [32, 0], sizes = [32, 128], strides = [1, 1]} : vector<128x128xf32> to vector<32x128xf32>
    %10 = arith.maximumf %8, %9 : vector<32x128xf32>
    %11 = vector.extract_strided_slice %7 {offsets = [64, 0], sizes = [32, 128], strides = [1, 1]} : vector<128x128xf32> to vector<32x128xf32>
    %12 = arith.maximumf %10, %11 : vector<32x128xf32>
    %13 = vector.extract_strided_slice %7 {offsets = [96, 0], sizes = [32, 128], strides = [1, 1]} : vector<128x128xf32> to vector<32x128xf32>
    %14 = arith.maximumf %12, %13 : vector<32x128xf32>
    %c0_6 = arith.constant 0 : index
    %c0_7 = arith.constant 0 : index
    %15 = vector.load %arg4[%c0_6, %c0_7] : memref<32x128xf32, #tpu.memory_space<vmem>>, vector<32x128xf32>
    tpu.vector_store %arg4[%c0_6, %c0_7], %14 {strides = array<i32>} : memref<32x128xf32, #tpu.memory_space<vmem>>, vector<32x128xf32>,
    return
  }
  func.func @transform_0(%arg0: i32) -> (i32, i32) {
    %c0_i32 = arith.constant 0 : i32
    %c0_i32_0 = arith.constant 0 : i32
    %c0_i32_1 = arith.constant 0 : i32
    return %c0_i32, %c0_i32_0 : i32, i32
  }
  func.func @transform_1(%arg0: i32) -> (i32, i32) {
    %c0_i32 = arith.constant 0 : i32
    %c0_i32_0 = arith.constant 0 : i32
    %c0_i32_1 = arith.constant 0 : i32
    return %c0_i32, %c0_i32_0 : i32, i32
  }
  func.func @transform_2(%arg0: i32) -> (i32, i32) {
    %c0_i32 = arith.constant 0 : i32
    %c0_i32_0 = arith.constant 0 : i32
    %c0_i32_1 = arith.constant 0 : i32
    return %c0_i32, %c0_i32_0 : i32, i32
  }
  func.func @transform_3(%arg0: i32) -> (i32, i32) {
    %c0_i32 = arith.constant 0 : i32
    %c0_i32_0 = arith.constant 0 : i32
    %c0_i32_1 = arith.constant 0 : i32
    return %c0_i32, %c0_i32_0 : i32, i32
  }
}

module attributes {stable_mosaic.version = 11 : i64} {
  func.func @tail_kernel(%arg0: i32, %arg1: memref<32x1152xf32, #tpu.memory_space<vmem>>, %arg2: memref<1152x128xf32, #tpu.memory_space<vmem>>, %arg3: memref<1x128xf32, #tpu.memory_space<vmem>>, %arg4: memref<128x128xf32, #tpu.memory_space<vmem>>, %arg5: memref<1x128xf32, #tpu.memory_space<vmem>>, %arg6: memref<128x128xf32, #tpu.memory_space<vmem>>, %arg7: memref<1x128xf32, #tpu.memory_space<vmem>>, %arg8: memref<2x128xf32, #tpu.memory_space<vmem>>, %arg9: memref<2x128xf32, #tpu.memory_space<vmem>>) attributes {dimension_semantics = [#tpu.dimension_semantics<arbitrary>], iteration_bounds = array<i64: 1>, scalar_prefetch = 0 : i64, scratch_operands = 0 : i64, tpu.core_type = #tpu.core_type<tc>, window_params = [{pipeline_mode = #tpu.pipeline_mode<synchronous>, transform_indices = @transform_0, window_bounds = array<i64: 32, 1152>}, {pipeline_mode = #tpu.pipeline_mode<synchronous>, transform_indices = @transform_1, window_bounds = array<i64: 1152, 128>}, {pipeline_mode = #tpu.pipeline_mode<synchronous>, transform_indices = @transform_2, window_bounds = array<i64: 1, 128>}, {pipeline_mode = #tpu.pipeline_mode<synchronous>, transform_indices = @transform_3, window_bounds = array<i64: 128, 128>}, {pipeline_mode = #tpu.pipeline_mode<synchronous>, transform_indices = @transform_4, window_bounds = array<i64: 1, 128>}, {pipeline_mode = #tpu.pipeline_mode<synchronous>, transform_indices = @transform_5, window_bounds = array<i64: 128, 128>}, {pipeline_mode = #tpu.pipeline_mode<synchronous>, transform_indices = @transform_6, window_bounds = array<i64: 1, 128>}, {pipeline_mode = #tpu.pipeline_mode<synchronous>, transform_indices = @transform_7, window_bounds = array<i64: 2, 128>}, {pipeline_mode = #tpu.pipeline_mode<synchronous>, transform_indices = @transform_8, window_bounds = array<i64: 2, 128>}]} {
    %c0 = arith.constant 0 : index
    %c0_0 = arith.constant 0 : index
    %0 = vector.load %arg1[%c0, %c0_0] : memref<32x1152xf32, #tpu.memory_space<vmem>>, vector<32x1152xf32>
    %c0_1 = arith.constant 0 : index
    %c0_2 = arith.constant 0 : index
    %1 = vector.load %arg2[%c0_1, %c0_2] : memref<1152x128xf32, #tpu.memory_space<vmem>>, vector<1152x128xf32>
    %cst = arith.constant dense<0.000000e+00> : vector<32x128xf32>
    %2 = tpu.matmul %0, %1, %cst {dimension_numbers = #tpu.dot_dimension_numbers<[1], [0], [0], [1], [0, 0, 1, 1], [], []>} : vector<32x1152xf32>, vector<1152x128xf32>, vector<32x128xf32> -> vector<32x128xf32>
    %c0_3 = arith.constant 0 : index
    %c0_4 = arith.constant 0 : index
    %3 = vector.load %arg3[%c0_3, %c0_4] : memref<1x128xf32, #tpu.memory_space<vmem>>, vector<1x128xf32>
    %4 = vector.broadcast %3 : vector<1x128xf32> to vector<32x128xf32>
    %5 = arith.addf %2, %4 : vector<32x128xf32>
    %cst_5 = arith.constant 0.000000e+00 : f32
    %6 = vector.broadcast %cst_5 : f32 to vector<32x128xf32>
    %7 = arith.maximumf %5, %6 : vector<32x128xf32>
    %8 = vector.extract_strided_slice %7 {offsets = [0, 0], sizes = [2, 128], strides = [1, 1]} : vector<32x128xf32> to vector<2x128xf32>
    %9 = vector.extract_strided_slice %7 {offsets = [2, 0], sizes = [2, 128], strides = [1, 1]} : vector<32x128xf32> to vector<2x128xf32>
    %10 = arith.maximumf %8, %9 : vector<2x128xf32>
    %11 = vector.extract_strided_slice %7 {offsets = [4, 0], sizes = [2, 128], strides = [1, 1]} : vector<32x128xf32> to vector<2x128xf32>
    %12 = arith.maximumf %10, %11 : vector<2x128xf32>
    %13 = vector.extract_strided_slice %7 {offsets = [6, 0], sizes = [2, 128], strides = [1, 1]} : vector<32x128xf32> to vector<2x128xf32>
    %14 = arith.maximumf %12, %13 : vector<2x128xf32>
    %15 = vector.extract_strided_slice %7 {offsets = [8, 0], sizes = [2, 128], strides = [1, 1]} : vector<32x128xf32> to vector<2x128xf32>
    %16 = arith.maximumf %14, %15 : vector<2x128xf32>
    %17 = vector.extract_strided_slice %7 {offsets = [10, 0], sizes = [2, 128], strides = [1, 1]} : vector<32x128xf32> to vector<2x128xf32>
    %18 = arith.maximumf %16, %17 : vector<2x128xf32>
    %19 = vector.extract_strided_slice %7 {offsets = [12, 0], sizes = [2, 128], strides = [1, 1]} : vector<32x128xf32> to vector<2x128xf32>
    %20 = arith.maximumf %18, %19 : vector<2x128xf32>
    %21 = vector.extract_strided_slice %7 {offsets = [14, 0], sizes = [2, 128], strides = [1, 1]} : vector<32x128xf32> to vector<2x128xf32>
    %22 = arith.maximumf %20, %21 : vector<2x128xf32>
    %23 = vector.extract_strided_slice %7 {offsets = [16, 0], sizes = [2, 128], strides = [1, 1]} : vector<32x128xf32> to vector<2x128xf32>
    %24 = arith.maximumf %22, %23 : vector<2x128xf32>
    %25 = vector.extract_strided_slice %7 {offsets = [18, 0], sizes = [2, 128], strides = [1, 1]} : vector<32x128xf32> to vector<2x128xf32>
    %26 = arith.maximumf %24, %25 : vector<2x128xf32>
    %27 = vector.extract_strided_slice %7 {offsets = [20, 0], sizes = [2, 128], strides = [1, 1]} : vector<32x128xf32> to vector<2x128xf32>
    %28 = arith.maximumf %26, %27 : vector<2x128xf32>
    %29 = vector.extract_strided_slice %7 {offsets = [22, 0], sizes = [2, 128], strides = [1, 1]} : vector<32x128xf32> to vector<2x128xf32>
    %30 = arith.maximumf %28, %29 : vector<2x128xf32>
    %31 = vector.extract_strided_slice %7 {offsets = [24, 0], sizes = [2, 128], strides = [1, 1]} : vector<32x128xf32> to vector<2x128xf32>
    %32 = arith.maximumf %30, %31 : vector<2x128xf32>
    %33 = vector.extract_strided_slice %7 {offsets = [26, 0], sizes = [2, 128], strides = [1, 1]} : vector<32x128xf32> to vector<2x128xf32>
    %34 = arith.maximumf %32, %33 : vector<2x128xf32>
    %35 = vector.extract_strided_slice %7 {offsets = [28, 0], sizes = [2, 128], strides = [1, 1]} : vector<32x128xf32> to vector<2x128xf32>
    %36 = arith.maximumf %34, %35 : vector<2x128xf32>
    %37 = vector.extract_strided_slice %7 {offsets = [30, 0], sizes = [2, 128], strides = [1, 1]} : vector<32x128xf32> to vector<2x128xf32>
    %38 = arith.maximumf %36, %37 : vector<2x128xf32>
    %c0_6 = arith.constant 0 : index
    %c0_7 = arith.constant 0 : index
    %39 = vector.load %arg8[%c0_6, %c0_7] : memref<2x128xf32, #tpu.memory_space<vmem>>, vector<2x128xf32>
    tpu.vector_store %arg8[%c0_6, %c0_7], %38 {strides = array<i32>} : memref<2x128xf32, #tpu.memory_space<vmem>>, vector<2x128xf32>,
    %c0_8 = arith.constant 0 : index
    %c0_9 = arith.constant 0 : index
    %40 = vector.load %arg4[%c0_8, %c0_9] : memref<128x128xf32, #tpu.memory_space<vmem>>, vector<128x128xf32>
    %cst_10 = arith.constant dense<0.000000e+00> : vector<2x128xf32>
    %41 = tpu.matmul %38, %40, %cst_10 {dimension_numbers = #tpu.dot_dimension_numbers<[1], [0], [0], [1], [0, 0, 1, 1], [], []>} : vector<2x128xf32>, vector<128x128xf32>, vector<2x128xf32> -> vector<2x128xf32>
    %c0_11 = arith.constant 0 : index
    %c0_12 = arith.constant 0 : index
    %42 = vector.load %arg5[%c0_11, %c0_12] : memref<1x128xf32, #tpu.memory_space<vmem>>, vector<1x128xf32>
    %43 = vector.broadcast %42 : vector<1x128xf32> to vector<2x128xf32>
    %44 = arith.addf %41, %43 : vector<2x128xf32>
    %cst_13 = arith.constant 0.000000e+00 : f32
    %45 = vector.broadcast %cst_13 : f32 to vector<2x128xf32>
    %46 = arith.maximumf %44, %45 : vector<2x128xf32>
    %c0_14 = arith.constant 0 : index
    %c0_15 = arith.constant 0 : index
    %47 = vector.load %arg6[%c0_14, %c0_15] : memref<128x128xf32, #tpu.memory_space<vmem>>, vector<128x128xf32>
    %cst_16 = arith.constant dense<0.000000e+00> : vector<2x128xf32>
    %48 = tpu.matmul %46, %47, %cst_16 {dimension_numbers = #tpu.dot_dimension_numbers<[1], [0], [0], [1], [0, 0, 1, 1], [], []>} : vector<2x128xf32>, vector<128x128xf32>, vector<2x128xf32> -> vector<2x128xf32>
    %c0_17 = arith.constant 0 : index
    %c0_18 = arith.constant 0 : index
    %49 = vector.load %arg7[%c0_17, %c0_18] : memref<1x128xf32, #tpu.memory_space<vmem>>, vector<1x128xf32>
    %50 = vector.broadcast %49 : vector<1x128xf32> to vector<2x128xf32>
    %51 = arith.addf %48, %50 : vector<2x128xf32>
    %c0_19 = arith.constant 0 : index
    %c0_20 = arith.constant 0 : index
    %52 = vector.load %arg9[%c0_19, %c0_20] : memref<2x128xf32, #tpu.memory_space<vmem>>, vector<2x128xf32>
    tpu.vector_store %arg9[%c0_19, %c0_20], %51 {strides = array<i32>} : memref<2x128xf32, #tpu.memory_space<vmem>>, vector<2x128xf32>,
    return
  }
  func.func @transform_0(%arg0: i32) -> (i32, i32) {
    %c0_i32 = arith.constant 0 : i32
    %c0_i32_0 = arith.constant 0 : i32
    %c0_i32_1 = arith.constant 0 : i32
    return %c0_i32, %c0_i32_0 : i32, i32
  }
  func.func @transform_1(%arg0: i32) -> (i32, i32) {
    %c0_i32 = arith.constant 0 : i32
    %c0_i32_0 = arith.constant 0 : i32
    %c0_i32_1 = arith.constant 0 : i32
    return %c0_i32, %c0_i32_0 : i32, i32
  }
  func.func @transform_2(%arg0: i32) -> (i32, i32) {
    %c0_i32 = arith.constant 0 : i32
    %c0_i32_0 = arith.constant 0 : i32
    %c0_i32_1 = arith.constant 0 : i32
    return %c0_i32, %c0_i32_0 : i32, i32
  }
  func.func @transform_3(%arg0: i32) -> (i32, i32) {
    %c0_i32 = arith.constant 0 : i32
    %c0_i32_0 = arith.constant 0 : i32
    %c0_i32_1 = arith.constant 0 : i32
    return %c0_i32, %c0_i32_0 : i32, i32
  }
  func.func @transform_4(%arg0: i32) -> (i32, i32) {
    %c0_i32 = arith.constant 0 : i32
    %c0_i32_0 = arith.constant 0 : i32
    %c0_i32_1 = arith.constant 0 : i32
    return %c0_i32, %c0_i32_0 : i32, i32
  }
  func.func @transform_5(%arg0: i32) -> (i32, i32) {
    %c0_i32 = arith.constant 0 : i32
    %c0_i32_0 = arith.constant 0 : i32
    %c0_i32_1 = arith.constant 0 : i32
    return %c0_i32, %c0_i32_0 : i32, i32
  }
  func.func @transform_6(%arg0: i32) -> (i32, i32) {
    %c0_i32 = arith.constant 0 : i32
    %c0_i32_0 = arith.constant 0 : i32
    %c0_i32_1 = arith.constant 0 : i32
    return %c0_i32, %c0_i32_0 : i32, i32
  }
  func.func @transform_7(%arg0: i32) -> (i32, i32) {
    %c0_i32 = arith.constant 0 : i32
    %c0_i32_0 = arith.constant 0 : i32
    %c0_i32_1 = arith.constant 0 : i32
    return %c0_i32, %c0_i32_0 : i32, i32
  }
  func.func @transform_8(%arg0: i32) -> (i32, i32) {
    %c0_i32 = arith.constant 0 : i32
    %c0_i32_0 = arith.constant 0 : i32
    %c0_i32_1 = arith.constant 0 : i32
    return %c0_i32, %c0_i32_0 : i32, i32
  }
}

</mosaic_0001>

<llo_original>
// kernel: forward.4
$region0: #{forward.4}
  #allocation0 [shape = 'u32[]', space=smem, size = 0x4, offset = 0x4, fixed_abs, tag = 'smem constant byte address 0x4 - core index']
  #allocation1 [shape = 'u32[144,128]{1,0:T(1,128)}', space=vmem, size = 0x12000, scoped, tag = 'internal scratch']
  %s0 = inlined_call_operand.vmem [shape: f32[1568,9], index: 0, kind: input, shape index: {}]
  %s1 = inlined_call_operand.vmem [shape: f32[9,64], index: 1, kind: input, shape index: {}]
  %s2 = inlined_call_operand.vmem [shape: f32[1,64], index: 2, kind: input, shape index: {}]
  %s3 = inlined_call_operand.vmem [shape: f32[392,64], index: 3, kind: output, shape index: {}]
  %s4 = sld [smem:[#allocation0]]
  $region22: #{forward.4} parent=0
    _
  %s6 = ssub.s32 1, %s4
  %s7 = scalar_select 0, %s6, %s4
  // Predicated region
  $region2: #{forward.4} parent=0 // pred_check
    _
  $region3: #{forward.4} parent=0 // pred_check_branch
    %9 = sbr.rel (0) target = $region5
  $region4: #{forward.4} parent=0 // pred_region
    _
  $region5: #{forward.4} parent=0 // pred_fallthru
    _
  // Predicated region
  $region6: #{forward.4} parent=0 // pred_check
    _
  $region7: #{forward.4} parent=0 // pred_check_branch
    %11 = sbr.rel (0) target = $region9
  $region8: #{forward.4} parent=0 // pred_region
    _
  $region9: #{forward.4} parent=0 // pred_fallthru
    _
  // Predicated region
  $region10: #{forward.4} parent=0 // pred_check
    _
  $region11: #{forward.4} parent=0 // pred_check_branch
    %13 = sbr.rel (0) target = $region13
  $region12: #{forward.4} parent=0 // pred_region
    _
  $region13: #{forward.4} parent=0 // pred_fallthru
    _
  %v14 = vld [vmem:[%s0] sm:$0xff]
  %v15 = vld [vmem:[%s0 + $0x8] sm:$0xff]
  %v16 = vld [vmem:[%s0 + $0x10] sm:$0xff]
  %v17 = vld [vmem:[%s0 + $0x18] sm:$0xff]
  %v18 = vld [vmem:[%s0 + $0x20] sm:$0xff]
  %v19 = vld [vmem:[%s0 + $0x28] sm:$0xff]
  %v20 = vld [vmem:[%s0 + $0x30] sm:$0xff]
  %v21 = vld [vmem:[%s0 + $0x38] sm:$0xff]
  %v22 = vld [vmem:[%s0 + $0x40] sm:$0xff]
  %v23 = vld [vmem:[%s0 + $0x48] sm:$0xff]
  %v24 = vld [vmem:[%s0 + $0x50] sm:$0xff]
  %v25 = vld [vmem:[%s0 + $0x58] sm:$0xff]
  %v26 = vld [vmem:[%s0 + $0x60] sm:$0xff]
  %v27 = vld [vmem:[%s0 + $0x68] sm:$0xff]
  %v28 = vld [vmem:[%s0 + $0x70] sm:$0xff]
  %v29 = vld [vmem:[%s0 + $0x78] sm:$0xff]
  %v30 = vld [vmem:[%s0 + $0x80] sm:$0xff]
  %v31 = vld [vmem:[%s0 + $0x88] sm:$0xff]
  %v32 = vld [vmem:[%s0 + $0x90] sm:$0xff]
  %v33 = vld [vmem:[%s0 + $0x98] sm:$0xff]
  %v34 = vld [vmem:[%s0 + $0xa0] sm:$0xff]
  %v35 = vld [vmem:[%s0 + $0xa8] sm:$0xff]
  %v36 = vld [vmem:[%s0 + $0xb0] sm:$0xff]
  %v37 = vld [vmem:[%s0 + $0xb8] sm:$0xff]
  %v38 = vld [vmem:[%s0 + $0xc0] sm:$0xff]
  %v39 = vld [vmem:[%s0 + $0xc8] sm:$0xff]
  %v40 = vld [vmem:[%s0 + $0xd0] sm:$0xff]
  %v41 = vld [vmem:[%s0 + $0xd8] sm:$0xff]
  %v42 = vld [vmem:[%s0 + $0xe0] sm:$0xff]
  %v43 = vld [vmem:[%s0 + $0xe8] sm:$0xff]
  %v44 = vld [vmem:[%s0 + $0xf0] sm:$0xff]
  %v45 = vld [vmem:[%s0 + $0xf8] sm:$0xff]
  %v46 = vld [vmem:[%s0 + $0x100] sm:$0xff]
  %v47 = vld [vmem:[%s0 + $0x108] sm:$0xff]
  %v48 = vld [vmem:[%s0 + $0x110] sm:$0xff]
  %v49 = vld [vmem:[%s0 + $0x118] sm:$0xff]
  %v50 = vld [vmem:[%s0 + $0x120] sm:$0xff]
  %v51 = vld [vmem:[%s0 + $0x128] sm:$0xff]
  %v52 = vld [vmem:[%s0 + $0x130] sm:$0xff]
  %v53 = vld [vmem:[%s0 + $0x138] sm:$0xff]
  %v54 = vld [vmem:[%s0 + $0x140] sm:$0xff]
  %v55 = vld [vmem:[%s0 + $0x148] sm:$0xff]
  %v56 = vld [vmem:[%s0 + $0x150] sm:$0xff]
  %v57 = vld [vmem:[%s0 + $0x158] sm:$0xff]
  %v58 = vld [vmem:[%s0 + $0x160] sm:$0xff]
  %v59 = vld [vmem:[%s0 + $0x168] sm:$0xff]
  %v60 = vld [vmem:[%s0 + $0x170] sm:$0xff]
  %v61 = vld [vmem:[%s0 + $0x178] sm:$0xff]
  %v62 = vld [vmem:[%s0 + $0x180] sm:$0xff]
  %v63 = vld [vmem:[%s0 + $0x188] sm:$0xff]
  %v64 = vld [vmem:[%s0 + $0x190] sm:$0xff]
  %v65 = vld [vmem:[%s0 + $0x198] sm:$0xff]
  %v66 = vld [vmem:[%s0 + $0x1a0] sm:$0xff]
  %v67 = vld [vmem:[%s0 + $0x1a8] sm:$0xff]
  %v68 = vld [vmem:[%s0 + $0x1b0] sm:$0xff]
  %v69 = vld [vmem:[%s0 + $0x1b8] sm:$0xff]
  %v70 = vld [vmem:[%s0 + $0x1c0] sm:$0xff]
  %v71 = vld [vmem:[%s0 + $0x1c8] sm:$0xff]
  %v72 = vld [vmem:[%s0 + $0x1d0] sm:$0xff]
  %v73 = vld [vmem:[%s0 + $0x1d8] sm:$0xff]
  %v74 = vld [vmem:[%s0 + $0x1e0] sm:$0xff]
  %v75 = vld [vmem:[%s0 + $0x1e8] sm:$0xff]
  %v76 = vld [vmem:[%s0 + $0x1f0] sm:$0xff]
  %v77 = vld [vmem:[%s0 + $0x1f8] sm:$0xff]
  %v78 = vld [vmem:[%s0 + $0x200] sm:$0xff]
  %v79 = vld [vmem:[%s0 + $0x208] sm:$0xff]
  %v80 = vld [vmem:[%s0 + $0x210] sm:$0xff]
  %v81 = vld [vmem:[%s0 + $0x218] sm:$0xff]
  %v82 = vld [vmem:[%s0 + $0x220] sm:$0xff]
  %v83 = vld [vmem:[%s0 + $0x228] sm:$0xff]
  %v84 = vld [vmem:[%s0 + $0x230] sm:$0xff]
  %v85 = vld [vmem:[%s0 + $0x238] sm:$0xff]
  %v86 = vld [vmem:[%s0 + $0x240] sm:$0xff]
  %v87 = vld [vmem:[%s0 + $0x248] sm:$0xff]
  %v88 = vld [vmem:[%s0 + $0x250] sm:$0xff]
  %v89 = vld [vmem:[%s0 + $0x258] sm:$0xff]
  %v90 = vld [vmem:[%s0 + $0x260] sm:$0xff]
  %v91 = vld [vmem:[%s0 + $0x268] sm:$0xff]
  %v92 = vld [vmem:[%s0 + $0x270] sm:$0xff]
  %v93 = vld [vmem:[%s0 + $0x278] sm:$0xff]
  %v94 = vld [vmem:[%s0 + $0x280] sm:$0xff]
  %v95 = vld [vmem:[%s0 + $0x288] sm:$0xff]
  %v96 = vld [vmem:[%s0 + $0x290] sm:$0xff]
  %v97 = vld [vmem:[%s0 + $0x298] sm:$0xff]
  %v98 = vld [vmem:[%s0 + $0x2a0] sm:$0xff]
  %v99 = vld [vmem:[%s0 + $0x2a8] sm:$0xff]
  %v100 = vld [vmem:[%s0 + $0x2b0] sm:$0xff]
  %v101 = vld [vmem:[%s0 + $0x2b8] sm:$0xff]
  %v102 = vld [vmem:[%s0 + $0x2c0] sm:$0xff]
  %v103 = vld [vmem:[%s0 + $0x2c8] sm:$0xff]
  %v104 = vld [vmem:[%s0 + $0x2d0] sm:$0xff]
  %v105 = vld [vmem:[%s0 + $0x2d8] sm:$0xff]
  %v106 = vld [vmem:[%s0 + $0x2e0] sm:$0xff]
  %v107 = vld [vmem:[%s0 + $0x2e8] sm:$0xff]
  %v108 = vld [vmem:[%s0 + $0x2f0] sm:$0xff]
  %v109 = vld [vmem:[%s0 + $0x2f8] sm:$0xff]
  %v110 = vld [vmem:[%s0 + $0x300] sm:$0xff]
  %v111 = vld [vmem:[%s0 + $0x308] sm:$0xff]
  %v112 = vld [vmem:[%s0 + $0x310] sm:$0xff]
  %v113 = vld [vmem:[%s0 + $0x318] sm:$0xff]
  %v114 = vld [vmem:[%s0 + $0x320] sm:$0xff]
  %v115 = vld [vmem:[%s0 + $0x328] sm:$0xff]
  %v116 = vld [vmem:[%s0 + $0x330] sm:$0xff]
  %v117 = vld [vmem:[%s0 + $0x338] sm:$0xff]
  %v118 = vld [vmem:[%s0 + $0x340] sm:$0xff]
  %v119 = vld [vmem:[%s0 + $0x348] sm:$0xff]
  %v120 = vld [vmem:[%s0 + $0x350] sm:$0xff]
  %v121 = vld [vmem:[%s0 + $0x358] sm:$0xff]
  %v122 = vld [vmem:[%s0 + $0x360] sm:$0xff]
  %v123 = vld [vmem:[%s0 + $0x368] sm:$0xff]
  %v124 = vld [vmem:[%s0 + $0x370] sm:$0xff]
  %v125 = vld [vmem:[%s0 + $0x378] sm:$0xff]
  %v126 = vld [vmem:[%s0 + $0x380] sm:$0xff]
  %v127 = vld [vmem:[%s0 + $0x388] sm:$0xff]
  %v128 = vld [vmem:[%s0 + $0x390] sm:$0xff]
  %v129 = vld [vmem:[%s0 + $0x398] sm:$0xff]
  %v130 = vld [vmem:[%s0 + $0x3a0] sm:$0xff]
  %v131 = vld [vmem:[%s0 + $0x3a8] sm:$0xff]
  %v132 = vld [vmem:[%s0 + $0x3b0] sm:$0xff]
  %v133 = vld [vmem:[%s0 + $0x3b8] sm:$0xff]
  %v134 = vld [vmem:[%s0 + $0x3c0] sm:$0xff]
  %v135 = vld [vmem:[%s0 + $0x3c8] sm:$0xff]
  %v136 = vld [vmem:[%s0 + $0x3d0] sm:$0xff]
  %v137 = vld [vmem:[%s0 + $0x3d8] sm:$0xff]
  %v138 = vld [vmem:[%s0 + $0x3e0] sm:$0xff]
  %v139 = vld [vmem:[%s0 + $0x3e8] sm:$0xff]
  %v140 = vld [vmem:[%s0 + $0x3f0] sm:$0xff]
  %v141 = vld [vmem:[%s0 + $0x3f8] sm:$0xff]
  %v142 = vld [vmem:[%s0 + $0x400] sm:$0xff]
  %v143 = vld [vmem:[%s0 + $0x408] sm:$0xff]
  %v144 = vld [vmem:[%s0 + $0x410] sm:$0xff]
  %v145 = vld [vmem:[%s0 + $0x418] sm:$0xff]
  %v146 = vld [vmem:[%s0 + $0x420] sm:$0xff]
  %v147 = vld [vmem:[%s0 + $0x428] sm:$0xff]
  %v148 = vld [vmem:[%s0 + $0x430] sm:$0xff]
  %v149 = vld [vmem:[%s0 + $0x438] sm:$0xff]
  %v150 = vld [vmem:[%s0 + $0x440] sm:$0xff]
  %v151 = vld [vmem:[%s0 + $0x448] sm:$0xff]
  %v152 = vld [vmem:[%s0 + $0x450] sm:$0xff]
  %v153 = vld [vmem:[%s0 + $0x458] sm:$0xff]
  %v154 = vld [vmem:[%s0 + $0x460] sm:$0xff]
  %v155 = vld [vmem:[%s0 + $0x468] sm:$0xff]
  %v156 = vld [vmem:[%s0 + $0x470] sm:$0xff]
  %v157 = vld [vmem:[%s0 + $0x478] sm:$0xff]
  %v158 = vld [vmem:[%s0 + $0x480] sm:$0xff]
  %v159 = vld [vmem:[%s0 + $0x488] sm:$0xff]
  %v160 = vld [vmem:[%s0 + $0x490] sm:$0xff]
  %v161 = vld [vmem:[%s0 + $0x498] sm:$0xff]
  %v162 = vld [vmem:[%s0 + $0x4a0] sm:$0xff]
  %v163 = vld [vmem:[%s0 + $0x4a8] sm:$0xff]
  %v164 = vld [vmem:[%s0 + $0x4b0] sm:$0xff]
  %v165 = vld [vmem:[%s0 + $0x4b8] sm:$0xff]
  %v166 = vld [vmem:[%s0 + $0x4c0] sm:$0xff]
  %v167 = vld [vmem:[%s0 + $0x4c8] sm:$0xff]
  %v168 = vld [vmem:[%s0 + $0x4d0] sm:$0xff]
  %v169 = vld [vmem:[%s0 + $0x4d8] sm:$0xff]
  %v170 = vld [vmem:[%s0 + $0x4e0] sm:$0xff]
  %v171 = vld [vmem:[%s0 + $0x4e8] sm:$0xff]
  %v172 = vld [vmem:[%s0 + $0x4f0] sm:$0xff]
  %v173 = vld [vmem:[%s0 + $0x4f8] sm:$0xff]
  %v174 = vld [vmem:[%s0 + $0x500] sm:$0xff]
  %v175 = vld [vmem:[%s0 + $0x508] sm:$0xff]
  %v176 = vld [vmem:[%s0 + $0x510] sm:$0xff]
  %v177 = vld [vmem:[%s0 + $0x518] sm:$0xff]
  %v178 = vld [vmem:[%s0 + $0x520] sm:$0xff]
  %v179 = vld [vmem:[%s0 + $0x528] sm:$0xff]
  %v180 = vld [vmem:[%s0 + $0x530] sm:$0xff]
  %v181 = vld [vmem:[%s0 + $0x538] sm:$0xff]
  %v182 = vld [vmem:[%s0 + $0x540] sm:$0xff]
  %v183 = vld [vmem:[%s0 + $0x548] sm:$0xff]
  %v184 = vld [vmem:[%s0 + $0x550] sm:$0xff]
  %v185 = vld [vmem:[%s0 + $0x558] sm:$0xff]
  %v186 = vld [vmem:[%s0 + $0x560] sm:$0xff]
  %v187 = vld [vmem:[%s0 + $0x568] sm:$0xff]
  %v188 = vld [vmem:[%s0 + $0x570] sm:$0xff]
  %v189 = vld [vmem:[%s0 + $0x578] sm:$0xff]
  %v190 = vld [vmem:[%s0 + $0x580] sm:$0xff]
  %v191 = vld [vmem:[%s0 + $0x588] sm:$0xff]
  %v192 = vld [vmem:[%s0 + $0x590] sm:$0xff]
  %v193 = vld [vmem:[%s0 + $0x598] sm:$0xff]
  %v194 = vld [vmem:[%s0 + $0x5a0] sm:$0xff]
  %v195 = vld [vmem:[%s0 + $0x5a8] sm:$0xff]
  %v196 = vld [vmem:[%s0 + $0x5b0] sm:$0xff]
  %v197 = vld [vmem:[%s0 + $0x5b8] sm:$0xff]
  %v198 = vld [vmem:[%s0 + $0x5c0] sm:$0xff]
  %v199 = vld [vmem:[%s0 + $0x5c8] sm:$0xff]
  %v200 = vld [vmem:[%s0 + $0x5d0] sm:$0xff]
  %v201 = vld [vmem:[%s0 + $0x5d8] sm:$0xff]
  %v202 = vld [vmem:[%s0 + $0x5e0] sm:$0xff]
  %v203 = vld [vmem:[%s0 + $0x5e8] sm:$0xff]
  %v204 = vld [vmem:[%s0 + $0x5f0] sm:$0xff]
  %v205 = vld [vmem:[%s0 + $0x5f8] sm:$0xff]
  %v206 = vld [vmem:[%s0 + $0x600] sm:$0xff]
  %v207 = vld [vmem:[%s0 + $0x608] sm:$0xff]
  %v208 = vld [vmem:[%s0 + $0x610] sm:$0xff]
  %v209 = vld [vmem:[%s0 + $0x618] sm:$0xff]
  %v210 = vld [vmem:[%s1] sm:$0xff]
  %v211 = vld [vmem:[%s1 + $0x8] sm:$0x1]
  %v212 = vld [vmem:[%s2] sm:$0x1]
  %v214 = vlaneseq
  %v215 = vshrl.u32 %v214, 7
  %v216 = vsub.s32 0, %v215
  %v217 = vrot.slane %v212, %v216
  %vm219 = vcmask 72704
  %v221 = vsel %vm219, %v14, 0
  %v224 = vsel %vm219, %v15, 0
  %v227 = vsel %vm219, %v16, 0
  %v230 = vsel %vm219, %v17, 0
  %v233 = vsel %vm219, %v18, 0
  %v236 = vsel %vm219, %v19, 0
  %v239 = vsel %vm219, %v20, 0
  %v242 = vsel %vm219, %v21, 0
  %v245 = vsel %vm219, %v22, 0
  %v248 = vsel %vm219, %v23, 0
  %v251 = vsel %vm219, %v24, 0
  %v254 = vsel %vm219, %v25, 0
  %v257 = vsel %vm219, %v26, 0
  %v260 = vsel %vm219, %v27, 0
  %v263 = vsel %vm219, %v28, 0
  %v266 = vsel %vm219, %v29, 0
  %v269 = vsel %vm219, %v30, 0
  %v272 = vsel %vm219, %v31, 0
  %v275 = vsel %vm219, %v32, 0
  %v278 = vsel %vm219, %v33, 0
  %v281 = vsel %vm219, %v34, 0
  %v284 = vsel %vm219, %v35, 0
  %v287 = vsel %vm219, %v36, 0
  %v290 = vsel %vm219, %v37, 0
  %v293 = vsel %vm219, %v38, 0
  %v296 = vsel %vm219, %v39, 0
  %v299 = vsel %vm219, %v40, 0
  %v302 = vsel %vm219, %v41, 0
  %v305 = vsel %vm219, %v42, 0
  %v308 = vsel %vm219, %v43, 0
  %v311 = vsel %vm219, %v44, 0
  %v314 = vsel %vm219, %v45, 0
  %v317 = vsel %vm219, %v46, 0
  %v320 = vsel %vm219, %v47, 0
  %v323 = vsel %vm219, %v48, 0
  %v326 = vsel %vm219, %v49, 0
  %v329 = vsel %vm219, %v50, 0
  %v332 = vsel %vm219, %v51, 0
  %v335 = vsel %vm219, %v52, 0
  %v338 = vsel %vm219, %v53, 0
  %v341 = vsel %vm219, %v54, 0
  %v344 = vsel %vm219, %v55, 0
  %v347 = vsel %vm219, %v56, 0
  %v350 = vsel %vm219, %v57, 0
  %v353 = vsel %vm219, %v58, 0
  %v356 = vsel %vm219, %v59, 0
  %v359 = vsel %vm219, %v60, 0
  %v362 = vsel %vm219, %v61, 0
  %v365 = vsel %vm219, %v62, 0
  %v368 = vsel %vm219, %v63, 0
  %v371 = vsel %vm219, %v64, 0
  %v374 = vsel %vm219, %v65, 0
  %v377 = vsel %vm219, %v66, 0
  %v380 = vsel %vm219, %v67, 0
  %v383 = vsel %vm219, %v68, 0
  %v386 = vsel %vm219, %v69, 0
  %v389 = vsel %vm219, %v70, 0
  %v392 = vsel %vm219, %v71, 0
  %v395 = vsel %vm219, %v72, 0
  %v398 = vsel %vm219, %v73, 0
  %v401 = vsel %vm219, %v74, 0
  %v404 = vsel %vm219, %v75, 0
  %v407 = vsel %vm219, %v76, 0
  %v410 = vsel %vm219, %v77, 0
  %v413 = vsel %vm219, %v78, 0
  %v416 = vsel %vm219, %v79, 0
  %v419 = vsel %vm219, %v80, 0
  %v422 = vsel %vm219, %v81, 0
  %v425 = vsel %vm219, %v82, 0
  %v428 = vsel %vm219, %v83, 0
  %v431 = vsel %vm219, %v84, 0
  %v434 = vsel %vm219, %v85, 0
  %v437 = vsel %vm219, %v86, 0
  %v440 = vsel %vm219, %v87, 0
  %v443 = vsel %vm219, %v88, 0
  %v446 = vsel %vm219, %v89, 0
  %v449 = vsel %vm219, %v90, 0
  %v452 = vsel %vm219, %v91, 0
  %v455 = vsel %vm219, %v92, 0
  %v458 = vsel %vm219, %v93, 0
  %v461 = vsel %vm219, %v94, 0
  %v464 = vsel %vm219, %v95, 0
  %v467 = vsel %vm219, %v96, 0
  %v470 = vsel %vm219, %v97, 0
  %v473 = vsel %vm219, %v98, 0
  %v476 = vsel %vm219, %v99, 0
  %v479 = vsel %vm219, %v100, 0
  %v482 = vsel %vm219, %v101, 0
  %v485 = vsel %vm219, %v102, 0
  %v488 = vsel %vm219, %v103, 0
  %v491 = vsel %vm219, %v104, 0
  %v494 = vsel %vm219, %v105, 0
  %v497 = vsel %vm219, %v106, 0
  %v500 = vsel %vm219, %v107, 0
  %v503 = vsel %vm219, %v108, 0
  %v506 = vsel %vm219, %v109, 0
  %v509 = vsel %vm219, %v110, 0
  %v512 = vsel %vm219, %v111, 0
  %v515 = vsel %vm219, %v112, 0
  %v518 = vsel %vm219, %v113, 0
  %v521 = vsel %vm219, %v114, 0
  %v524 = vsel %vm219, %v115, 0
  %v527 = vsel %vm219, %v116, 0
  %v530 = vsel %vm219, %v117, 0
  %v533 = vsel %vm219, %v118, 0
  %v536 = vsel %vm219, %v119, 0
  %v539 = vsel %vm219, %v120, 0
  %v542 = vsel %vm219, %v121, 0
  %v545 = vsel %vm219, %v122, 0
  %v548 = vsel %vm219, %v123, 0
  %v551 = vsel %vm219, %v124, 0
  %v554 = vsel %vm219, %v125, 0
  %v557 = vsel %vm219, %v126, 0
  %v560 = vsel %vm219, %v127, 0
  %v563 = vsel %vm219, %v128, 0
  %v566 = vsel %vm219, %v129, 0
  %v569 = vsel %vm219, %v130, 0
  %v572 = vsel %vm219, %v131, 0
  %v575 = vsel %vm219, %v132, 0
  %v578 = vsel %vm219, %v133, 0
  %v581 = vsel %vm219, %v134, 0
  %v584 = vsel %vm219, %v135, 0
  %v587 = vsel %vm219, %v136, 0
  %v590 = vsel %vm219, %v137, 0
  %v593 = vsel %vm219, %v138, 0
  %v596 = vsel %vm219, %v139, 0
  %v599 = vsel %vm219, %v140, 0
  %v602 = vsel %vm219, %v141, 0
  %v605 = vsel %vm219, %v142, 0
  %v608 = vsel %vm219, %v143, 0
  %v611 = vsel %vm219, %v144, 0
  %v614 = vsel %vm219, %v145, 0
  %v617 = vsel %vm219, %v146, 0
  %v620 = vsel %vm219, %v147, 0
  %v623 = vsel %vm219, %v148, 0
  %v626 = vsel %vm219, %v149, 0
  %v629 = vsel %vm219, %v150, 0
  %v632 = vsel %vm219, %v151, 0
  %v635 = vsel %vm219, %v152, 0
  %v638 = vsel %vm219, %v153, 0
  %v641 = vsel %vm219, %v154, 0
  %v644 = vsel %vm219, %v155, 0
  %v647 = vsel %vm219, %v156, 0
  %v650 = vsel %vm219, %v157, 0
  %v653 = vsel %vm219, %v158, 0
  %v656 = vsel %vm219, %v159, 0
  %v659 = vsel %vm219, %v160, 0
  %v662 = vsel %vm219, %v161, 0
  %v665 = vsel %vm219, %v162, 0
  %v668 = vsel %vm219, %v163, 0
  %v671 = vsel %vm219, %v164, 0
  %v674 = vsel %vm219, %v165, 0
  %v677 = vsel %vm219, %v166, 0
  %v680 = vsel %vm219, %v167, 0
  %v683 = vsel %vm219, %v168, 0
  %v686 = vsel %vm219, %v169, 0
  %v689 = vsel %vm219, %v170, 0
  %v692 = vsel %vm219, %v171, 0
  %v695 = vsel %vm219, %v172, 0
  %v698 = vsel %vm219, %v173, 0
  %v701 = vsel %vm219, %v174, 0
  %v704 = vsel %vm219, %v175, 0
  %v707 = vsel %vm219, %v176, 0
  %v710 = vsel %vm219, %v177, 0
  %v713 = vsel %vm219, %v178, 0
  %v716 = vsel %vm219, %v179, 0
  %v719 = vsel %vm219, %v180, 0
  %v722 = vsel %vm219, %v181, 0
  %v725 = vsel %vm219, %v182, 0
  %v728 = vsel %vm219, %v183, 0
  %v731 = vsel %vm219, %v184, 0
  %v734 = vsel %vm219, %v185, 0
  %v737 = vsel %vm219, %v186, 0
  %v740 = vsel %vm219, %v187, 0
  %v743 = vsel %vm219, %v188, 0
  %v746 = vsel %vm219, %v189, 0
  %v749 = vsel %vm219, %v190, 0
  %v752 = vsel %vm219, %v191, 0
  %v755 = vsel %vm219, %v192, 0
  %v758 = vsel %vm219, %v193, 0
  %v761 = vsel %vm219, %v194, 0
  %v764 = vsel %vm219, %v195, 0
  %v767 = vsel %vm219, %v196, 0
  %v770 = vsel %vm219, %v197, 0
  %v773 = vsel %vm219, %v198, 0
  %v776 = vsel %vm219, %v199, 0
  %v779 = vsel %vm219, %v200, 0
  %v782 = vsel %vm219, %v201, 0
  %v785 = vsel %vm219, %v202, 0
  %v788 = vsel %vm219, %v203, 0
  %v791 = vsel %vm219, %v204, 0
  %v794 = vsel %vm219, %v205, 0
  %v797 = vsel %vm219, %v206, 0
  %v800 = vsel %vm219, %v207, 0
  %v803 = vsel %vm219, %v208, 0
  %v806 = vsel %vm219, %v209, 0
  %vm808 = vcmask 1040384
  %v810 = vsel %vm808, %v211, 0
  %812 = vmatprep.subr.mxu0 0.0
  %813 = vmatpush1.msra.mxu0 %v210
  %814 = vmatprep.subr.mxu0 0.0
  %815 = vmatpush1.msra.mxu0 %v810
  %816 = vmatprep.subr.mxu0 0.0
  %817 = vmatpush1.msra.mxu0 0.0
  %818 = vmatprep.subr.mxu0 0.0
  %819 = vmatpush1.msra.mxu0 0.0
  %820 = vmatprep.subr.mxu0 0.0
  %821 = vmatpush1.msra.mxu0 0.0
  %822 = vmatprep.subr.mxu0 0.0
  %823 = vmatpush1.msra.mxu0 0.0
  %824 = vmatprep.subr.mxu0 0.0
  %825 = vmatpush1.msra.mxu0 0.0
  %826 = vmatprep.subr.mxu0 0.0
  %827 = vmatpush1.msra.mxu0 0.0
  %828 = vmatprep.subr.mxu0 0.0
  %829 = vmatpush1.msra.mxu0 0.0
  %830 = vmatprep.subr.mxu0 0.0
  %831 = vmatpush1.msra.mxu0 0.0
  %832 = vmatprep.subr.mxu0 0.0
  %833 = vmatpush1.msra.mxu0 0.0
  %834 = vmatprep.subr.mxu0 0.0
  %835 = vmatpush1.msra.mxu0 0.0
  %836 = vmatprep.subr.mxu0 0.0
  %837 = vmatpush1.msra.mxu0 0.0
  %838 = vmatprep.subr.mxu0 0.0
  %839 = vmatpush1.msra.mxu0 0.0
  %840 = vmatprep.subr.mxu0 0.0
  %841 = vmatpush1.msra.mxu0 0.0
  %842 = vmatprep.subr.mxu0 0.0
  %843 = vmatpush1.msra.mxu0 0.0
  %844 = vmatprep.subr.mxu0 0.0
  %845 = vmatpush1.msra.mxu0 0.0
  %846 = vmatprep.subr.mxu0 0.0
  %847 = vmatpush1.msra.mxu0 0.0
  %848 = vmatprep.subr.mxu0 0.0
  %849 = vmatpush1.msra.mxu0 0.0
  %850 = vmatprep.subr.mxu0 0.0
  %851 = vmatpush1.msra.mxu0 0.0
  %852 = vmatprep.subr.mxu0 0.0
  %853 = vmatpush1.msra.mxu0 0.0
  %854 = vmatprep.subr.mxu0 0.0
  %855 = vmatpush1.msra.mxu0 0.0
  %856 = vmatprep.subr.mxu0 0.0
  %857 = vmatpush1.msra.mxu0 0.0
  %858 = vmatprep.subr.mxu0 0.0
  %859 = vmatpush1.msra.mxu0 0.0
  %860 = vmatprep.subr.mxu0 0.0
  %861 = vmatpush1.msra.mxu0 0.0
  %862 = vmatprep.subr.mxu0 0.0
  %863 = vmatpush1.msra.mxu0 0.0
  %864 = vmatprep.subr.mxu0 0.0
  %865 = vmatpush1.msra.mxu0 0.0
  %866 = vmatprep.subr.mxu0 0.0
  %867 = vmatpush1.msra.mxu0 0.0
  %868 = vmatprep.subr.mxu0 0.0
  %869 = vmatpush1.msra.mxu0 0.0
  %870 = vmatprep.subr.mxu0 0.0
  %871 = vmatpush1.msra.mxu0 0.0
  %872 = vmatprep.subr.mxu0 0.0
  %873 = vmatpush1.msra.mxu0 0.0
  %874 = vmatprep.subr.mxu0 0.0
  %875 = vmatpush1.msra.mxu0 0.0
  %876 = vmatprep.mubr.f32.mxu0 0.0
  %877 = vmatmul.mubr.f32.gmra.mrb[0].mxu0 %v221
  %v878 = vpop.f32.mrb[0].mxu0
  %v879 = vadd.f32 %v217, %v878
  %v880 = vpop.f32.mrb[0].mxu0
  %881 = vmatprep.mubr.f32.mxu0 0.0
  %882 = vmatmul.mubr.f32.gmra.mrb[0].mxu0 %v224
  %v883 = vpop.f32.mrb[0].mxu0
  %v884 = vadd.f32 %v217, %v883
  %v885 = vpop.f32.mrb[0].mxu0
  %886 = vmatprep.mubr.f32.mxu0 0.0
  %887 = vmatmul.mubr.f32.gmra.mrb[0].mxu0 %v227
  %v888 = vpop.f32.mrb[0].mxu0
  %v889 = vadd.f32 %v217, %v888
  %v890 = vpop.f32.mrb[0].mxu0
  %891 = vmatprep.mubr.f32.mxu0 0.0
  %892 = vmatmul.mubr.f32.gmra.mrb[0].mxu0 %v230
  %v893 = vpop.f32.mrb[0].mxu0
  %v894 = vadd.f32 %v217, %v893
  %v895 = vpop.f32.mrb[0].mxu0
  %896 = vmatprep.mubr.f32.mxu0 0.0
  %897 = vmatmul.mubr.f32.gmra.mrb[0].mxu0 %v233
  %v898 = vpop.f32.mrb[0].mxu0
  %v899 = vadd.f32 %v217, %v898
  %v900 = vpop.f32.mrb[0].mxu0
  %901 = vmatprep.mubr.f32.mxu0 0.0
  %902 = vmatmul.mubr.f32.gmra.mrb[0].mxu0 %v236
  %v903 = vpop.f32.mrb[0].mxu0
  %v904 = vadd.f32 %v217, %v903
  %v905 = vpop.f32.mrb[0].mxu0
  %906 = vmatprep.mubr.f32.mxu0 0.0
  %907 = vmatmul.mubr.f32.gmra.mrb[0].mxu0 %v239
  %v908 = vpop.f32.mrb[0].mxu0
  %v909 = vadd.f32 %v217, %v908
  %v910 = vpop.f32.mrb[0].mxu0
  %911 = vmatprep.mubr.f32.mxu0 0.0
  %912 = vmatmul.mubr.f32.gmra.mrb[0].mxu0 %v242
  %v913 = vpop.f32.mrb[0].mxu0
  %v914 = vadd.f32 %v217, %v913
  %v915 = vpop.f32.mrb[0].mxu0
  %916 = vmatprep.mubr.f32.mxu0 0.0
  %917 = vmatmul.mubr.f32.gmra.mrb[0].mxu0 %v245
  %v918 = vpop.f32.mrb[0].mxu0
  %v919 = vadd.f32 %v217, %v918
  %v920 = vpop.f32.mrb[0].mxu0
  %921 = vmatprep.mubr.f32.mxu0 0.0
  %922 = vmatmul.mubr.f32.gmra.mrb[0].mxu0 %v248
  %v923 = vpop.f32.mrb[0].mxu0
  %v924 = vadd.f32 %v217, %v923
  %v925 = vpop.f32.mrb[0].mxu0
  %926 = vmatprep.mubr.f32.mxu0 0.0
  %927 = vmatmul.mubr.f32.gmra.mrb[0].mxu0 %v251
  %v928 = vpop.f32.mrb[0].mxu0
  %v929 = vadd.f32 %v217, %v928
  %v930 = vpop.f32.mrb[0].mxu0
  %931 = vmatprep.mubr.f32.mxu0 0.0
  %932 = vmatmul.mubr.f32.gmra.mrb[0].mxu0 %v254
  %v933 = vpop.f32.mrb[0].mxu0
  %v934 = vadd.f32 %v217, %v933
  %v935 = vpop.f32.mrb[0].mxu0
  %936 = vmatprep.mubr.f32.mxu0 0.0
  %937 = vmatmul.mubr.f32.gmra.mrb[0].mxu0 %v257
  %v938 = vpop.f32.mrb[0].mxu0
  %v939 = vadd.f32 %v217, %v938
  %v940 = vpop.f32.mrb[0].mxu0
  %941 = vmatprep.mubr.f32.mxu0 0.0
  %942 = vmatmul.mubr.f32.gmra.mrb[0].mxu0 %v260
  %v943 = vpop.f32.mrb[0].mxu0
  %v944 = vadd.f32 %v217, %v943
  %v945 = vpop.f32.mrb[0].mxu0
  %946 = vmatprep.mubr.f32.mxu0 0.0
  %947 = vmatmul.mubr.f32.gmra.mrb[0].mxu0 %v263
  %v948 = vpop.f32.mrb[0].mxu0
  %v949 = vadd.f32 %v217, %v948
  %v950 = vpop.f32.mrb[0].mxu0
  %951 = vmatprep.mubr.f32.mxu0 0.0
  %952 = vmatmul.mubr.f32.gmra.mrb[0].mxu0 %v266
  %v953 = vpop.f32.mrb[0].mxu0
  %v954 = vadd.f32 %v217, %v953
  %v955 = vpop.f32.mrb[0].mxu0
  %956 = vmatprep.mubr.f32.mxu0 0.0
  %957 = vmatmul.mubr.f32.gmra.mrb[0].mxu0 %v269
  %v958 = vpop.f32.mrb[0].mxu0
  %v959 = vadd.f32 %v217, %v958
  %v960 = vpop.f32.mrb[0].mxu0
  %961 = vmatprep.mubr.f32.mxu0 0.0
  %962 = vmatmul.mubr.f32.gmra.mrb[0].mxu0 %v272
  %v963 = vpop.f32.mrb[0].mxu0
  %v964 = vadd.f32 %v217, %v963
  %v965 = vpop.f32.mrb[0].mxu0
  %966 = vmatprep.mubr.f32.mxu0 0.0
  %967 = vmatmul.mubr.f32.gmra.mrb[0].mxu0 %v275
  %v968 = vpop.f32.mrb[0].mxu0
  %v969 = vadd.f32 %v217, %v968
  %v970 = vpop.f32.mrb[0].mxu0
  %971 = vmatprep.mubr.f32.mxu0 0.0
  %972 = vmatmul.mubr.f32.gmra.mrb[0].mxu0 %v278
  %v973 = vpop.f32.mrb[0].mxu0
  %v974 = vadd.f32 %v217, %v973
  %v975 = vpop.f32.mrb[0].mxu0
  %976 = vmatprep.mubr.f32.mxu0 0.0
  %977 = vmatmul.mubr.f32.gmra.mrb[0].mxu0 %v281
  %v978 = vpop.f32.mrb[0].mxu0
  %v979 = vadd.f32 %v217, %v978
  %v980 = vpop.f32.mrb[0].mxu0
  %981 = vmatprep.mubr.f32.mxu0 0.0
  %982 = vmatmul.mubr.f32.gmra.mrb[0].mxu0 %v284
  %v983 = vpop.f32.mrb[0].mxu0
  %v984 = vadd.f32 %v217, %v983
  %v985 = vpop.f32.mrb[0].mxu0
  %986 = vmatprep.mubr.f32.mxu0 0.0
  %987 = vmatmul.mubr.f32.gmra.mrb[0].mxu0 %v287
  %v988 = vpop.f32.mrb[0].mxu0
  %v989 = vadd.f32 %v217, %v988
  %v990 = vpop.f32.mrb[0].mxu0
  %991 = vmatprep.mubr.f32.mxu0 0.0
  %992 = vmatmul.mubr.f32.gmra.mrb[0].mxu0 %v290
  %v993 = vpop.f32.mrb[0].mxu0
  %v994 = vadd.f32 %v217, %v993
  %v995 = vpop.f32.mrb[0].mxu0
  %996 = vmatprep.mubr.f32.mxu0 0.0
  %997 = vmatmul.mubr.f32.gmra.mrb[0].mxu0 %v293
  %v998 = vpop.f32.mrb[0].mxu0
  %v999 = vadd.f32 %v217, %v998
  %v1000 = vpop.f32.mrb[0].mxu0
  %1001 = vmatprep.mubr.f32.mxu0 0.0
  %1002 = vmatmul.mubr.f32.gmra.mrb[0].mxu0 %v296
  %v1003 = vpop.f32.mrb[0].mxu0
  %v1004 = vadd.f32 %v217, %v1003
  %v1005 = vpop.f32.mrb[0].mxu0
  %1006 = vmatprep.mubr.f32.mxu0 0.0
  %1007 = vmatmul.mubr.f32.gmra.mrb[0].mxu0 %v299
  %v1008 = vpop.f32.mrb[0].mxu0
  %v1009 = vadd.f32 %v217, %v1008
  %v1010 = vpop.f32.mrb[0].mxu0
  %1011 = vmatprep.mubr.f32.mxu0 0.0
  %1012 = vmatmul.mubr.f32.gmra.mrb[0].mxu0 %v302
  %v1013 = vpop.f32.mrb[0].mxu0
  %v1014 = vadd.f32 %v217, %v1013
  %v1015 = vpop.f32.mrb[0].mxu0
  %1016 = vmatprep.mubr.f32.mxu0 0.0
  %1017 = vmatmul.mubr.f32.gmra.mrb[0].mxu0 %v305
  %v1018 = vpop.f32.mrb[0].mxu0
  %v1019 = vadd.f32 %v217, %v1018
  %v1020 = vpop.f32.mrb[0].mxu0
  %1021 = vmatprep.mubr.f32.mxu0 0.0
  %1022 = vmatmul.mubr.f32.gmra.mrb[0].mxu0 %v308
  %v1023 = vpop.f32.mrb[0].mxu0
  %v1024 = vadd.f32 %v217, %v1023
  %v1025 = vpop.f32.mrb[0].mxu0
  %1026 = vmatprep.mubr.f32.mxu0 0.0
  %1027 = vmatmul.mubr.f32.gmra.mrb[0].mxu0 %v311
  %v1028 = vpop.f32.mrb[0].mxu0
  %v1029 = vadd.f32 %v217, %v1028
  %v1030 = vpop.f32.mrb[0].mxu0
  %1031 = vmatprep.mubr.f32.mxu0 0.0
  %1032 = vmatmul.mubr.f32.gmra.mrb[0].mxu0 %v314
  %v1033 = vpop.f32.mrb[0].mxu0
  %v1034 = vadd.f32 %v217, %v1033
  %v1035 = vpop.f32.mrb[0].mxu0
  %1036 = vmatprep.mubr.f32.mxu0 0.0
  %1037 = vmatmul.mubr.f32.gmra.mrb[0].mxu0 %v317
  %v1038 = vpop.f32.mrb[0].mxu0
  %v1039 = vadd.f32 %v217, %v1038
  %v1040 = vpop.f32.mrb[0].mxu0
  %1041 = vmatprep.mubr.f32.mxu0 0.0
  %1042 = vmatmul.mubr.f32.gmra.mrb[0].mxu0 %v320
  %v1043 = vpop.f32.mrb[0].mxu0
  %v1044 = vadd.f32 %v217, %v1043
  %v1045 = vpop.f32.mrb[0].mxu0
  %1046 = vmatprep.mubr.f32.mxu0 0.0
  %1047 = vmatmul.mubr.f32.gmra.mrb[0].mxu0 %v323
  %v1048 = vpop.f32.mrb[0].mxu0
  %v1049 = vadd.f32 %v217, %v1048
  %v1050 = vpop.f32.mrb[0].mxu0
  %1051 = vmatprep.mubr.f32.mxu0 0.0
  %1052 = vmatmul.mubr.f32.gmra.mrb[0].mxu0 %v326
  %v1053 = vpop.f32.mrb[0].mxu0
  %v1054 = vadd.f32 %v217, %v1053
  %v1055 = vpop.f32.mrb[0].mxu0
  %1056 = vmatprep.mubr.f32.mxu0 0.0
  %1057 = vmatmul.mubr.f32.gmra.mrb[0].mxu0 %v329
  %v1058 = vpop.f32.mrb[0].mxu0
  %v1059 = vadd.f32 %v217, %v1058
  %v1060 = vpop.f32.mrb[0].mxu0
  %1061 = vmatprep.mubr.f32.mxu0 0.0
  %1062 = vmatmul.mubr.f32.gmra.mrb[0].mxu0 %v332
  %v1063 = vpop.f32.mrb[0].mxu0
  %v1064 = vadd.f32 %v217, %v1063
  %v1065 = vpop.f32.mrb[0].mxu0
  %1066 = vmatprep.mubr.f32.mxu0 0.0
  %1067 = vmatmul.mubr.f32.gmra.mrb[0].mxu0 %v335
  %v1068 = vpop.f32.mrb[0].mxu0
  %v1069 = vadd.f32 %v217, %v1068
  %v1070 = vpop.f32.mrb[0].mxu0
  %1071 = vmatprep.mubr.f32.mxu0 0.0
  %1072 = vmatmul.mubr.f32.gmra.mrb[0].mxu0 %v338
  %v1073 = vpop.f32.mrb[0].mxu0
  %v1074 = vadd.f32 %v217, %v1073
  %v1075 = vpop.f32.mrb[0].mxu0
  %1076 = vmatprep.mubr.f32.mxu0 0.0
  %1077 = vmatmul.mubr.f32.gmra.mrb[0].mxu0 %v341
  %v1078 = vpop.f32.mrb[0].mxu0
  %v1079 = vadd.f32 %v217, %v1078
  %v1080 = vpop.f32.mrb[0].mxu0
  %1081 = vmatprep.mubr.f32.mxu0 0.0
  %1082 = vmatmul.mubr.f32.gmra.mrb[0].mxu0 %v344
  %v1083 = vpop.f32.mrb[0].mxu0
  %v1084 = vadd.f32 %v217, %v1083
  %v1085 = vpop.f32.mrb[0].mxu0
  %1086 = vmatprep.mubr.f32.mxu0 0.0
  %1087 = vmatmul.mubr.f32.gmra.mrb[0].mxu0 %v347
  %v1088 = vpop.f32.mrb[0].mxu0
  %v1089 = vadd.f32 %v217, %v1088
  %v1090 = vpop.f32.mrb[0].mxu0
  %1091 = vmatprep.mubr.f32.mxu0 0.0
  %1092 = vmatmul.mubr.f32.gmra.mrb[0].mxu0 %v350
  %v1093 = vpop.f32.mrb[0].mxu0
  %v1094 = vadd.f32 %v217, %v1093
  %v1095 = vpop.f32.mrb[0].mxu0
  %1096 = vmatprep.mubr.f32.mxu0 0.0
  %1097 = vmatmul.mubr.f32.gmra.mrb[0].mxu0 %v353
  %v1098 = vpop.f32.mrb[0].mxu0
  %v1099 = vadd.f32 %v217, %v1098
  %v1100 = vpop.f32.mrb[0].mxu0
  %1101 = vmatprep.mubr.f32.mxu0 0.0
  %1102 = vmatmul.mubr.f32.gmra.mrb[0].mxu0 %v356
  %v1103 = vpop.f32.mrb[0].mxu0
  %v1104 = vadd.f32 %v217, %v1103
  %v1105 = vpop.f32.mrb[0].mxu0
  %1106 = vmatprep.mubr.f32.mxu0 0.0
  %1107 = vmatmul.mubr.f32.gmra.mrb[0].mxu0 %v359
  %v1108 = vpop.f32.mrb[0].mxu0
  %v1109 = vadd.f32 %v217, %v1108
  %v1110 = vpop.f32.mrb[0].mxu0
  %1111 = vmatprep.mubr.f32.mxu0 0.0
  %1112 = vmatmul.mubr.f32.gmra.mrb[0].mxu0 %v362
  %v1113 = vpop.f32.mrb[0].mxu0
  %v1114 = vadd.f32 %v217, %v1113
  %v1115 = vpop.f32.mrb[0].mxu0
  %1116 = vmatprep.mubr.f32.mxu0 0.0
  %1117 = vmatmul.mubr.f32.gmra.mrb[0].mxu0 %v365
  %v1118 = vpop.f32.mrb[0].mxu0
  %v1119 = vadd.f32 %v217, %v1118
  %v1120 = vpop.f32.mrb[0].mxu0
  %1121 = vmatprep.mubr.f32.mxu0 0.0
  %1122 = vmatmul.mubr.f32.gmra.mrb[0].mxu0 %v368
  %v1123 = vpop.f32.mrb[0].mxu0
  %v1124 = vadd.f32 %v217, %v1123
  %v1125 = vpop.f32.mrb[0].mxu0
  %1126 = vmatprep.mubr.f32.mxu0 0.0
  %1127 = vmatmul.mubr.f32.gmra.mrb[0].mxu0 %v371
  %v1128 = vpop.f32.mrb[0].mxu0
  %v1129 = vadd.f32 %v217, %v1128
  %v1130 = vpop.f32.mrb[0].mxu0
  %1131 = vmatprep.mubr.f32.mxu0 0.0
  %1132 = vmatmul.mubr.f32.gmra.mrb[0].mxu0 %v374
  %v1133 = vpop.f32.mrb[0].mxu0
  %v1134 = vadd.f32 %v217, %v1133
  %v1135 = vpop.f32.mrb[0].mxu0
  %1136 = vmatprep.mubr.f32.mxu0 0.0
  %1137 = vmatmul.mubr.f32.gmra.mrb[0].mxu0 %v377
  %v1138 = vpop.f32.mrb[0].mxu0
  %v1139 = vadd.f32 %v217, %v1138
  %v1140 = vpop.f32.mrb[0].mxu0
  %1141 = vmatprep.mubr.f32.mxu0 0.0
  %1142 = vmatmul.mubr.f32.gmra.mrb[0].mxu0 %v380
  %v1143 = vpop.f32.mrb[0].mxu0
  %v1144 = vadd.f32 %v217, %v1143
  %v1145 = vpop.f32.mrb[0].mxu0
  %1146 = vmatprep.mubr.f32.mxu0 0.0
  %1147 = vmatmul.mubr.f32.gmra.mrb[0].mxu0 %v383
  %v1148 = vpop.f32.mrb[0].mxu0
  %v1149 = vadd.f32 %v217, %v1148
  %v1150 = vpop.f32.mrb[0].mxu0
  %1151 = vmatprep.mubr.f32.mxu0 0.0
  %1152 = vmatmul.mubr.f32.gmra.mrb[0].mxu0 %v386
  %v1153 = vpop.f32.mrb[0].mxu0
  %v1154 = vadd.f32 %v217, %v1153
  %v1155 = vpop.f32.mrb[0].mxu0
  %1156 = vmatprep.mubr.f32.mxu0 0.0
  %1157 = vmatmul.mubr.f32.gmra.mrb[0].mxu0 %v389
  %v1158 = vpop.f32.mrb[0].mxu0
  %v1159 = vadd.f32 %v217, %v1158
  %v1160 = vpop.f32.mrb[0].mxu0
  %1161 = vmatprep.mubr.f32.mxu0 0.0
  %1162 = vmatmul.mubr.f32.gmra.mrb[0].mxu0 %v392
  %v1163 = vpop.f32.mrb[0].mxu0
  %v1164 = vadd.f32 %v217, %v1163
  %v1165 = vpop.f32.mrb[0].mxu0
  %1166 = vmatprep.mubr.f32.mxu0 0.0
  %1167 = vmatmul.mubr.f32.gmra.mrb[0].mxu0 %v395
  %v1168 = vpop.f32.mrb[0].mxu0
  %v1169 = vadd.f32 %v217, %v1168
  %v1170 = vpop.f32.mrb[0].mxu0
  %1171 = vmatprep.mubr.f32.mxu0 0.0
  %1172 = vmatmul.mubr.f32.gmra.mrb[0].mxu0 %v398
  %v1173 = vpop.f32.mrb[0].mxu0
  %v1174 = vadd.f32 %v217, %v1173
  %v1175 = vpop.f32.mrb[0].mxu0
  %1176 = vmatprep.mubr.f32.mxu0 0.0
  %1177 = vmatmul.mubr.f32.gmra.mrb[0].mxu0 %v401
  %v1178 = vpop.f32.mrb[0].mxu0
  %v1179 = vadd.f32 %v217, %v1178
  %v1180 = vpop.f32.mrb[0].mxu0
  %1181 = vmatprep.mubr.f32.mxu0 0.0
  %1182 = vmatmul.mubr.f32.gmra.mrb[0].mxu0 %v404
  %v1183 = vpop.f32.mrb[0].mxu0
  %v1184 = vadd.f32 %v217, %v1183
  %v1185 = vpop.f32.mrb[0].mxu0
  %1186 = vmatprep.mubr.f32.mxu0 0.0
  %1187 = vmatmul.mubr.f32.gmra.mrb[0].mxu0 %v407
  %v1188 = vpop.f32.mrb[0].mxu0
  %v1189 = vadd.f32 %v217, %v1188
  %v1190 = vpop.f32.mrb[0].mxu0
  %1191 = vmatprep.mubr.f32.mxu0 0.0
  %1192 = vmatmul.mubr.f32.gmra.mrb[0].mxu0 %v410
  %v1193 = vpop.f32.mrb[0].mxu0
  %v1194 = vadd.f32 %v217, %v1193
  %v1195 = vpop.f32.mrb[0].mxu0
  %1196 = vmatprep.mubr.f32.mxu0 0.0
  %1197 = vmatmul.mubr.f32.gmra.mrb[0].mxu0 %v413
  %v1198 = vpop.f32.mrb[0].mxu0
  %v1199 = vadd.f32 %v217, %v1198
  %v1200 = vpop.f32.mrb[0].mxu0
  %1201 = vmatprep.mubr.f32.mxu0 0.0
  %1202 = vmatmul.mubr.f32.gmra.mrb[0].mxu0 %v416
  %v1203 = vpop.f32.mrb[0].mxu0
  %v1204 = vadd.f32 %v217, %v1203
  %v1205 = vpop.f32.mrb[0].mxu0
  %1206 = vmatprep.mubr.f32.mxu0 0.0
  %1207 = vmatmul.mubr.f32.gmra.mrb[0].mxu0 %v419
  %v1208 = vpop.f32.mrb[0].mxu0
  %v1209 = vadd.f32 %v217, %v1208
  %v1210 = vpop.f32.mrb[0].mxu0
  %1211 = vmatprep.mubr.f32.mxu0 0.0
  %1212 = vmatmul.mubr.f32.gmra.mrb[0].mxu0 %v422
  %v1213 = vpop.f32.mrb[0].mxu0
  %v1214 = vadd.f32 %v217, %v1213
  %v1215 = vpop.f32.mrb[0].mxu0
  %1216 = vmatprep.mubr.f32.mxu0 0.0
  %1217 = vmatmul.mubr.f32.gmra.mrb[0].mxu0 %v425
  %v1218 = vpop.f32.mrb[0].mxu0
  %v1219 = vadd.f32 %v217, %v1218
  %v1220 = vpop.f32.mrb[0].mxu0
  %1221 = vmatprep.mubr.f32.mxu0 0.0
  %1222 = vmatmul.mubr.f32.gmra.mrb[0].mxu0 %v428
  %v1223 = vpop.f32.mrb[0].mxu0
  %v1224 = vadd.f32 %v217, %v1223
  %v1225 = vpop.f32.mrb[0].mxu0
  %1226 = vmatprep.mubr.f32.mxu0 0.0
  %1227 = vmatmul.mubr.f32.gmra.mrb[0].mxu0 %v431
  %v1228 = vpop.f32.mrb[0].mxu0
  %v1229 = vadd.f32 %v217, %v1228
  %v1230 = vpop.f32.mrb[0].mxu0
  %1231 = vmatprep.mubr.f32.mxu0 0.0
  %1232 = vmatmul.mubr.f32.gmra.mrb[0].mxu0 %v434
  %v1233 = vpop.f32.mrb[0].mxu0
  %v1234 = vadd.f32 %v217, %v1233
  %v1235 = vpop.f32.mrb[0].mxu0
  %1236 = vmatprep.mubr.f32.mxu0 0.0
  %1237 = vmatmul.mubr.f32.gmra.mrb[0].mxu0 %v437
  %v1238 = vpop.f32.mrb[0].mxu0
  %v1239 = vadd.f32 %v217, %v1238
  %v1240 = vpop.f32.mrb[0].mxu0
  %1241 = vmatprep.mubr.f32.mxu0 0.0
  %1242 = vmatmul.mubr.f32.gmra.mrb[0].mxu0 %v440
  %v1243 = vpop.f32.mrb[0].mxu0
  %v1244 = vadd.f32 %v217, %v1243
  %v1245 = vpop.f32.mrb[0].mxu0
  %1246 = vmatprep.mubr.f32.mxu0 0.0
  %1247 = vmatmul.mubr.f32.gmra.mrb[0].mxu0 %v443
  %v1248 = vpop.f32.mrb[0].mxu0
  %v1249 = vadd.f32 %v217, %v1248
  %v1250 = vpop.f32.mrb[0].mxu0
  %1251 = vmatprep.mubr.f32.mxu0 0.0
  %1252 = vmatmul.mubr.f32.gmra.mrb[0].mxu0 %v446
  %v1253 = vpop.f32.mrb[0].mxu0
  %v1254 = vadd.f32 %v217, %v1253
  %v1255 = vpop.f32.mrb[0].mxu0
  %1256 = vmatprep.mubr.f32.mxu0 0.0
  %1257 = vmatmul.mubr.f32.gmra.mrb[0].mxu0 %v449
  %v1258 = vpop.f32.mrb[0].mxu0
  %v1259 = vadd.f32 %v217, %v1258
  %v1260 = vpop.f32.mrb[0].mxu0
  %1261 = vmatprep.mubr.f32.mxu0 0.0
  %1262 = vmatmul.mubr.f32.gmra.mrb[0].mxu0 %v452
  %v1263 = vpop.f32.mrb[0].mxu0
  %v1264 = vadd.f32 %v217, %v1263
  %v1265 = vpop.f32.mrb[0].mxu0
  %1266 = vmatprep.mubr.f32.mxu0 0.0
  %1267 = vmatmul.mubr.f32.gmra.mrb[0].mxu0 %v455
  %v1268 = vpop.f32.mrb[0].mxu0
  %v1269 = vadd.f32 %v217, %v1268
  %v1270 = vpop.f32.mrb[0].mxu0
  %1271 = vmatprep.mubr.f32.mxu0 0.0
  %1272 = vmatmul.mubr.f32.gmra.mrb[0].mxu0 %v458
  %v1273 = vpop.f32.mrb[0].mxu0
  %v1274 = vadd.f32 %v217, %v1273
  %v1275 = vpop.f32.mrb[0].mxu0
  %1276 = vmatprep.mubr.f32.mxu0 0.0
  %1277 = vmatmul.mubr.f32.gmra.mrb[0].mxu0 %v461
  %v1278 = vpop.f32.mrb[0].mxu0
  %v1279 = vadd.f32 %v217, %v1278
  %v1280 = vpop.f32.mrb[0].mxu0
  %1281 = vmatprep.mubr.f32.mxu0 0.0
  %1282 = vmatmul.mubr.f32.gmra.mrb[0].mxu0 %v464
  %v1283 = vpop.f32.mrb[0].mxu0
  %v1284 = vadd.f32 %v217, %v1283
  %v1285 = vpop.f32.mrb[0].mxu0
  %1286 = vmatprep.mubr.f32.mxu0 0.0
  %1287 = vmatmul.mubr.f32.gmra.mrb[0].mxu0 %v467
  %v1288 = vpop.f32.mrb[0].mxu0
  %v1289 = vadd.f32 %v217, %v1288
  %v1290 = vpop.f32.mrb[0].mxu0
  %1291 = vmatprep.mubr.f32.mxu0 0.0
  %1292 = vmatmul.mubr.f32.gmra.mrb[0].mxu0 %v470
  %v1293 = vpop.f32.mrb[0].mxu0
  %v1294 = vadd.f32 %v217, %v1293
  %v1295 = vpop.f32.mrb[0].mxu0
  %1296 = vmatprep.mubr.f32.mxu0 0.0
  %1297 = vmatmul.mubr.f32.gmra.mrb[0].mxu0 %v473
  %v1298 = vpop.f32.mrb[0].mxu0
  %v1299 = vadd.f32 %v217, %v1298
  %v1300 = vpop.f32.mrb[0].mxu0
  %1301 = vmatprep.mubr.f32.mxu0 0.0
  %1302 = vmatmul.mubr.f32.gmra.mrb[0].mxu0 %v476
  %v1303 = vpop.f32.mrb[0].mxu0
  %v1304 = vadd.f32 %v217, %v1303
  %v1305 = vpop.f32.mrb[0].mxu0
  %1306 = vmatprep.mubr.f32.mxu0 0.0
  %1307 = vmatmul.mubr.f32.gmra.mrb[0].mxu0 %v479
  %v1308 = vpop.f32.mrb[0].mxu0
  %v1309 = vadd.f32 %v217, %v1308
  %v1310 = vpop.f32.mrb[0].mxu0
  %1311 = vmatprep.mubr.f32.mxu0 0.0
  %1312 = vmatmul.mubr.f32.gmra.mrb[0].mxu0 %v482
  %v1313 = vpop.f32.mrb[0].mxu0
  %v1314 = vadd.f32 %v217, %v1313
  %v1315 = vpop.f32.mrb[0].mxu0
  %1316 = vmatprep.mubr.f32.mxu0 0.0
  %1317 = vmatmul.mubr.f32.gmra.mrb[0].mxu0 %v485
  %v1318 = vpop.f32.mrb[0].mxu0
  %v1319 = vadd.f32 %v217, %v1318
  %v1320 = vpop.f32.mrb[0].mxu0
  %1321 = vmatprep.mubr.f32.mxu0 0.0
  %1322 = vmatmul.mubr.f32.gmra.mrb[0].mxu0 %v488
  %v1323 = vpop.f32.mrb[0].mxu0
  %v1324 = vadd.f32 %v217, %v1323
  %v1325 = vpop.f32.mrb[0].mxu0
  %1326 = vmatprep.mubr.f32.mxu0 0.0
  %1327 = vmatmul.mubr.f32.gmra.mrb[0].mxu0 %v491
  %v1328 = vpop.f32.mrb[0].mxu0
  %v1329 = vadd.f32 %v217, %v1328
  %v1330 = vpop.f32.mrb[0].mxu0
  %1331 = vmatprep.mubr.f32.mxu0 0.0
  %1332 = vmatmul.mubr.f32.gmra.mrb[0].mxu0 %v494
  %v1333 = vpop.f32.mrb[0].mxu0
  %v1334 = vadd.f32 %v217, %v1333
  %v1335 = vpop.f32.mrb[0].mxu0
  %1336 = vmatprep.mubr.f32.mxu0 0.0
  %1337 = vmatmul.mubr.f32.gmra.mrb[0].mxu0 %v497
  %v1338 = vpop.f32.mrb[0].mxu0
  %v1339 = vadd.f32 %v217, %v1338
  %v1340 = vpop.f32.mrb[0].mxu0
  %1341 = vmatprep.mubr.f32.mxu0 0.0
  %1342 = vmatmul.mubr.f32.gmra.mrb[0].mxu0 %v500
  %v1343 = vpop.f32.mrb[0].mxu0
  %v1344 = vadd.f32 %v217, %v1343
  %v1345 = vpop.f32.mrb[0].mxu0
  %1346 = vmatprep.mubr.f32.mxu0 0.0
  %1347 = vmatmul.mubr.f32.gmra.mrb[0].mxu0 %v503
  %v1348 = vpop.f32.mrb[0].mxu0
  %v1349 = vadd.f32 %v217, %v1348
  %v1350 = vpop.f32.mrb[0].mxu0
  %1351 = vmatprep.mubr.f32.mxu0 0.0
  %1352 = vmatmul.mubr.f32.gmra.mrb[0].mxu0 %v506
  %v1353 = vpop.f32.mrb[0].mxu0
  %v1354 = vadd.f32 %v217, %v1353
  %v1355 = vpop.f32.mrb[0].mxu0
  %1356 = vmatprep.mubr.f32.mxu0 0.0
  %1357 = vmatmul.mubr.f32.gmra.mrb[0].mxu0 %v509
  %v1358 = vpop.f32.mrb[0].mxu0
  %v1359 = vadd.f32 %v217, %v1358
  %v1360 = vpop.f32.mrb[0].mxu0
  %1361 = vmatprep.mubr.f32.mxu0 0.0
  %1362 = vmatmul.mubr.f32.gmra.mrb[0].mxu0 %v512
  %v1363 = vpop.f32.mrb[0].mxu0
  %v1364 = vadd.f32 %v217, %v1363
  %v1365 = vpop.f32.mrb[0].mxu0
  %1366 = vmatprep.mubr.f32.mxu0 0.0
  %1367 = vmatmul.mubr.f32.gmra.mrb[0].mxu0 %v515
  %v1368 = vpop.f32.mrb[0].mxu0
  %v1369 = vadd.f32 %v217, %v1368
  %v1370 = vpop.f32.mrb[0].mxu0
  %1371 = vmatprep.mubr.f32.mxu0 0.0
  %1372 = vmatmul.mubr.f32.gmra.mrb[0].mxu0 %v518
  %v1373 = vpop.f32.mrb[0].mxu0
  %v1374 = vadd.f32 %v217, %v1373
  %v1375 = vpop.f32.mrb[0].mxu0
  %1376 = vmatprep.mubr.f32.mxu0 0.0
  %1377 = vmatmul.mubr.f32.gmra.mrb[0].mxu0 %v521
  %v1378 = vpop.f32.mrb[0].mxu0
  %v1379 = vadd.f32 %v217, %v1378
  %v1380 = vpop.f32.mrb[0].mxu0
  %1381 = vmatprep.mubr.f32.mxu0 0.0
  %1382 = vmatmul.mubr.f32.gmra.mrb[0].mxu0 %v524
  %v1383 = vpop.f32.mrb[0].mxu0
  %v1384 = vadd.f32 %v217, %v1383
  %v1385 = vpop.f32.mrb[0].mxu0
  %1386 = vmatprep.mubr.f32.mxu0 0.0
  %1387 = vmatmul.mubr.f32.gmra.mrb[0].mxu0 %v527
  %v1388 = vpop.f32.mrb[0].mxu0
  %v1389 = vadd.f32 %v217, %v1388
  %v1390 = vpop.f32.mrb[0].mxu0
  %1391 = vmatprep.mubr.f32.mxu0 0.0
  %1392 = vmatmul.mubr.f32.gmra.mrb[0].mxu0 %v530
  %v1393 = vpop.f32.mrb[0].mxu0
  %v1394 = vadd.f32 %v217, %v1393
  %v1395 = vpop.f32.mrb[0].mxu0
  %1396 = vmatprep.mubr.f32.mxu0 0.0
  %1397 = vmatmul.mubr.f32.gmra.mrb[0].mxu0 %v533
  %v1398 = vpop.f32.mrb[0].mxu0
  %v1399 = vadd.f32 %v217, %v1398
  %v1400 = vpop.f32.mrb[0].mxu0
  %1401 = vmatprep.mubr.f32.mxu0 0.0
  %1402 = vmatmul.mubr.f32.gmra.mrb[0].mxu0 %v536
  %v1403 = vpop.f32.mrb[0].mxu0
  %v1404 = vadd.f32 %v217, %v1403
  %v1405 = vpop.f32.mrb[0].mxu0
  %1406 = vmatprep.mubr.f32.mxu0 0.0
  %1407 = vmatmul.mubr.f32.gmra.mrb[0].mxu0 %v539
  %v1408 = vpop.f32.mrb[0].mxu0
  %v1409 = vadd.f32 %v217, %v1408
  %v1410 = vpop.f32.mrb[0].mxu0
  %1411 = vmatprep.mubr.f32.mxu0 0.0
  %1412 = vmatmul.mubr.f32.gmra.mrb[0].mxu0 %v542
  %v1413 = vpop.f32.mrb[0].mxu0
  %v1414 = vadd.f32 %v217, %v1413
  %v1415 = vpop.f32.mrb[0].mxu0
  %1416 = vmatprep.mubr.f32.mxu0 0.0
  %1417 = vmatmul.mubr.f32.gmra.mrb[0].mxu0 %v545
  %v1418 = vpop.f32.mrb[0].mxu0
  %v1419 = vadd.f32 %v217, %v1418
  %v1420 = vpop.f32.mrb[0].mxu0
  %1421 = vmatprep.mubr.f32.mxu0 0.0
  %1422 = vmatmul.mubr.f32.gmra.mrb[0].mxu0 %v548
  %v1423 = vpop.f32.mrb[0].mxu0
  %v1424 = vadd.f32 %v217, %v1423
  %v1425 = vpop.f32.mrb[0].mxu0
  %1426 = vmatprep.mubr.f32.mxu0 0.0
  %1427 = vmatmul.mubr.f32.gmra.mrb[0].mxu0 %v551
  %v1428 = vpop.f32.mrb[0].mxu0
  %v1429 = vadd.f32 %v217, %v1428
  %v1430 = vpop.f32.mrb[0].mxu0
  %1431 = vmatprep.mubr.f32.mxu0 0.0
  %1432 = vmatmul.mubr.f32.gmra.mrb[0].mxu0 %v554
  %v1433 = vpop.f32.mrb[0].mxu0
  %v1434 = vadd.f32 %v217, %v1433
  %v1435 = vpop.f32.mrb[0].mxu0
  %1436 = vmatprep.mubr.f32.mxu0 0.0
  %1437 = vmatmul.mubr.f32.gmra.mrb[0].mxu0 %v557
  %v1438 = vpop.f32.mrb[0].mxu0
  %v1439 = vadd.f32 %v217, %v1438
  %v1440 = vpop.f32.mrb[0].mxu0
  %1441 = vmatprep.mubr.f32.mxu0 0.0
  %1442 = vmatmul.mubr.f32.gmra.mrb[0].mxu0 %v560
  %v1443 = vpop.f32.mrb[0].mxu0
  %v1444 = vadd.f32 %v217, %v1443
  %v1445 = vpop.f32.mrb[0].mxu0
  %1446 = vmatprep.mubr.f32.mxu0 0.0
  %1447 = vmatmul.mubr.f32.gmra.mrb[0].mxu0 %v563
  %v1448 = vpop.f32.mrb[0].mxu0
  %v1449 = vadd.f32 %v217, %v1448
  %v1450 = vpop.f32.mrb[0].mxu0
  %1451 = vmatprep.mubr.f32.mxu0 0.0
  %1452 = vmatmul.mubr.f32.gmra.mrb[0].mxu0 %v566
  %v1453 = vpop.f32.mrb[0].mxu0
  %v1454 = vadd.f32 %v217, %v1453
  %v1455 = vpop.f32.mrb[0].mxu0
  %1456 = vmatprep.mubr.f32.mxu0 0.0
  %1457 = vmatmul.mubr.f32.gmra.mrb[0].mxu0 %v569
  %v1458 = vpop.f32.mrb[0].mxu0
  %v1459 = vadd.f32 %v217, %v1458
  %v1460 = vpop.f32.mrb[0].mxu0
  %1461 = vmatprep.mubr.f32.mxu0 0.0
  %1462 = vmatmul.mubr.f32.gmra.mrb[0].mxu0 %v572
  %v1463 = vpop.f32.mrb[0].mxu0
  %v1464 = vadd.f32 %v217, %v1463
  %v1465 = vpop.f32.mrb[0].mxu0
  %1466 = vmatprep.mubr.f32.mxu0 0.0
  %1467 = vmatmul.mubr.f32.gmra.mrb[0].mxu0 %v575
  %v1468 = vpop.f32.mrb[0].mxu0
  %v1469 = vadd.f32 %v217, %v1468
  %v1470 = vpop.f32.mrb[0].mxu0
  %1471 = vmatprep.mubr.f32.mxu0 0.0
  %1472 = vmatmul.mubr.f32.gmra.mrb[0].mxu0 %v578
  %v1473 = vpop.f32.mrb[0].mxu0
  %v1474 = vadd.f32 %v217, %v1473
  %v1475 = vpop.f32.mrb[0].mxu0
  %1476 = vmatprep.mubr.f32.mxu0 0.0
  %1477 = vmatmul.mubr.f32.gmra.mrb[0].mxu0 %v581
  %v1478 = vpop.f32.mrb[0].mxu0
  %v1479 = vadd.f32 %v217, %v1478
  %v1480 = vpop.f32.mrb[0].mxu0
  %1481 = vmatprep.mubr.f32.mxu0 0.0
  %1482 = vmatmul.mubr.f32.gmra.mrb[0].mxu0 %v584
  %v1483 = vpop.f32.mrb[0].mxu0
  %v1484 = vadd.f32 %v217, %v1483
  %v1485 = vpop.f32.mrb[0].mxu0
  %1486 = vmatprep.mubr.f32.mxu0 0.0
  %1487 = vmatmul.mubr.f32.gmra.mrb[0].mxu0 %v587
  %v1488 = vpop.f32.mrb[0].mxu0
  %v1489 = vadd.f32 %v217, %v1488
  %v1490 = vpop.f32.mrb[0].mxu0
  %1491 = vmatprep.mubr.f32.mxu0 0.0
  %1492 = vmatmul.mubr.f32.gmra.mrb[0].mxu0 %v590
  %v1493 = vpop.f32.mrb[0].mxu0
  %v1494 = vadd.f32 %v217, %v1493
  %v1495 = vpop.f32.mrb[0].mxu0
  %1496 = vmatprep.mubr.f32.mxu0 0.0
  %1497 = vmatmul.mubr.f32.gmra.mrb[0].mxu0 %v593
  %v1498 = vpop.f32.mrb[0].mxu0
  %v1499 = vadd.f32 %v217, %v1498
  %v1500 = vpop.f32.mrb[0].mxu0
  %1501 = vmatprep.mubr.f32.mxu0 0.0
  %1502 = vmatmul.mubr.f32.gmra.mrb[0].mxu0 %v596
  %v1503 = vpop.f32.mrb[0].mxu0
  %v1504 = vadd.f32 %v217, %v1503
  %v1505 = vpop.f32.mrb[0].mxu0
  %1506 = vmatprep.mubr.f32.mxu0 0.0
  %1507 = vmatmul.mubr.f32.gmra.mrb[0].mxu0 %v599
  %v1508 = vpop.f32.mrb[0].mxu0
  %v1509 = vadd.f32 %v217, %v1508
  %v1510 = vpop.f32.mrb[0].mxu0
  %1511 = vmatprep.mubr.f32.mxu0 0.0
  %1512 = vmatmul.mubr.f32.gmra.mrb[0].mxu0 %v602
  %v1513 = vpop.f32.mrb[0].mxu0
  %v1514 = vadd.f32 %v217, %v1513
  %v1515 = vpop.f32.mrb[0].mxu0
  %1516 = vmatprep.mubr.f32.mxu0 0.0
  %1517 = vmatmul.mubr.f32.gmra.mrb[0].mxu0 %v605
  %v1518 = vpop.f32.mrb[0].mxu0
  %v1519 = vadd.f32 %v217, %v1518
  %v1520 = vpop.f32.mrb[0].mxu0
  %1521 = vmatprep.mubr.f32.mxu0 0.0
  %1522 = vmatmul.mubr.f32.gmra.mrb[0].mxu0 %v608
  %v1523 = vpop.f32.mrb[0].mxu0
  %v1524 = vadd.f32 %v217, %v1523
  %v1525 = vpop.f32.mrb[0].mxu0
  %1526 = vmatprep.mubr.f32.mxu0 0.0
  %1527 = vmatmul.mubr.f32.gmra.mrb[0].mxu0 %v611
  %v1528 = vpop.f32.mrb[0].mxu0
  %v1529 = vadd.f32 %v217, %v1528
  %v1530 = vpop.f32.mrb[0].mxu0
  %1531 = vmatprep.mubr.f32.mxu0 0.0
  %1532 = vmatmul.mubr.f32.gmra.mrb[0].mxu0 %v614
  %v1533 = vpop.f32.mrb[0].mxu0
  %v1534 = vadd.f32 %v217, %v1533
  %v1535 = vpop.f32.mrb[0].mxu0
  %1536 = vmatprep.mubr.f32.mxu0 0.0
  %1537 = vmatmul.mubr.f32.gmra.mrb[0].mxu0 %v617
  %v1538 = vpop.f32.mrb[0].mxu0
  %v1539 = vadd.f32 %v217, %v1538
  %v1540 = vpop.f32.mrb[0].mxu0
  %1541 = vmatprep.mubr.f32.mxu0 0.0
  %1542 = vmatmul.mubr.f32.gmra.mrb[0].mxu0 %v620
  %v1543 = vpop.f32.mrb[0].mxu0
  %v1544 = vadd.f32 %v217, %v1543
  %v1545 = vpop.f32.mrb[0].mxu0
  %1546 = vmatprep.mubr.f32.mxu0 0.0
  %1547 = vmatmul.mubr.f32.gmra.mrb[0].mxu0 %v623
  %v1548 = vpop.f32.mrb[0].mxu0
  %v1549 = vadd.f32 %v217, %v1548
  %v1550 = vpop.f32.mrb[0].mxu0
  %1551 = vmatprep.mubr.f32.mxu0 0.0
  %1552 = vmatmul.mubr.f32.gmra.mrb[0].mxu0 %v626
  %v1553 = vpop.f32.mrb[0].mxu0
  %v1554 = vadd.f32 %v217, %v1553
  %v1555 = vpop.f32.mrb[0].mxu0
  %1556 = vmatprep.mubr.f32.mxu0 0.0
  %1557 = vmatmul.mubr.f32.gmra.mrb[0].mxu0 %v629
  %v1558 = vpop.f32.mrb[0].mxu0
  %v1559 = vadd.f32 %v217, %v1558
  %v1560 = vpop.f32.mrb[0].mxu0
  %1561 = vmatprep.mubr.f32.mxu0 0.0
  %1562 = vmatmul.mubr.f32.gmra.mrb[0].mxu0 %v632
  %v1563 = vpop.f32.mrb[0].mxu0
  %v1564 = vadd.f32 %v217, %v1563
  %v1565 = vpop.f32.mrb[0].mxu0
  %1566 = vmatprep.mubr.f32.mxu0 0.0
  %1567 = vmatmul.mubr.f32.gmra.mrb[0].mxu0 %v635
  %v1568 = vpop.f32.mrb[0].mxu0
  %v1569 = vadd.f32 %v217, %v1568
  %v1570 = vpop.f32.mrb[0].mxu0
  %1571 = vmatprep.mubr.f32.mxu0 0.0
  %1572 = vmatmul.mubr.f32.gmra.mrb[0].mxu0 %v638
  %v1573 = vpop.f32.mrb[0].mxu0
  %v1574 = vadd.f32 %v217, %v1573
  %v1575 = vpop.f32.mrb[0].mxu0
  %1576 = vmatprep.mubr.f32.mxu0 0.0
  %1577 = vmatmul.mubr.f32.gmra.mrb[0].mxu0 %v641
  %v1578 = vpop.f32.mrb[0].mxu0
  %v1579 = vadd.f32 %v217, %v1578
  %v1580 = vpop.f32.mrb[0].mxu0
  %1581 = vmatprep.mubr.f32.mxu0 0.0
  %1582 = vmatmul.mubr.f32.gmra.mrb[0].mxu0 %v644
  %v1583 = vpop.f32.mrb[0].mxu0
  %v1584 = vadd.f32 %v217, %v1583
  %v1585 = vpop.f32.mrb[0].mxu0
  %1586 = vmatprep.mubr.f32.mxu0 0.0
  %1587 = vmatmul.mubr.f32.gmra.mrb[0].mxu0 %v647
  %v1588 = vpop.f32.mrb[0].mxu0
  %v1589 = vadd.f32 %v217, %v1588
  %v1590 = vpop.f32.mrb[0].mxu0
  %1591 = vmatprep.mubr.f32.mxu0 0.0
  %1592 = vmatmul.mubr.f32.gmra.mrb[0].mxu0 %v650
  %v1593 = vpop.f32.mrb[0].mxu0
  %v1594 = vadd.f32 %v217, %v1593
  %v1595 = vpop.f32.mrb[0].mxu0
  %1596 = vmatprep.mubr.f32.mxu0 0.0
  %1597 = vmatmul.mubr.f32.gmra.mrb[0].mxu0 %v653
  %v1598 = vpop.f32.mrb[0].mxu0
  %v1599 = vadd.f32 %v217, %v1598
  %v1600 = vpop.f32.mrb[0].mxu0
  %1601 = vmatprep.mubr.f32.mxu0 0.0
  %1602 = vmatmul.mubr.f32.gmra.mrb[0].mxu0 %v656
  %v1603 = vpop.f32.mrb[0].mxu0
  %v1604 = vadd.f32 %v217, %v1603
  %v1605 = vpop.f32.mrb[0].mxu0
  %1606 = vmatprep.mubr.f32.mxu0 0.0
  %1607 = vmatmul.mubr.f32.gmra.mrb[0].mxu0 %v659
  %v1608 = vpop.f32.mrb[0].mxu0
  %v1609 = vadd.f32 %v217, %v1608
  %v1610 = vpop.f32.mrb[0].mxu0
  %1611 = vmatprep.mubr.f32.mxu0 0.0
  %1612 = vmatmul.mubr.f32.gmra.mrb[0].mxu0 %v662
  %v1613 = vpop.f32.mrb[0].mxu0
  %v1614 = vadd.f32 %v217, %v1613
  %v1615 = vpop.f32.mrb[0].mxu0
  %1616 = vmatprep.mubr.f32.mxu0 0.0
  %1617 = vmatmul.mubr.f32.gmra.mrb[0].mxu0 %v665
  %v1618 = vpop.f32.mrb[0].mxu0
  %v1619 = vadd.f32 %v217, %v1618
  %v1620 = vpop.f32.mrb[0].mxu0
  %1621 = vmatprep.mubr.f32.mxu0 0.0
  %1622 = vmatmul.mubr.f32.gmra.mrb[0].mxu0 %v668
  %v1623 = vpop.f32.mrb[0].mxu0
  %v1624 = vadd.f32 %v217, %v1623
  %v1625 = vpop.f32.mrb[0].mxu0
  %1626 = vmatprep.mubr.f32.mxu0 0.0
  %1627 = vmatmul.mubr.f32.gmra.mrb[0].mxu0 %v671
  %v1628 = vpop.f32.mrb[0].mxu0
  %v1629 = vadd.f32 %v217, %v1628
  %v1630 = vpop.f32.mrb[0].mxu0
  %1631 = vmatprep.mubr.f32.mxu0 0.0
  %1632 = vmatmul.mubr.f32.gmra.mrb[0].mxu0 %v674
  %v1633 = vpop.f32.mrb[0].mxu0
  %v1634 = vadd.f32 %v217, %v1633
  %v1635 = vpop.f32.mrb[0].mxu0
  %1636 = vmatprep.mubr.f32.mxu0 0.0
  %1637 = vmatmul.mubr.f32.gmra.mrb[0].mxu0 %v677
  %v1638 = vpop.f32.mrb[0].mxu0
  %v1639 = vadd.f32 %v217, %v1638
  %v1640 = vpop.f32.mrb[0].mxu0
  %1641 = vmatprep.mubr.f32.mxu0 0.0
  %1642 = vmatmul.mubr.f32.gmra.mrb[0].mxu0 %v680
  %v1643 = vpop.f32.mrb[0].mxu0
  %v1644 = vadd.f32 %v217, %v1643
  %v1645 = vpop.f32.mrb[0].mxu0
  %1646 = vmatprep.mubr.f32.mxu0 0.0
  %1647 = vmatmul.mubr.f32.gmra.mrb[0].mxu0 %v683
  %v1648 = vpop.f32.mrb[0].mxu0
  %v1649 = vadd.f32 %v217, %v1648
  %v1650 = vpop.f32.mrb[0].mxu0
  %1651 = vmatprep.mubr.f32.mxu0 0.0
  %1652 = vmatmul.mubr.f32.gmra.mrb[0].mxu0 %v686
  %v1653 = vpop.f32.mrb[0].mxu0
  %v1654 = vadd.f32 %v217, %v1653
  %v1655 = vpop.f32.mrb[0].mxu0
  %1656 = vmatprep.mubr.f32.mxu0 0.0
  %1657 = vmatmul.mubr.f32.gmra.mrb[0].mxu0 %v689
  %v1658 = vpop.f32.mrb[0].mxu0
  %v1659 = vadd.f32 %v217, %v1658
  %v1660 = vpop.f32.mrb[0].mxu0
  %1661 = vmatprep.mubr.f32.mxu0 0.0
  %1662 = vmatmul.mubr.f32.gmra.mrb[0].mxu0 %v692
  %v1663 = vpop.f32.mrb[0].mxu0
  %v1664 = vadd.f32 %v217, %v1663
  %v1665 = vpop.f32.mrb[0].mxu0
  %1666 = vmatprep.mubr.f32.mxu0 0.0
  %1667 = vmatmul.mubr.f32.gmra.mrb[0].mxu0 %v695
  %v1668 = vpop.f32.mrb[0].mxu0
  %v1669 = vadd.f32 %v217, %v1668
  %v1670 = vpop.f32.mrb[0].mxu0
  %1671 = vmatprep.mubr.f32.mxu0 0.0
  %1672 = vmatmul.mubr.f32.gmra.mrb[0].mxu0 %v698
  %v1673 = vpop.f32.mrb[0].mxu0
  %v1674 = vadd.f32 %v217, %v1673
  %v1675 = vpop.f32.mrb[0].mxu0
  %1676 = vmatprep.mubr.f32.mxu0 0.0
  %1677 = vmatmul.mubr.f32.gmra.mrb[0].mxu0 %v701
  %v1678 = vpop.f32.mrb[0].mxu0
  %v1679 = vadd.f32 %v217, %v1678
  %v1680 = vpop.f32.mrb[0].mxu0
  %1681 = vmatprep.mubr.f32.mxu0 0.0
  %1682 = vmatmul.mubr.f32.gmra.mrb[0].mxu0 %v704
  %v1683 = vpop.f32.mrb[0].mxu0
  %v1684 = vadd.f32 %v217, %v1683
  %v1685 = vpop.f32.mrb[0].mxu0
  %1686 = vmatprep.mubr.f32.mxu0 0.0
  %1687 = vmatmul.mubr.f32.gmra.mrb[0].mxu0 %v707
  %v1688 = vpop.f32.mrb[0].mxu0
  %v1689 = vadd.f32 %v217, %v1688
  %v1690 = vpop.f32.mrb[0].mxu0
  %1691 = vmatprep.mubr.f32.mxu0 0.0
  %1692 = vmatmul.mubr.f32.gmra.mrb[0].mxu0 %v710
  %v1693 = vpop.f32.mrb[0].mxu0
  %v1694 = vadd.f32 %v217, %v1693
  %v1695 = vpop.f32.mrb[0].mxu0
  %1696 = vmatprep.mubr.f32.mxu0 0.0
  %1697 = vmatmul.mubr.f32.gmra.mrb[0].mxu0 %v713
  %v1698 = vpop.f32.mrb[0].mxu0
  %v1699 = vadd.f32 %v217, %v1698
  %v1700 = vpop.f32.mrb[0].mxu0
  %1701 = vmatprep.mubr.f32.mxu0 0.0
  %1702 = vmatmul.mubr.f32.gmra.mrb[0].mxu0 %v716
  %v1703 = vpop.f32.mrb[0].mxu0
  %v1704 = vadd.f32 %v217, %v1703
  %v1705 = vpop.f32.mrb[0].mxu0
  %1706 = vmatprep.mubr.f32.mxu0 0.0
  %1707 = vmatmul.mubr.f32.gmra.mrb[0].mxu0 %v719
  %v1708 = vpop.f32.mrb[0].mxu0
  %v1709 = vadd.f32 %v217, %v1708
  %v1710 = vpop.f32.mrb[0].mxu0
  %1711 = vmatprep.mubr.f32.mxu0 0.0
  %1712 = vmatmul.mubr.f32.gmra.mrb[0].mxu0 %v722
  %v1713 = vpop.f32.mrb[0].mxu0
  %v1714 = vadd.f32 %v217, %v1713
  %v1715 = vpop.f32.mrb[0].mxu0
  %1716 = vmatprep.mubr.f32.mxu0 0.0
  %1717 = vmatmul.mubr.f32.gmra.mrb[0].mxu0 %v725
  %v1718 = vpop.f32.mrb[0].mxu0
  %v1719 = vadd.f32 %v217, %v1718
  %v1720 = vpop.f32.mrb[0].mxu0
  %1721 = vmatprep.mubr.f32.mxu0 0.0
  %1722 = vmatmul.mubr.f32.gmra.mrb[0].mxu0 %v728
  %v1723 = vpop.f32.mrb[0].mxu0
  %v1724 = vadd.f32 %v217, %v1723
  %v1725 = vpop.f32.mrb[0].mxu0
  %1726 = vmatprep.mubr.f32.mxu0 0.0
  %1727 = vmatmul.mubr.f32.gmra.mrb[0].mxu0 %v731
  %v1728 = vpop.f32.mrb[0].mxu0
  %v1729 = vadd.f32 %v217, %v1728
  %v1730 = vpop.f32.mrb[0].mxu0
  %1731 = vmatprep.mubr.f32.mxu0 0.0
  %1732 = vmatmul.mubr.f32.gmra.mrb[0].mxu0 %v734
  %v1733 = vpop.f32.mrb[0].mxu0
  %v1734 = vadd.f32 %v217, %v1733
  %v1735 = vpop.f32.mrb[0].mxu0
  %1736 = vmatprep.mubr.f32.mxu0 0.0
  %1737 = vmatmul.mubr.f32.gmra.mrb[0].mxu0 %v737
  %v1738 = vpop.f32.mrb[0].mxu0
  %v1739 = vadd.f32 %v217, %v1738
  %v1740 = vpop.f32.mrb[0].mxu0
  %1741 = vmatprep.mubr.f32.mxu0 0.0
  %1742 = vmatmul.mubr.f32.gmra.mrb[0].mxu0 %v740
  %v1743 = vpop.f32.mrb[0].mxu0
  %v1744 = vadd.f32 %v217, %v1743
  %v1745 = vpop.f32.mrb[0].mxu0
  %1746 = vmatprep.mubr.f32.mxu0 0.0
  %1747 = vmatmul.mubr.f32.gmra.mrb[0].mxu0 %v743
  %v1748 = vpop.f32.mrb[0].mxu0
  %v1749 = vadd.f32 %v217, %v1748
  %v1750 = vpop.f32.mrb[0].mxu0
  %1751 = vmatprep.mubr.f32.mxu0 0.0
  %1752 = vmatmul.mubr.f32.gmra.mrb[0].mxu0 %v746
  %v1753 = vpop.f32.mrb[0].mxu0
  %v1754 = vadd.f32 %v217, %v1753
  %v1755 = vpop.f32.mrb[0].mxu0
  %1756 = vmatprep.mubr.f32.mxu0 0.0
  %1757 = vmatmul.mubr.f32.gmra.mrb[0].mxu0 %v749
  %v1758 = vpop.f32.mrb[0].mxu0
  %v1759 = vadd.f32 %v217, %v1758
  %v1760 = vpop.f32.mrb[0].mxu0
  %1761 = vmatprep.mubr.f32.mxu0 0.0
  %1762 = vmatmul.mubr.f32.gmra.mrb[0].mxu0 %v752
  %v1763 = vpop.f32.mrb[0].mxu0
  %v1764 = vadd.f32 %v217, %v1763
  %v1765 = vpop.f32.mrb[0].mxu0
  %1766 = vmatprep.mubr.f32.mxu0 0.0
  %1767 = vmatmul.mubr.f32.gmra.mrb[0].mxu0 %v755
  %v1768 = vpop.f32.mrb[0].mxu0
  %v1769 = vadd.f32 %v217, %v1768
  %v1770 = vpop.f32.mrb[0].mxu0
  %1771 = vmatprep.mubr.f32.mxu0 0.0
  %1772 = vmatmul.mubr.f32.gmra.mrb[0].mxu0 %v758
  %v1773 = vpop.f32.mrb[0].mxu0
  %v1774 = vadd.f32 %v217, %v1773
  %v1775 = vpop.f32.mrb[0].mxu0
  %1776 = vmatprep.mubr.f32.mxu0 0.0
  %1777 = vmatmul.mubr.f32.gmra.mrb[0].mxu0 %v761
  %v1778 = vpop.f32.mrb[0].mxu0
  %v1779 = vadd.f32 %v217, %v1778
  %v1780 = vpop.f32.mrb[0].mxu0
  %1781 = vmatprep.mubr.f32.mxu0 0.0
  %1782 = vmatmul.mubr.f32.gmra.mrb[0].mxu0 %v764
  %v1783 = vpop.f32.mrb[0].mxu0
  %v1784 = vadd.f32 %v217, %v1783
  %v1785 = vpop.f32.mrb[0].mxu0
  %1786 = vmatprep.mubr.f32.mxu0 0.0
  %1787 = vmatmul.mubr.f32.gmra.mrb[0].mxu0 %v767
  %v1788 = vpop.f32.mrb[0].mxu0
  %v1789 = vadd.f32 %v217, %v1788
  %v1790 = vpop.f32.mrb[0].mxu0
  %1791 = vmatprep.mubr.f32.mxu0 0.0
  %1792 = vmatmul.mubr.f32.gmra.mrb[0].mxu0 %v770
  %v1793 = vpop.f32.mrb[0].mxu0
  %v1794 = vadd.f32 %v217, %v1793
  %v1795 = vpop.f32.mrb[0].mxu0
  %1796 = vmatprep.mubr.f32.mxu0 0.0
  %1797 = vmatmul.mubr.f32.gmra.mrb[0].mxu0 %v773
  %v1798 = vpop.f32.mrb[0].mxu0
  %v1799 = vadd.f32 %v217, %v1798
  %v1800 = vpop.f32.mrb[0].mxu0
  %1801 = vmatprep.mubr.f32.mxu0 0.0
  %1802 = vmatmul.mubr.f32.gmra.mrb[0].mxu0 %v776
  %v1803 = vpop.f32.mrb[0].mxu0
  %v1804 = vadd.f32 %v217, %v1803
  %v1805 = vpop.f32.mrb[0].mxu0
  %1806 = vmatprep.mubr.f32.mxu0 0.0
  %1807 = vmatmul.mubr.f32.gmra.mrb[0].mxu0 %v779
  %v1808 = vpop.f32.mrb[0].mxu0
  %v1809 = vadd.f32 %v217, %v1808
  %v1810 = vpop.f32.mrb[0].mxu0
  %1811 = vmatprep.mubr.f32.mxu0 0.0
  %1812 = vmatmul.mubr.f32.gmra.mrb[0].mxu0 %v782
  %v1813 = vpop.f32.mrb[0].mxu0
  %v1814 = vadd.f32 %v217, %v1813
  %v1815 = vpop.f32.mrb[0].mxu0
  %1816 = vmatprep.mubr.f32.mxu0 0.0
  %1817 = vmatmul.mubr.f32.gmra.mrb[0].mxu0 %v785
  %v1818 = vpop.f32.mrb[0].mxu0
  %v1819 = vadd.f32 %v217, %v1818
  %v1820 = vpop.f32.mrb[0].mxu0
  %1821 = vmatprep.mubr.f32.mxu0 0.0
  %1822 = vmatmul.mubr.f32.gmra.mrb[0].mxu0 %v788
  %v1823 = vpop.f32.mrb[0].mxu0
  %v1824 = vadd.f32 %v217, %v1823
  %v1825 = vpop.f32.mrb[0].mxu0
  %1826 = vmatprep.mubr.f32.mxu0 0.0
  %1827 = vmatmul.mubr.f32.gmra.mrb[0].mxu0 %v791
  %v1828 = vpop.f32.mrb[0].mxu0
  %v1829 = vadd.f32 %v217, %v1828
  %v1830 = vpop.f32.mrb[0].mxu0
  %1831 = vmatprep.mubr.f32.mxu0 0.0
  %1832 = vmatmul.mubr.f32.gmra.mrb[0].mxu0 %v794
  %v1833 = vpop.f32.mrb[0].mxu0
  %v1834 = vadd.f32 %v217, %v1833
  %v1835 = vpop.f32.mrb[0].mxu0
  %1836 = vmatprep.mubr.f32.mxu0 0.0
  %1837 = vmatmul.mubr.f32.gmra.mrb[0].mxu0 %v797
  %v1838 = vpop.f32.mrb[0].mxu0
  %v1839 = vadd.f32 %v217, %v1838
  %v1840 = vpop.f32.mrb[0].mxu0
  %1841 = vmatprep.mubr.f32.mxu0 0.0
  %1842 = vmatmul.mubr.f32.gmra.mrb[0].mxu0 %v800
  %v1843 = vpop.f32.mrb[0].mxu0
  %v1844 = vadd.f32 %v217, %v1843
  %v1845 = vpop.f32.mrb[0].mxu0
  %1846 = vmatprep.mubr.f32.mxu0 0.0
  %1847 = vmatmul.mubr.f32.gmra.mrb[0].mxu0 %v803
  %v1848 = vpop.f32.mrb[0].mxu0
  %v1849 = vadd.f32 %v217, %v1848
  %v1850 = vpop.f32.mrb[0].mxu0
  %1851 = vmatprep.mubr.f32.mxu0 0.0
  %1852 = vmatmul.mubr.f32.gmra.mrb[0].mxu0 %v806
  %v1853 = vpop.f32.mrb[0].mxu0
  %v1854 = vadd.f32 %v217, %v1853
  %v1855 = vpop.f32.mrb[0].mxu0
  %1856 = vdwg.mxu0
  %v1857 = vmax.f32 %v879, 0.0
  %v1858 = vmax.f32 %v884, 0.0
  %v1859 = vmax.f32 %v889, 0.0
  %v1860 = vmax.f32 %v894, 0.0
  %v1861 = vmax.f32 %v899, 0.0
  %v1862 = vmax.f32 %v904, 0.0
  %v1863 = vmax.f32 %v909, 0.0
  %v1864 = vmax.f32 %v914, 0.0
  %v1865 = vmax.f32 %v919, 0.0
  %v1866 = vmax.f32 %v924, 0.0
  %v1867 = vmax.f32 %v929, 0.0
  %v1868 = vmax.f32 %v934, 0.0
  %v1869 = vmax.f32 %v939, 0.0
  %v1870 = vmax.f32 %v944, 0.0
  %v1871 = vmax.f32 %v949, 0.0
  %v1872 = vmax.f32 %v954, 0.0
  %v1873 = vmax.f32 %v959, 0.0
  %v1874 = vmax.f32 %v964, 0.0
  %v1875 = vmax.f32 %v969, 0.0
  %v1876 = vmax.f32 %v974, 0.0
  %v1877 = vmax.f32 %v979, 0.0
  %v1878 = vmax.f32 %v984, 0.0
  %v1879 = vmax.f32 %v989, 0.0
  %v1880 = vmax.f32 %v994, 0.0
  %v1881 = vmax.f32 %v999, 0.0
  %v1882 = vmax.f32 %v1004, 0.0
  %v1883 = vmax.f32 %v1009, 0.0
  %v1884 = vmax.f32 %v1014, 0.0
  %v1885 = vmax.f32 %v1019, 0.0
  %v1886 = vmax.f32 %v1024, 0.0
  %v1887 = vmax.f32 %v1029, 0.0
  %v1888 = vmax.f32 %v1034, 0.0
  %v1889 = vmax.f32 %v1039, 0.0
  %v1890 = vmax.f32 %v1044, 0.0
  %v1891 = vmax.f32 %v1049, 0.0
  %v1892 = vmax.f32 %v1054, 0.0
  %v1893 = vmax.f32 %v1059, 0.0
  %v1894 = vmax.f32 %v1064, 0.0
  %v1895 = vmax.f32 %v1069, 0.0
  %v1896 = vmax.f32 %v1074, 0.0
  %v1897 = vmax.f32 %v1079, 0.0
  %v1898 = vmax.f32 %v1084, 0.0
  %v1899 = vmax.f32 %v1089, 0.0
  %v1900 = vmax.f32 %v1094, 0.0
  %v1901 = vmax.f32 %v1099, 0.0
  %v1902 = vmax.f32 %v1104, 0.0
  %v1903 = vmax.f32 %v1109, 0.0
  %v1904 = vmax.f32 %v1114, 0.0
  %v1905 = vmax.f32 %v1119, 0.0
  %v1906 = vmax.f32 %v1124, 0.0
  %v1907 = vmax.f32 %v1129, 0.0
  %v1908 = vmax.f32 %v1134, 0.0
  %v1909 = vmax.f32 %v1139, 0.0
  %v1910 = vmax.f32 %v1144, 0.0
  %v1911 = vmax.f32 %v1149, 0.0
  %v1912 = vmax.f32 %v1154, 0.0
  %v1913 = vmax.f32 %v1159, 0.0
  %v1914 = vmax.f32 %v1164, 0.0
  %v1915 = vmax.f32 %v1169, 0.0
  %v1916 = vmax.f32 %v1174, 0.0
  %v1917 = vmax.f32 %v1179, 0.0
  %v1918 = vmax.f32 %v1184, 0.0
  %v1919 = vmax.f32 %v1189, 0.0
  %v1920 = vmax.f32 %v1194, 0.0
  %v1921 = vmax.f32 %v1199, 0.0
  %v1922 = vmax.f32 %v1204, 0.0
  %v1923 = vmax.f32 %v1209, 0.0
  %v1924 = vmax.f32 %v1214, 0.0
  %v1925 = vmax.f32 %v1219, 0.0
  %v1926 = vmax.f32 %v1224, 0.0
  %v1927 = vmax.f32 %v1229, 0.0
  %v1928 = vmax.f32 %v1234, 0.0
  %v1929 = vmax.f32 %v1239, 0.0
  %v1930 = vmax.f32 %v1244, 0.0
  %v1931 = vmax.f32 %v1249, 0.0
  %v1932 = vmax.f32 %v1254, 0.0
  %v1933 = vmax.f32 %v1259, 0.0
  %v1934 = vmax.f32 %v1264, 0.0
  %v1935 = vmax.f32 %v1269, 0.0
  %v1936 = vmax.f32 %v1274, 0.0
  %v1937 = vmax.f32 %v1279, 0.0
  %v1938 = vmax.f32 %v1284, 0.0
  %v1939 = vmax.f32 %v1289, 0.0
  %v1940 = vmax.f32 %v1294, 0.0
  %v1941 = vmax.f32 %v1299, 0.0
  %v1942 = vmax.f32 %v1304, 0.0
  %v1943 = vmax.f32 %v1309, 0.0
  %v1944 = vmax.f32 %v1314, 0.0
  %v1945 = vmax.f32 %v1319, 0.0
  %v1946 = vmax.f32 %v1324, 0.0
  %v1947 = vmax.f32 %v1329, 0.0
  %v1948 = vmax.f32 %v1334, 0.0
  %v1949 = vmax.f32 %v1339, 0.0
  %v1950 = vmax.f32 %v1344, 0.0
  %v1951 = vmax.f32 %v1349, 0.0
  %v1952 = vmax.f32 %v1354, 0.0
  %v1953 = vmax.f32 %v1359, 0.0
  %v1954 = vmax.f32 %v1364, 0.0
  %v1955 = vmax.f32 %v1369, 0.0
  %v1956 = vmax.f32 %v1374, 0.0
  %v1957 = vmax.f32 %v1379, 0.0
  %v1958 = vmax.f32 %v1384, 0.0
  %v1959 = vmax.f32 %v1389, 0.0
  %v1960 = vmax.f32 %v1394, 0.0
  %v1961 = vmax.f32 %v1399, 0.0
  %v1962 = vmax.f32 %v1404, 0.0
  %v1963 = vmax.f32 %v1409, 0.0
  %v1964 = vmax.f32 %v1414, 0.0
  %v1965 = vmax.f32 %v1419, 0.0
  %v1966 = vmax.f32 %v1424, 0.0
  %v1967 = vmax.f32 %v1429, 0.0
  %v1968 = vmax.f32 %v1434, 0.0
  %v1969 = vmax.f32 %v1439, 0.0
  %v1970 = vmax.f32 %v1444, 0.0
  %v1971 = vmax.f32 %v1449, 0.0
  %v1972 = vmax.f32 %v1454, 0.0
  %v1973 = vmax.f32 %v1459, 0.0
  %v1974 = vmax.f32 %v1464, 0.0
  %v1975 = vmax.f32 %v1469, 0.0
  %v1976 = vmax.f32 %v1474, 0.0
  %v1977 = vmax.f32 %v1479, 0.0
  %v1978 = vmax.f32 %v1484, 0.0
  %v1979 = vmax.f32 %v1489, 0.0
  %v1980 = vmax.f32 %v1494, 0.0
  %v1981 = vmax.f32 %v1499, 0.0
  %v1982 = vmax.f32 %v1504, 0.0
  %v1983 = vmax.f32 %v1509, 0.0
  %v1984 = vmax.f32 %v1514, 0.0
  %v1985 = vmax.f32 %v1519, 0.0
  %v1986 = vmax.f32 %v1524, 0.0
  %v1987 = vmax.f32 %v1529, 0.0
  %v1988 = vmax.f32 %v1534, 0.0
  %v1989 = vmax.f32 %v1539, 0.0
  %v1990 = vmax.f32 %v1544, 0.0
  %v1991 = vmax.f32 %v1549, 0.0
  %v1992 = vmax.f32 %v1554, 0.0
  %v1993 = vmax.f32 %v1559, 0.0
  %v1994 = vmax.f32 %v1564, 0.0
  %v1995 = vmax.f32 %v1569, 0.0
  %v1996 = vmax.f32 %v1574, 0.0
  %v1997 = vmax.f32 %v1579, 0.0
  %v1998 = vmax.f32 %v1584, 0.0
  %v1999 = vmax.f32 %v1589, 0.0
  %v2000 = vmax.f32 %v1594, 0.0
  %v2001 = vmax.f32 %v1599, 0.0
  %v2002 = vmax.f32 %v1604, 0.0
  %v2003 = vmax.f32 %v1609, 0.0
  %v2004 = vmax.f32 %v1614, 0.0
  %v2005 = vmax.f32 %v1619, 0.0
  %v2006 = vmax.f32 %v1624, 0.0
  %v2007 = vmax.f32 %v1629, 0.0
  %v2008 = vmax.f32 %v1634, 0.0
  %v2009 = vmax.f32 %v1639, 0.0
  %v2010 = vmax.f32 %v1644, 0.0
  %v2011 = vmax.f32 %v1649, 0.0
  %v2012 = vmax.f32 %v1654, 0.0
  %v2013 = vmax.f32 %v1659, 0.0
  %v2014 = vmax.f32 %v1664, 0.0
  %v2015 = vmax.f32 %v1669, 0.0
  %v2016 = vmax.f32 %v1674, 0.0
  %v2017 = vmax.f32 %v1679, 0.0
  %v2018 = vmax.f32 %v1684, 0.0
  %v2019 = vmax.f32 %v1689, 0.0
  %v2020 = vmax.f32 %v1694, 0.0
  %v2021 = vmax.f32 %v1699, 0.0
  %v2022 = vmax.f32 %v1704, 0.0
  %v2023 = vmax.f32 %v1709, 0.0
  %v2024 = vmax.f32 %v1714, 0.0
  %v2025 = vmax.f32 %v1719, 0.0
  %v2026 = vmax.f32 %v1724, 0.0
  %v2027 = vmax.f32 %v1729, 0.0
  %v2028 = vmax.f32 %v1734, 0.0
  %v2029 = vmax.f32 %v1739, 0.0
  %v2030 = vmax.f32 %v1744, 0.0
  %v2031 = vmax.f32 %v1749, 0.0
  %v2032 = vmax.f32 %v1754, 0.0
  %v2033 = vmax.f32 %v1759, 0.0
  %v2034 = vmax.f32 %v1764, 0.0
  %v2035 = vmax.f32 %v1769, 0.0
  %v2036 = vmax.f32 %v1774, 0.0
  %v2037 = vmax.f32 %v1779, 0.0
  %v2038 = vmax.f32 %v1784, 0.0
  %v2039 = vmax.f32 %v1789, 0.0
  %v2040 = vmax.f32 %v1794, 0.0
  %v2041 = vmax.f32 %v1799, 0.0
  %v2042 = vmax.f32 %v1804, 0.0
  %v2043 = vmax.f32 %v1809, 0.0
  %v2044 = vmax.f32 %v1814, 0.0
  %v2045 = vmax.f32 %v1819, 0.0
  %v2046 = vmax.f32 %v1824, 0.0
  %v2047 = vmax.f32 %v1829, 0.0
  %v2048 = vmax.f32 %v1834, 0.0
  %v2049 = vmax.f32 %v1839, 0.0
  %v2050 = vmax.f32 %v1844, 0.0
  %v2051 = vmax.f32 %v1849, 0.0
  %v2052 = vmax.f32 %v1854, 0.0
  %v2053 = vmax.f32 %v1857, %v1906
  %v2054 = vmax.f32 %v1858, %v1907
  %v2055 = vmax.f32 %v1859, %v1908
  %v2056 = vmax.f32 %v1860, %v1909
  %v2057 = vmax.f32 %v1861, %v1910
  %v2058 = vmax.f32 %v1862, %v1911
  %v2059 = vmax.f32 %v1863, %v1912
  %v2060 = vmax.f32 %v1864, %v1913
  %v2061 = vmax.f32 %v1865, %v1914
  %v2062 = vmax.f32 %v1866, %v1915
  %v2063 = vmax.f32 %v1867, %v1916
  %v2064 = vmax.f32 %v1868, %v1917
  %v2065 = vmax.f32 %v1869, %v1918
  %v2066 = vmax.f32 %v1870, %v1919
  %v2067 = vmax.f32 %v1871, %v1920
  %v2068 = vmax.f32 %v1872, %v1921
  %v2069 = vmax.f32 %v1873, %v1922
  %v2070 = vmax.f32 %v1874, %v1923
  %v2071 = vmax.f32 %v1875, %v1924
  %v2072 = vmax.f32 %v1876, %v1925
  %v2073 = vmax.f32 %v1877, %v1926
  %v2074 = vmax.f32 %v1878, %v1927
  %v2075 = vmax.f32 %v1879, %v1928
  %v2076 = vmax.f32 %v1880, %v1929
  %v2077 = vmax.f32 %v1881, %v1930
  %v2078 = vmax.f32 %v1882, %v1931
  %v2079 = vmax.f32 %v1883, %v1932
  %v2080 = vmax.f32 %v1884, %v1933
  %v2081 = vmax.f32 %v1885, %v1934
  %v2082 = vmax.f32 %v1886, %v1935
  %v2083 = vmax.f32 %v1887, %v1936
  %v2084 = vmax.f32 %v1888, %v1937
  %v2085 = vmax.f32 %v1889, %v1938
  %v2086 = vmax.f32 %v1890, %v1939
  %v2087 = vmax.f32 %v1891, %v1940
  %v2088 = vmax.f32 %v1892, %v1941
  %v2089 = vmax.f32 %v1893, %v1942
  %v2090 = vmax.f32 %v1894, %v1943
  %v2091 = vmax.f32 %v1895, %v1944
  %v2092 = vmax.f32 %v1896, %v1945
  %v2093 = vmax.f32 %v1897, %v1946
  %v2094 = vmax.f32 %v1898, %v1947
  %v2095 = vmax.f32 %v1899, %v1948
  %v2096 = vmax.f32 %v1900, %v1949
  %v2097 = vmax.f32 %v1901, %v1950
  %v2098 = vmax.f32 %v1902, %v1951
  %v2099 = vmax.f32 %v1903, %v1952
  %v2100 = vmax.f32 %v1904, %v1953
  %v2101 = vmax.f32 %v1905, %v1954
  %v2102 = vmax.f32 %v2053, %v1955
  %v2103 = vmax.f32 %v2054, %v1956
  %v2104 = vmax.f32 %v2055, %v1957
  %v2105 = vmax.f32 %v2056, %v1958
  %v2106 = vmax.f32 %v2057, %v1959
  %v2107 = vmax.f32 %v2058, %v1960
  %v2108 = vmax.f32 %v2059, %v1961
  %v2109 = vmax.f32 %v2060, %v1962
  %v2110 = vmax.f32 %v2061, %v1963
  %v2111 = vmax.f32 %v2062, %v1964
  %v2112 = vmax.f32 %v2063, %v1965
  %v2113 = vmax.f32 %v2064, %v1966
  %v2114 = vmax.f32 %v2065, %v1967
  %v2115 = vmax.f32 %v2066, %v1968
  %v2116 = vmax.f32 %v2067, %v1969
  %v2117 = vmax.f32 %v2068, %v1970
  %v2118 = vmax.f32 %v2069, %v1971
  %v2119 = vmax.f32 %v2070, %v1972
  %v2120 = vmax.f32 %v2071, %v1973
  %v2121 = vmax.f32 %v2072, %v1974
  %v2122 = vmax.f32 %v2073, %v1975
  %v2123 = vmax.f32 %v2074, %v1976
  %v2124 = vmax.f32 %v2075, %v1977
  %v2125 = vmax.f32 %v2076, %v1978
  %v2126 = vmax.f32 %v2077, %v1979
  %v2127 = vmax.f32 %v2078, %v1980
  %v2128 = vmax.f32 %v2079, %v1981
  %v2129 = vmax.f32 %v2080, %v1982
  %v2130 = vmax.f32 %v2081, %v1983
  %v2131 = vmax.f32 %v2082, %v1984
  %v2132 = vmax.f32 %v2083, %v1985
  %v2133 = vmax.f32 %v2084, %v1986
  %v2134 = vmax.f32 %v2085, %v1987
  %v2135 = vmax.f32 %v2086, %v1988
  %v2136 = vmax.f32 %v2087, %v1989
  %v2137 = vmax.f32 %v2088, %v1990
  %v2138 = vmax.f32 %v2089, %v1991
  %v2139 = vmax.f32 %v2090, %v1992
  %v2140 = vmax.f32 %v2091, %v1993
  %v2141 = vmax.f32 %v2092, %v1994
  %v2142 = vmax.f32 %v2093, %v1995
  %v2143 = vmax.f32 %v2094, %v1996
  %v2144 = vmax.f32 %v2095, %v1997
  %v2145 = vmax.f32 %v2096, %v1998
  %v2146 = vmax.f32 %v2097, %v1999
  %v2147 = vmax.f32 %v2098, %v2000
  %v2148 = vmax.f32 %v2099, %v2001
  %v2149 = vmax.f32 %v2100, %v2002
  %v2150 = vmax.f32 %v2101, %v2003
  %v2151 = vmax.f32 %v2102, %v2004
  %v2152 = vmax.f32 %v2103, %v2005
  %v2153 = vmax.f32 %v2104, %v2006
  %v2154 = vmax.f32 %v2105, %v2007
  %v2155 = vmax.f32 %v2106, %v2008
  %v2156 = vmax.f32 %v2107, %v2009
  %v2157 = vmax.f32 %v2108, %v2010
  %v2158 = vmax.f32 %v2109, %v2011
  %v2159 = vmax.f32 %v2110, %v2012
  %v2160 = vmax.f32 %v2111, %v2013
  %v2161 = vmax.f32 %v2112, %v2014
  %v2162 = vmax.f32 %v2113, %v2015
  %v2163 = vmax.f32 %v2114, %v2016
  %v2164 = vmax.f32 %v2115, %v2017
  %v2165 = vmax.f32 %v2116, %v2018
  %v2166 = vmax.f32 %v2117, %v2019
  %v2167 = vmax.f32 %v2118, %v2020
  %v2168 = vmax.f32 %v2119, %v2021
  %v2169 = vmax.f32 %v2120, %v2022
  %v2170 = vmax.f32 %v2121, %v2023
  %v2171 = vmax.f32 %v2122, %v2024
  %v2172 = vmax.f32 %v2123, %v2025
  %v2173 = vmax.f32 %v2124, %v2026
  %v2174 = vmax.f32 %v2125, %v2027
  %v2175 = vmax.f32 %v2126, %v2028
  %v2176 = vmax.f32 %v2127, %v2029
  %v2177 = vmax.f32 %v2128, %v2030
  %v2178 = vmax.f32 %v2129, %v2031
  %v2179 = vmax.f32 %v2130, %v2032
  %v2180 = vmax.f32 %v2131, %v2033
  %v2181 = vmax.f32 %v2132, %v2034
  %v2182 = vmax.f32 %v2133, %v2035
  %v2183 = vmax.f32 %v2134, %v2036
  %v2184 = vmax.f32 %v2135, %v2037
  %v2185 = vmax.f32 %v2136, %v2038
  %v2186 = vmax.f32 %v2137, %v2039
  %v2187 = vmax.f32 %v2138, %v2040
  %v2188 = vmax.f32 %v2139, %v2041
  %v2189 = vmax.f32 %v2140, %v2042
  %v2190 = vmax.f32 %v2141, %v2043
  %v2191 = vmax.f32 %v2142, %v2044
  %v2192 = vmax.f32 %v2143, %v2045
  %v2193 = vmax.f32 %v2144, %v2046
  %v2194 = vmax.f32 %v2145, %v2047
  %v2195 = vmax.f32 %v2146, %v2048
  %v2196 = vmax.f32 %v2147, %v2049
  %v2197 = vmax.f32 %v2148, %v2050
  %v2198 = vmax.f32 %v2149, %v2051
  %v2199 = vmax.f32 %v2150, %v2052
  %vm2200 = vcmask 523264
  %2201 = vst.msk [vmem:[%s3] sm:$0xff] %vm2200, %v2151
  %2202 = vst.msk [vmem:[%s3 + $0x8] sm:$0xff] %vm2200, %v2152
  %2203 = vst.msk [vmem:[%s3 + $0x10] sm:$0xff] %vm2200, %v2153
  %2204 = vst.msk [vmem:[%s3 + $0x18] sm:$0xff] %vm2200, %v2154
  %2205 = vst.msk [vmem:[%s3 + $0x20] sm:$0xff] %vm2200, %v2155
  %2206 = vst.msk [vmem:[%s3 + $0x28] sm:$0xff] %vm2200, %v2156
  %2207 = vst.msk [vmem:[%s3 + $0x30] sm:$0xff] %vm2200, %v2157
  %2208 = vst.msk [vmem:[%s3 + $0x38] sm:$0xff] %vm2200, %v2158
  %2209 = vst.msk [vmem:[%s3 + $0x40] sm:$0xff] %vm2200, %v2159
  %2210 = vst.msk [vmem:[%s3 + $0x48] sm:$0xff] %vm2200, %v2160
  %2211 = vst.msk [vmem:[%s3 + $0x50] sm:$0xff] %vm2200, %v2161
  %2212 = vst.msk [vmem:[%s3 + $0x58] sm:$0xff] %vm2200, %v2162
  %2213 = vst.msk [vmem:[%s3 + $0x60] sm:$0xff] %vm2200, %v2163
  %2214 = vst.msk [vmem:[%s3 + $0x68] sm:$0xff] %vm2200, %v2164
  %2215 = vst.msk [vmem:[%s3 + $0x70] sm:$0xff] %vm2200, %v2165
  %2216 = vst.msk [vmem:[%s3 + $0x78] sm:$0xff] %vm2200, %v2166
  %2217 = vst.msk [vmem:[%s3 + $0x80] sm:$0xff] %vm2200, %v2167
  %2218 = vst.msk [vmem:[%s3 + $0x88] sm:$0xff] %vm2200, %v2168
  %2219 = vst.msk [vmem:[%s3 + $0x90] sm:$0xff] %vm2200, %v2169
  %2220 = vst.msk [vmem:[%s3 + $0x98] sm:$0xff] %vm2200, %v2170
  %2221 = vst.msk [vmem:[%s3 + $0xa0] sm:$0xff] %vm2200, %v2171
  %2222 = vst.msk [vmem:[%s3 + $0xa8] sm:$0xff] %vm2200, %v2172
  %2223 = vst.msk [vmem:[%s3 + $0xb0] sm:$0xff] %vm2200, %v2173
  %2224 = vst.msk [vmem:[%s3 + $0xb8] sm:$0xff] %vm2200, %v2174
  %2225 = vst.msk [vmem:[%s3 + $0xc0] sm:$0xff] %vm2200, %v2175
  %2226 = vst.msk [vmem:[%s3 + $0xc8] sm:$0xff] %vm2200, %v2176
  %2227 = vst.msk [vmem:[%s3 + $0xd0] sm:$0xff] %vm2200, %v2177
  %2228 = vst.msk [vmem:[%s3 + $0xd8] sm:$0xff] %vm2200, %v2178
  %2229 = vst.msk [vmem:[%s3 + $0xe0] sm:$0xff] %vm2200, %v2179
  %2230 = vst.msk [vmem:[%s3 + $0xe8] sm:$0xff] %vm2200, %v2180
  %2231 = vst.msk [vmem:[%s3 + $0xf0] sm:$0xff] %vm2200, %v2181
  %2232 = vst.msk [vmem:[%s3 + $0xf8] sm:$0xff] %vm2200, %v2182
  %2233 = vst.msk [vmem:[%s3 + $0x100] sm:$0xff] %vm2200, %v2183
  %2234 = vst.msk [vmem:[%s3 + $0x108] sm:$0xff] %vm2200, %v2184
  %2235 = vst.msk [vmem:[%s3 + $0x110] sm:$0xff] %vm2200, %v2185
  %2236 = vst.msk [vmem:[%s3 + $0x118] sm:$0xff] %vm2200, %v2186
  %2237 = vst.msk [vmem:[%s3 + $0x120] sm:$0xff] %vm2200, %v2187
  %2238 = vst.msk [vmem:[%s3 + $0x128] sm:$0xff] %vm2200, %v2188
  %2239 = vst.msk [vmem:[%s3 + $0x130] sm:$0xff] %vm2200, %v2189
  %2240 = vst.msk [vmem:[%s3 + $0x138] sm:$0xff] %vm2200, %v2190
  %2241 = vst.msk [vmem:[%s3 + $0x140] sm:$0xff] %vm2200, %v2191
  %2242 = vst.msk [vmem:[%s3 + $0x148] sm:$0xff] %vm2200, %v2192
  %2243 = vst.msk [vmem:[%s3 + $0x150] sm:$0xff] %vm2200, %v2193
  %2244 = vst.msk [vmem:[%s3 + $0x158] sm:$0xff] %vm2200, %v2194
  %2245 = vst.msk [vmem:[%s3 + $0x160] sm:$0xff] %vm2200, %v2195
  %2246 = vst.msk [vmem:[%s3 + $0x168] sm:$0xff] %vm2200, %v2196
  %2247 = vst.msk [vmem:[%s3 + $0x170] sm:$0xff] %vm2200, %v2197
  %2248 = vst.msk [vmem:[%s3 + $0x178] sm:$0xff] %vm2200, %v2198
  %2249 = vst.msk [vmem:[%s3 + $0x180] sm:$0xff] %vm2200, %v2199
  // Predicated region
  $region14: #{forward.4} parent=0 // pred_check
    _
  $region15: #{forward.4} parent=0 // pred_check_branch
    %2251 = sbr.rel (0) target = $region17
  $region16: #{forward.4} parent=0 // pred_region
    _
  $region17: #{forward.4} parent=0 // pred_fallthru
    _
  // Predicated region
  $region18: #{forward.4} parent=0 // pred_check
    _
  $region19: #{forward.4} parent=0 // pred_check_branch
    %2253 = sbr.rel (0) target = $region21
  $region20: #{forward.4} parent=0 // pred_region
    _
  $region21: #{forward.4} parent=0 // pred_fallthru
    _

// kernel: forward.5
$region0: #{forward.5}
  #allocation0 [shape = 'u32[]', space=smem, size = 0x4, offset = 0x4, fixed_abs, tag = 'smem constant byte address 0x4 - core index']
  #allocation1 [shape = 'u32[144,128]{1,0:T(1,128)}', space=vmem, size = 0x12000, scoped, tag = 'internal scratch']
  %s0 = inlined_call_operand.vmem [shape: f32[392,576], index: 0, kind: input, shape index: {}]
  %s1 = inlined_call_operand.vmem [shape: f32[576,128], index: 1, kind: input, shape index: {}]
  %s2 = inlined_call_operand.vmem [shape: f32[1,128], index: 2, kind: input, shape index: {}]
  %s3 = inlined_call_operand.vmem [shape: f32[98,128], index: 3, kind: output, shape index: {}]
  %s4 = sld [smem:[#allocation0]]
  $region22: #{forward.5} parent=0
    _
  %s6 = ssub.s32 1, %s4
  %s7 = scalar_select 0, %s6, %s4
  // Predicated region
  $region2: #{forward.5} parent=0 // pred_check
    _
  $region3: #{forward.5} parent=0 // pred_check_branch
    %9 = sbr.rel (0) target = $region5
  $region4: #{forward.5} parent=0 // pred_region
    _
  $region5: #{forward.5} parent=0 // pred_fallthru
    _
  // Predicated region
  $region6: #{forward.5} parent=0 // pred_check
    _
  $region7: #{forward.5} parent=0 // pred_check_branch
    %11 = sbr.rel (0) target = $region9
  $region8: #{forward.5} parent=0 // pred_region
    _
  $region9: #{forward.5} parent=0 // pred_fallthru
    _
  // Predicated region
  $region10: #{forward.5} parent=0 // pred_check
    _
  $region11: #{forward.5} parent=0 // pred_check_branch
    %13 = sbr.rel (0) target = $region13
  $region12: #{forward.5} parent=0 // pred_region
    _
  $region13: #{forward.5} parent=0 // pred_fallthru
    _
  %v14 = vld [vmem:[%s0] sm:$0xff]
  %v15 = vld [vmem:[%s0 + $0x8] sm:$0xff]
  %v16 = vld [vmem:[%s0 + $0x10] sm:$0xff]
  %v17 = vld [vmem:[%s0 + $0x18] sm:$0xff]
  %v18 = vld [vmem:[%s0 + $0x20] sm:$0xff]
  %v19 = vld [vmem:[%s0 + $0x28] sm:$0xff]
  %v20 = vld [vmem:[%s0 + $0x30] sm:$0xff]
  %v21 = vld [vmem:[%s0 + $0x38] sm:$0xff]
  %v22 = vld [vmem:[%s0 + $0x40] sm:$0xff]
  %v23 = vld [vmem:[%s0 + $0x48] sm:$0xff]
  %v24 = vld [vmem:[%s0 + $0x50] sm:$0xff]
  %v25 = vld [vmem:[%s0 + $0x58] sm:$0xff]
  %v26 = vld [vmem:[%s0 + $0x60] sm:$0xff]
  %v27 = vld [vmem:[%s0 + $0x68] sm:$0xff]
  %v28 = vld [vmem:[%s0 + $0x70] sm:$0xff]
  %v29 = vld [vmem:[%s0 + $0x78] sm:$0xff]
  %v30 = vld [vmem:[%s0 + $0x80] sm:$0xff]
  %v31 = vld [vmem:[%s0 + $0x88] sm:$0xff]
  %v32 = vld [vmem:[%s0 + $0x90] sm:$0xff]
  %v33 = vld [vmem:[%s0 + $0x98] sm:$0xff]
  %v34 = vld [vmem:[%s0 + $0xa0] sm:$0xff]
  %v35 = vld [vmem:[%s0 + $0xa8] sm:$0xff]
  %v36 = vld [vmem:[%s0 + $0xb0] sm:$0xff]
  %v37 = vld [vmem:[%s0 + $0xb8] sm:$0xff]
  %v38 = vld [vmem:[%s0 + $0xc0] sm:$0xff]
  %v39 = vld [vmem:[%s0 + $0xc8] sm:$0xff]
  %v40 = vld [vmem:[%s0 + $0xd0] sm:$0xff]
  %v41 = vld [vmem:[%s0 + $0xd8] sm:$0xff]
  %v42 = vld [vmem:[%s0 + $0xe0] sm:$0xff]
  %v43 = vld [vmem:[%s0 + $0xe8] sm:$0xff]
  %v44 = vld [vmem:[%s0 + $0xf0] sm:$0xff]
  %v45 = vld [vmem:[%s0 + $0xf8] sm:$0xff]
  %v46 = vld [vmem:[%s0 + $0x100] sm:$0xff]
  %v47 = vld [vmem:[%s0 + $0x108] sm:$0xff]
  %v48 = vld [vmem:[%s0 + $0x110] sm:$0xff]
  %v49 = vld [vmem:[%s0 + $0x118] sm:$0xff]
  %v50 = vld [vmem:[%s0 + $0x120] sm:$0xff]
  %v51 = vld [vmem:[%s0 + $0x128] sm:$0xff]
  %v52 = vld [vmem:[%s0 + $0x130] sm:$0xff]
  %v53 = vld [vmem:[%s0 + $0x138] sm:$0xff]
  %v54 = vld [vmem:[%s0 + $0x140] sm:$0xff]
  %v55 = vld [vmem:[%s0 + $0x148] sm:$0xff]
  %v56 = vld [vmem:[%s0 + $0x150] sm:$0xff]
  %v57 = vld [vmem:[%s0 + $0x158] sm:$0xff]
  %v58 = vld [vmem:[%s0 + $0x160] sm:$0xff]
  %v59 = vld [vmem:[%s0 + $0x168] sm:$0xff]
  %v60 = vld [vmem:[%s0 + $0x170] sm:$0xff]
  %v61 = vld [vmem:[%s0 + $0x178] sm:$0xff]
  %v62 = vld [vmem:[%s0 + $0x180] sm:$0xff]
  %v63 = vld [vmem:[%s0 + $0x188] sm:$0xff]
  %v64 = vld [vmem:[%s0 + $0x190] sm:$0xff]
  %v65 = vld [vmem:[%s0 + $0x198] sm:$0xff]
  %v66 = vld [vmem:[%s0 + $0x1a0] sm:$0xff]
  %v67 = vld [vmem:[%s0 + $0x1a8] sm:$0xff]
  %v68 = vld [vmem:[%s0 + $0x1b0] sm:$0xff]
  %v69 = vld [vmem:[%s0 + $0x1b8] sm:$0xff]
  %v70 = vld [vmem:[%s0 + $0x1c0] sm:$0xff]
  %v71 = vld [vmem:[%s0 + $0x1c8] sm:$0xff]
  %v72 = vld [vmem:[%s0 + $0x1d0] sm:$0xff]
  %v73 = vld [vmem:[%s0 + $0x1d8] sm:$0xff]
  %v74 = vld [vmem:[%s0 + $0x1e0] sm:$0xff]
  %v75 = vld [vmem:[%s0 + $0x1e8] sm:$0xff]
  %v76 = vld [vmem:[%s0 + $0x1f0] sm:$0xff]
  %v77 = vld [vmem:[%s0 + $0x1f8] sm:$0xff]
  %v78 = vld [vmem:[%s0 + $0x200] sm:$0xff]
  %v79 = vld [vmem:[%s0 + $0x208] sm:$0xff]
  %v80 = vld [vmem:[%s0 + $0x210] sm:$0xff]
  %v81 = vld [vmem:[%s0 + $0x218] sm:$0xff]
  %v82 = vld [vmem:[%s0 + $0x220] sm:$0xff]
  %v83 = vld [vmem:[%s0 + $0x228] sm:$0xff]
  %v84 = vld [vmem:[%s0 + $0x230] sm:$0xff]
  %v85 = vld [vmem:[%s0 + $0x238] sm:$0xff]
  %v86 = vld [vmem:[%s0 + $0x240] sm:$0xff]
  %v87 = vld [vmem:[%s0 + $0x248] sm:$0xff]
  %v88 = vld [vmem:[%s0 + $0x250] sm:$0xff]
  %v89 = vld [vmem:[%s0 + $0x258] sm:$0xff]
  %v90 = vld [vmem:[%s0 + $0x260] sm:$0xff]
  %v91 = vld [vmem:[%s0 + $0x268] sm:$0xff]
  %v92 = vld [vmem:[%s0 + $0x270] sm:$0xff]
  %v93 = vld [vmem:[%s0 + $0x278] sm:$0xff]
  %v94 = vld [vmem:[%s0 + $0x280] sm:$0xff]
  %v95 = vld [vmem:[%s0 + $0x288] sm:$0xff]
  %v96 = vld [vmem:[%s0 + $0x290] sm:$0xff]
  %v97 = vld [vmem:[%s0 + $0x298] sm:$0xff]
  %v98 = vld [vmem:[%s0 + $0x2a0] sm:$0xff]
  %v99 = vld [vmem:[%s0 + $0x2a8] sm:$0xff]
  %v100 = vld [vmem:[%s0 + $0x2b0] sm:$0xff]
  %v101 = vld [vmem:[%s0 + $0x2b8] sm:$0xff]
  %v102 = vld [vmem:[%s0 + $0x2c0] sm:$0xff]
  %v103 = vld [vmem:[%s0 + $0x2c8] sm:$0xff]
  %v104 = vld [vmem:[%s0 + $0x2d0] sm:$0xff]
  %v105 = vld [vmem:[%s0 + $0x2d8] sm:$0xff]
  %v106 = vld [vmem:[%s0 + $0x2e0] sm:$0xff]
  %v107 = vld [vmem:[%s0 + $0x2e8] sm:$0xff]
  %v108 = vld [vmem:[%s0 + $0x2f0] sm:$0xff]
  %v109 = vld [vmem:[%s0 + $0x2f8] sm:$0xff]
  %v110 = vld [vmem:[%s0 + $0x300] sm:$0xff]
  %v111 = vld [vmem:[%s0 + $0x308] sm:$0xff]
  %v112 = vld [vmem:[%s0 + $0x310] sm:$0xff]
  %v113 = vld [vmem:[%s0 + $0x318] sm:$0xff]
  %v114 = vld [vmem:[%s0 + $0x320] sm:$0xff]
  %v115 = vld [vmem:[%s0 + $0x328] sm:$0xff]
  %v116 = vld [vmem:[%s0 + $0x330] sm:$0xff]
  %v117 = vld [vmem:[%s0 + $0x338] sm:$0xff]
  %v118 = vld [vmem:[%s0 + $0x340] sm:$0xff]
  %v119 = vld [vmem:[%s0 + $0x348] sm:$0xff]
  %v120 = vld [vmem:[%s0 + $0x350] sm:$0xff]
  %v121 = vld [vmem:[%s0 + $0x358] sm:$0xff]
  %v122 = vld [vmem:[%s0 + $0x360] sm:$0xff]
  %v123 = vld [vmem:[%s0 + $0x368] sm:$0xff]
  %v124 = vld [vmem:[%s0 + $0x370] sm:$0xff]
  %v125 = vld [vmem:[%s0 + $0x378] sm:$0xff]
  %v126 = vld [vmem:[%s0 + $0x380] sm:$0xff]
  %v127 = vld [vmem:[%s0 + $0x388] sm:$0xff]
  %v128 = vld [vmem:[%s0 + $0x390] sm:$0xff]
  %v129 = vld [vmem:[%s0 + $0x398] sm:$0xff]
  %v130 = vld [vmem:[%s0 + $0x3a0] sm:$0xff]
  %v131 = vld [vmem:[%s0 + $0x3a8] sm:$0xff]
  %v132 = vld [vmem:[%s0 + $0x3b0] sm:$0xff]
  %v133 = vld [vmem:[%s0 + $0x3b8] sm:$0xff]
  %v134 = vld [vmem:[%s0 + $0x3c0] sm:$0xff]
  %v135 = vld [vmem:[%s0 + $0x3c8] sm:$0xff]
  %v136 = vld [vmem:[%s0 + $0x3d0] sm:$0xff]
  %v137 = vld [vmem:[%s0 + $0x3d8] sm:$0xff]
  %v138 = vld [vmem:[%s0 + $0x3e0] sm:$0xff]
  %v139 = vld [vmem:[%s0 + $0x3e8] sm:$0xff]
  %v140 = vld [vmem:[%s0 + $0x3f0] sm:$0xff]
  %v141 = vld [vmem:[%s0 + $0x3f8] sm:$0xff]
  %v142 = vld [vmem:[%s0 + $0x400] sm:$0xff]
  %v143 = vld [vmem:[%s0 + $0x408] sm:$0xff]
  %v144 = vld [vmem:[%s0 + $0x410] sm:$0xff]
  %v145 = vld [vmem:[%s0 + $0x418] sm:$0xff]
  %v146 = vld [vmem:[%s0 + $0x420] sm:$0xff]
  %v147 = vld [vmem:[%s0 + $0x428] sm:$0xff]
  %v148 = vld [vmem:[%s0 + $0x430] sm:$0xff]
  %v149 = vld [vmem:[%s0 + $0x438] sm:$0xff]
  %v150 = vld [vmem:[%s0 + $0x440] sm:$0xff]
  %v151 = vld [vmem:[%s0 + $0x448] sm:$0xff]
  %v152 = vld [vmem:[%s0 + $0x450] sm:$0xff]
  %v153 = vld [vmem:[%s0 + $0x458] sm:$0xff]
  %v154 = vld [vmem:[%s0 + $0x460] sm:$0xff]
  %v155 = vld [vmem:[%s0 + $0x468] sm:$0xff]
  %v156 = vld [vmem:[%s0 + $0x470] sm:$0xff]
  %v157 = vld [vmem:[%s0 + $0x478] sm:$0xff]
  %v158 = vld [vmem:[%s0 + $0x480] sm:$0xff]
  %v159 = vld [vmem:[%s0 + $0x488] sm:$0xff]
  %v160 = vld [vmem:[%s0 + $0x490] sm:$0xff]
  %v161 = vld [vmem:[%s0 + $0x498] sm:$0xff]
  %v162 = vld [vmem:[%s0 + $0x4a0] sm:$0xff]
  %v163 = vld [vmem:[%s0 + $0x4a8] sm:$0xff]
  %v164 = vld [vmem:[%s0 + $0x4b0] sm:$0xff]
  %v165 = vld [vmem:[%s0 + $0x4b8] sm:$0xff]
  %v166 = vld [vmem:[%s0 + $0x4c0] sm:$0xff]
  %v167 = vld [vmem:[%s0 + $0x4c8] sm:$0xff]
  %v168 = vld [vmem:[%s0 + $0x4d0] sm:$0xff]
  %v169 = vld [vmem:[%s0 + $0x4d8] sm:$0xff]
  %v170 = vld [vmem:[%s0 + $0x4e0] sm:$0xff]
  %v171 = vld [vmem:[%s0 + $0x4e8] sm:$0xff]
  %v172 = vld [vmem:[%s0 + $0x4f0] sm:$0xff]
  %v173 = vld [vmem:[%s0 + $0x4f8] sm:$0xff]
  %v174 = vld [vmem:[%s0 + $0x500] sm:$0xff]
  %v175 = vld [vmem:[%s0 + $0x508] sm:$0xff]
  %v176 = vld [vmem:[%s0 + $0x510] sm:$0xff]
  %v177 = vld [vmem:[%s0 + $0x518] sm:$0xff]
  %v178 = vld [vmem:[%s0 + $0x520] sm:$0xff]
  %v179 = vld [vmem:[%s0 + $0x528] sm:$0xff]
  %v180 = vld [vmem:[%s0 + $0x530] sm:$0xff]
  %v181 = vld [vmem:[%s0 + $0x538] sm:$0xff]
  %v182 = vld [vmem:[%s0 + $0x540] sm:$0xff]
  %v183 = vld [vmem:[%s0 + $0x548] sm:$0xff]
  %v184 = vld [vmem:[%s0 + $0x550] sm:$0xff]
  %v185 = vld [vmem:[%s0 + $0x558] sm:$0xff]
  %v186 = vld [vmem:[%s0 + $0x560] sm:$0xff]
  %v187 = vld [vmem:[%s0 + $0x568] sm:$0xff]
  %v188 = vld [vmem:[%s0 + $0x570] sm:$0xff]
  %v189 = vld [vmem:[%s0 + $0x578] sm:$0xff]
  %v190 = vld [vmem:[%s0 + $0x580] sm:$0xff]
  %v191 = vld [vmem:[%s0 + $0x588] sm:$0xff]
  %v192 = vld [vmem:[%s0 + $0x590] sm:$0xff]
  %v193 = vld [vmem:[%s0 + $0x598] sm:$0xff]
  %v194 = vld [vmem:[%s0 + $0x5a0] sm:$0xff]
  %v195 = vld [vmem:[%s0 + $0x5a8] sm:$0xff]
  %v196 = vld [vmem:[%s0 + $0x5b0] sm:$0xff]
  %v197 = vld [vmem:[%s0 + $0x5b8] sm:$0xff]
  %v198 = vld [vmem:[%s0 + $0x5c0] sm:$0xff]
  %v199 = vld [vmem:[%s0 + $0x5c8] sm:$0xff]
  %v200 = vld [vmem:[%s0 + $0x5d0] sm:$0xff]
  %v201 = vld [vmem:[%s0 + $0x5d8] sm:$0xff]
  %v202 = vld [vmem:[%s0 + $0x5e0] sm:$0xff]
  %v203 = vld [vmem:[%s0 + $0x5e8] sm:$0xff]
  %v204 = vld [vmem:[%s0 + $0x5f0] sm:$0xff]
  %v205 = vld [vmem:[%s0 + $0x5f8] sm:$0xff]
  %v206 = vld [vmem:[%s0 + $0x600] sm:$0xff]
  %v207 = vld [vmem:[%s0 + $0x608] sm:$0xff]
  %v208 = vld [vmem:[%s0 + $0x610] sm:$0xff]
  %v209 = vld [vmem:[%s0 + $0x618] sm:$0xff]
  %v210 = vld [vmem:[%s0 + $0x620] sm:$0xff]
  %v211 = vld [vmem:[%s0 + $0x628] sm:$0xff]
  %v212 = vld [vmem:[%s0 + $0x630] sm:$0xff]
  %v213 = vld [vmem:[%s0 + $0x638] sm:$0xff]
  %v214 = vld [vmem:[%s0 + $0x640] sm:$0xff]
  %v215 = vld [vmem:[%s0 + $0x648] sm:$0xff]
  %v216 = vld [vmem:[%s0 + $0x650] sm:$0xff]
  %v217 = vld [vmem:[%s0 + $0x658] sm:$0xff]
  %v218 = vld [vmem:[%s0 + $0x660] sm:$0xff]
  %v219 = vld [vmem:[%s0 + $0x668] sm:$0xff]
  %v220 = vld [vmem:[%s0 + $0x670] sm:$0xff]
  %v221 = vld [vmem:[%s0 + $0x678] sm:$0xff]
  %v222 = vld [vmem:[%s0 + $0x680] sm:$0xff]
  %v223 = vld [vmem:[%s0 + $0x688] sm:$0xff]
  %v224 = vld [vmem:[%s0 + $0x690] sm:$0xff]
  %v225 = vld [vmem:[%s0 + $0x698] sm:$0xff]
  %v226 = vld [vmem:[%s0 + $0x6a0] sm:$0xff]
  %v227 = vld [vmem:[%s0 + $0x6a8] sm:$0xff]
  %v228 = vld [vmem:[%s0 + $0x6b0] sm:$0xff]
  %v229 = vld [vmem:[%s0 + $0x6b8] sm:$0xff]
  %v230 = vld [vmem:[%s0 + $0x6c0] sm:$0xff]
  %v231 = vld [vmem:[%s0 + $0x6c8] sm:$0xff]
  %v232 = vld [vmem:[%s0 + $0x6d0] sm:$0xff]
  %v233 = vld [vmem:[%s0 + $0x6d8] sm:$0xff]
  %v234 = vld [vmem:[%s0 + $0x6e0] sm:$0xff]
  %v235 = vld [vmem:[%s0 + $0x6e8] sm:$0xff]
  %v236 = vld [vmem:[%s0 + $0x6f0] sm:$0xff]
  %v237 = vld [vmem:[%s0 + $0x6f8] sm:$0xff]
  %v238 = vld [vmem:[%s0 + $0x700] sm:$0xff]
  %v239 = vld [vmem:[%s0 + $0x708] sm:$0xff]
  %v240 = vld [vmem:[%s0 + $0x710] sm:$0xff]
  %v241 = vld [vmem:[%s0 + $0x718] sm:$0xff]
  %v242 = vld [vmem:[%s0 + $0x720] sm:$0xff]
  %v243 = vld [vmem:[%s0 + $0x728] sm:$0xff]
  %v244 = vld [vmem:[%s0 + $0x730] sm:$0xff]
  %v245 = vld [vmem:[%s0 + $0x738] sm:$0xff]
  %v246 = vld [vmem:[%s0 + $0x740] sm:$0xff]
  %v247 = vld [vmem:[%s0 + $0x748] sm:$0xff]
  %v248 = vld [vmem:[%s0 + $0x750] sm:$0xff]
  %v249 = vld [vmem:[%s0 + $0x758] sm:$0xff]
  %v250 = vld [vmem:[%s0 + $0x760] sm:$0xff]
  %v251 = vld [vmem:[%s0 + $0x768] sm:$0xff]
  %v252 = vld [vmem:[%s0 + $0x770] sm:$0xff]
  %v253 = vld [vmem:[%s0 + $0x778] sm:$0xff]
  %v254 = vld [vmem:[%s0 + $0x780] sm:$0xff]
  %v255 = vld [vmem:[%s0 + $0x788] sm:$0xff]
  %v256 = vld [vmem:[%s0 + $0x790] sm:$0xff]
  %v257 = vld [vmem:[%s0 + $0x798] sm:$0xff]
  %v258 = vld [vmem:[%s0 + $0x7a0] sm:$0xff]
  %v259 = vld [vmem:[%s1] sm:$0xff]
  %v260 = vld [vmem:[%s1 + $0x8] sm:$0xff]
  %v261 = vld [vmem:[%s1 + $0x10] sm:$0xff]
  %v262 = vld [vmem:[%s1 + $0x18] sm:$0xff]
  %v263 = vld [vmem:[%s1 + $0x20] sm:$0xff]
  %v264 = vld [vmem:[%s1 + $0x28] sm:$0xff]
  %v265 = vld [vmem:[%s1 + $0x30] sm:$0xff]
  %v266 = vld [vmem:[%s1 + $0x38] sm:$0xff]
  %v267 = vld [vmem:[%s1 + $0x40] sm:$0xff]
  %v268 = vld [vmem:[%s1 + $0x48] sm:$0xff]
  %v269 = vld [vmem:[%s1 + $0x50] sm:$0xff]
  %v270 = vld [vmem:[%s1 + $0x58] sm:$0xff]
  %v271 = vld [vmem:[%s1 + $0x60] sm:$0xff]
  %v272 = vld [vmem:[%s1 + $0x68] sm:$0xff]
  %v273 = vld [vmem:[%s1 + $0x70] sm:$0xff]
  %v274 = vld [vmem:[%s1 + $0x78] sm:$0xff]
  %v275 = vld [vmem:[%s1 + $0x80] sm:$0xff]
  %v276 = vld [vmem:[%s1 + $0x88] sm:$0xff]
  %v277 = vld [vmem:[%s1 + $0x90] sm:$0xff]
  %v278 = vld [vmem:[%s1 + $0x98] sm:$0xff]
  %v279 = vld [vmem:[%s1 + $0xa0] sm:$0xff]
  %v280 = vld [vmem:[%s1 + $0xa8] sm:$0xff]
  %v281 = vld [vmem:[%s1 + $0xb0] sm:$0xff]
  %v282 = vld [vmem:[%s1 + $0xb8] sm:$0xff]
  %v283 = vld [vmem:[%s1 + $0xc0] sm:$0xff]
  %v284 = vld [vmem:[%s1 + $0xc8] sm:$0xff]
  %v285 = vld [vmem:[%s1 + $0xd0] sm:$0xff]
  %v286 = vld [vmem:[%s1 + $0xd8] sm:$0xff]
  %v287 = vld [vmem:[%s1 + $0xe0] sm:$0xff]
  %v288 = vld [vmem:[%s1 + $0xe8] sm:$0xff]
  %v289 = vld [vmem:[%s1 + $0xf0] sm:$0xff]
  %v290 = vld [vmem:[%s1 + $0xf8] sm:$0xff]
  %v291 = vld [vmem:[%s1 + $0x100] sm:$0xff]
  %v292 = vld [vmem:[%s1 + $0x108] sm:$0xff]
  %v293 = vld [vmem:[%s1 + $0x110] sm:$0xff]
  %v294 = vld [vmem:[%s1 + $0x118] sm:$0xff]
  %v295 = vld [vmem:[%s1 + $0x120] sm:$0xff]
  %v296 = vld [vmem:[%s1 + $0x128] sm:$0xff]
  %v297 = vld [vmem:[%s1 + $0x130] sm:$0xff]
  %v298 = vld [vmem:[%s1 + $0x138] sm:$0xff]
  %v299 = vld [vmem:[%s1 + $0x140] sm:$0xff]
  %v300 = vld [vmem:[%s1 + $0x148] sm:$0xff]
  %v301 = vld [vmem:[%s1 + $0x150] sm:$0xff]
  %v302 = vld [vmem:[%s1 + $0x158] sm:$0xff]
  %v303 = vld [vmem:[%s1 + $0x160] sm:$0xff]
  %v304 = vld [vmem:[%s1 + $0x168] sm:$0xff]
  %v305 = vld [vmem:[%s1 + $0x170] sm:$0xff]
  %v306 = vld [vmem:[%s1 + $0x178] sm:$0xff]
  %v307 = vld [vmem:[%s1 + $0x180] sm:$0xff]
  %v308 = vld [vmem:[%s1 + $0x188] sm:$0xff]
  %v309 = vld [vmem:[%s1 + $0x190] sm:$0xff]
  %v310 = vld [vmem:[%s1 + $0x198] sm:$0xff]
  %v311 = vld [vmem:[%s1 + $0x1a0] sm:$0xff]
  %v312 = vld [vmem:[%s1 + $0x1a8] sm:$0xff]
  %v313 = vld [vmem:[%s1 + $0x1b0] sm:$0xff]
  %v314 = vld [vmem:[%s1 + $0x1b8] sm:$0xff]
  %v315 = vld [vmem:[%s1 + $0x1c0] sm:$0xff]
  %v316 = vld [vmem:[%s1 + $0x1c8] sm:$0xff]
  %v317 = vld [vmem:[%s1 + $0x1d0] sm:$0xff]
  %v318 = vld [vmem:[%s1 + $0x1d8] sm:$0xff]
  %v319 = vld [vmem:[%s1 + $0x1e0] sm:$0xff]
  %v320 = vld [vmem:[%s1 + $0x1e8] sm:$0xff]
  %v321 = vld [vmem:[%s1 + $0x1f0] sm:$0xff]
  %v322 = vld [vmem:[%s1 + $0x1f8] sm:$0xff]
  %v323 = vld [vmem:[%s1 + $0x200] sm:$0xff]
  %v324 = vld [vmem:[%s1 + $0x208] sm:$0xff]
  %v325 = vld [vmem:[%s1 + $0x210] sm:$0xff]
  %v326 = vld [vmem:[%s1 + $0x218] sm:$0xff]
  %v327 = vld [vmem:[%s1 + $0x220] sm:$0xff]
  %v328 = vld [vmem:[%s1 + $0x228] sm:$0xff]
  %v329 = vld [vmem:[%s1 + $0x230] sm:$0xff]
  %v330 = vld [vmem:[%s1 + $0x238] sm:$0xff]
  %v331 = vld [vmem:[%s2] sm:$0x1]
  %v333 = vlaneseq
  %v334 = vshrl.u32 %v333, 7
  %v335 = vsub.s32 0, %v334
  %v336 = vrot.slane %v331, %v335
  %vm338 = vcmask 523264
  %v340 = vsel %vm338, %v18, 0
  %v343 = vsel %vm338, %v23, 0
  %v346 = vsel %vm338, %v28, 0
  %v349 = vsel %vm338, %v33, 0
  %v352 = vsel %vm338, %v38, 0
  %v355 = vsel %vm338, %v43, 0
  %v358 = vsel %vm338, %v48, 0
  %v361 = vsel %vm338, %v53, 0
  %v364 = vsel %vm338, %v58, 0
  %v367 = vsel %vm338, %v63, 0
  %v370 = vsel %vm338, %v68, 0
  %v373 = vsel %vm338, %v73, 0
  %v376 = vsel %vm338, %v78, 0
  %v379 = vsel %vm338, %v83, 0
  %v382 = vsel %vm338, %v88, 0
  %v385 = vsel %vm338, %v93, 0
  %v388 = vsel %vm338, %v98, 0
  %v391 = vsel %vm338, %v103, 0
  %v394 = vsel %vm338, %v108, 0
  %v397 = vsel %vm338, %v113, 0
  %v400 = vsel %vm338, %v118, 0
  %v403 = vsel %vm338, %v123, 0
  %v406 = vsel %vm338, %v128, 0
  %v409 = vsel %vm338, %v133, 0
  %v412 = vsel %vm338, %v138, 0
  %v415 = vsel %vm338, %v143, 0
  %v418 = vsel %vm338, %v148, 0
  %v421 = vsel %vm338, %v153, 0
  %v424 = vsel %vm338, %v158, 0
  %v427 = vsel %vm338, %v163, 0
  %v430 = vsel %vm338, %v168, 0
  %v433 = vsel %vm338, %v173, 0
  %v436 = vsel %vm338, %v178, 0
  %v439 = vsel %vm338, %v183, 0
  %v442 = vsel %vm338, %v188, 0
  %v445 = vsel %vm338, %v193, 0
  %v448 = vsel %vm338, %v198, 0
  %v451 = vsel %vm338, %v203, 0
  %v454 = vsel %vm338, %v208, 0
  %v457 = vsel %vm338, %v213, 0
  %v460 = vsel %vm338, %v218, 0
  %v463 = vsel %vm338, %v223, 0
  %v466 = vsel %vm338, %v228, 0
  %v469 = vsel %vm338, %v233, 0
  %v472 = vsel %vm338, %v238, 0
  %v475 = vsel %vm338, %v243, 0
  %v478 = vsel %vm338, %v248, 0
  %v481 = vsel %vm338, %v253, 0
  %v484 = vsel %vm338, %v258, 0
  %486 = vmatprep.subr.mxu0 0.0
  %487 = vmatpush1.msra.mxu0 %v259
  %488 = vmatprep.subr.mxu0 0.0
  %489 = vmatpush1.msra.mxu0 %v260
  %490 = vmatprep.subr.mxu0 0.0
  %491 = vmatpush1.msra.mxu0 %v261
  %492 = vmatprep.subr.mxu0 0.0
  %493 = vmatpush1.msra.mxu0 %v262
  %494 = vmatprep.subr.mxu0 0.0
  %495 = vmatpush1.msra.mxu0 %v263
  %496 = vmatprep.subr.mxu0 0.0
  %497 = vmatpush1.msra.mxu0 %v264
  %498 = vmatprep.subr.mxu0 0.0
  %499 = vmatpush1.msra.mxu0 %v265
  %500 = vmatprep.subr.mxu0 0.0
  %501 = vmatpush1.msra.mxu0 %v266
  %502 = vmatprep.subr.mxu0 0.0
  %503 = vmatpush1.msra.mxu0 %v267
  %504 = vmatprep.subr.mxu0 0.0
  %505 = vmatpush1.msra.mxu0 %v268
  %506 = vmatprep.subr.mxu0 0.0
  %507 = vmatpush1.msra.mxu0 %v269
  %508 = vmatprep.subr.mxu0 0.0
  %509 = vmatpush1.msra.mxu0 %v270
  %510 = vmatprep.subr.mxu0 0.0
  %511 = vmatpush1.msra.mxu0 %v271
  %512 = vmatprep.subr.mxu0 0.0
  %513 = vmatpush1.msra.mxu0 %v272
  %514 = vmatprep.subr.mxu0 0.0
  %515 = vmatpush1.msra.mxu0 %v273
  %516 = vmatprep.subr.mxu0 0.0
  %517 = vmatpush1.msra.mxu0 %v274
  %518 = vmatprep.subr.mxu0 0.0
  %519 = vmatpush1.msra.mxu0 %v275
  %520 = vmatprep.subr.mxu0 0.0
  %521 = vmatpush1.msra.mxu0 %v276
  %522 = vmatprep.subr.mxu0 0.0
  %523 = vmatpush1.msra.mxu0 %v277
  %524 = vmatprep.subr.mxu0 0.0
  %525 = vmatpush1.msra.mxu0 %v278
  %526 = vmatprep.subr.mxu0 0.0
  %527 = vmatpush1.msra.mxu0 %v279
  %528 = vmatprep.subr.mxu0 0.0
  %529 = vmatpush1.msra.mxu0 %v280
  %530 = vmatprep.subr.mxu0 0.0
  %531 = vmatpush1.msra.mxu0 %v281
  %532 = vmatprep.subr.mxu0 0.0
  %533 = vmatpush1.msra.mxu0 %v282
  %534 = vmatprep.subr.mxu0 0.0
  %535 = vmatpush1.msra.mxu0 %v283
  %536 = vmatprep.subr.mxu0 0.0
  %537 = vmatpush1.msra.mxu0 %v284
  %538 = vmatprep.subr.mxu0 0.0
  %539 = vmatpush1.msra.mxu0 %v285
  %540 = vmatprep.subr.mxu0 0.0
  %541 = vmatpush1.msra.mxu0 %v286
  %542 = vmatprep.subr.mxu0 0.0
  %543 = vmatpush1.msra.mxu0 %v287
  %544 = vmatprep.subr.mxu0 0.0
  %545 = vmatpush1.msra.mxu0 %v288
  %546 = vmatprep.subr.mxu0 0.0
  %547 = vmatpush1.msra.mxu0 %v289
  %548 = vmatprep.subr.mxu0 0.0
  %549 = vmatpush1.msra.mxu0 %v290
  %550 = vmatprep.mubr.f32.mxu0 %v15
  %551 = vmatmul.mubr.f32.gmra.mrb[0].mxu0 %v14
  %v552 = vpop.f32.mrb[0].mxu0
  %v553 = vadd.f32 %v336, %v552
  %v554 = vpop.f32.mrb[0].mxu0
  %555 = vmatprep.mubr.f32.mxu0 %v20
  %556 = vmatmul.mubr.f32.gmra.mrb[0].mxu0 %v19
  %v557 = vpop.f32.mrb[0].mxu0
  %v558 = vadd.f32 %v336, %v557
  %v559 = vpop.f32.mrb[0].mxu0
  %560 = vmatprep.mubr.f32.mxu0 %v25
  %561 = vmatmul.mubr.f32.gmra.mrb[0].mxu0 %v24
  %v562 = vpop.f32.mrb[0].mxu0
  %v563 = vadd.f32 %v336, %v562
  %v564 = vpop.f32.mrb[0].mxu0
  %565 = vmatprep.mubr.f32.mxu0 %v30
  %566 = vmatmul.mubr.f32.gmra.mrb[0].mxu0 %v29
  %v567 = vpop.f32.mrb[0].mxu0
  %v568 = vadd.f32 %v336, %v567
  %v569 = vpop.f32.mrb[0].mxu0
  %570 = vmatprep.mubr.f32.mxu0 %v35
  %571 = vmatmul.mubr.f32.gmra.mrb[0].mxu0 %v34
  %v572 = vpop.f32.mrb[0].mxu0
  %v573 = vadd.f32 %v336, %v572
  %v574 = vpop.f32.mrb[0].mxu0
  %575 = vmatprep.mubr.f32.mxu0 %v40
  %576 = vmatmul.mubr.f32.gmra.mrb[0].mxu0 %v39
  %v577 = vpop.f32.mrb[0].mxu0
  %v578 = vadd.f32 %v336, %v577
  %v579 = vpop.f32.mrb[0].mxu0
  %580 = vmatprep.mubr.f32.mxu0 %v45
  %581 = vmatmul.mubr.f32.gmra.mrb[0].mxu0 %v44
  %v582 = vpop.f32.mrb[0].mxu0
  %v583 = vadd.f32 %v336, %v582
  %v584 = vpop.f32.mrb[0].mxu0
  %585 = vmatprep.mubr.f32.mxu0 %v50
  %586 = vmatmul.mubr.f32.gmra.mrb[0].mxu0 %v49
  %v587 = vpop.f32.mrb[0].mxu0
  %v588 = vadd.f32 %v336, %v587
  %v589 = vpop.f32.mrb[0].mxu0
  %590 = vmatprep.mubr.f32.mxu0 %v55
  %591 = vmatmul.mubr.f32.gmra.mrb[0].mxu0 %v54
  %v592 = vpop.f32.mrb[0].mxu0
  %v593 = vadd.f32 %v336, %v592
  %v594 = vpop.f32.mrb[0].mxu0
  %595 = vmatprep.mubr.f32.mxu0 %v60
  %596 = vmatmul.mubr.f32.gmra.mrb[0].mxu0 %v59
  %v597 = vpop.f32.mrb[0].mxu0
  %v598 = vadd.f32 %v336, %v597
  %v599 = vpop.f32.mrb[0].mxu0
  %600 = vmatprep.mubr.f32.mxu0 %v65
  %601 = vmatmul.mubr.f32.gmra.mrb[0].mxu0 %v64
  %v602 = vpop.f32.mrb[0].mxu0
  %v603 = vadd.f32 %v336, %v602
  %v604 = vpop.f32.mrb[0].mxu0
  %605 = vmatprep.mubr.f32.mxu0 %v70
  %606 = vmatmul.mubr.f32.gmra.mrb[0].mxu0 %v69
  %v607 = vpop.f32.mrb[0].mxu0
  %v608 = vadd.f32 %v336, %v607
  %v609 = vpop.f32.mrb[0].mxu0
  %610 = vmatprep.mubr.f32.mxu0 %v75
  %611 = vmatmul.mubr.f32.gmra.mrb[0].mxu0 %v74
  %v612 = vpop.f32.mrb[0].mxu0
  %v613 = vadd.f32 %v336, %v612
  %v614 = vpop.f32.mrb[0].mxu0
  %615 = vmatprep.mubr.f32.mxu0 %v80
  %616 = vmatmul.mubr.f32.gmra.mrb[0].mxu0 %v79
  %v617 = vpop.f32.mrb[0].mxu0
  %v618 = vadd.f32 %v336, %v617
  %v619 = vpop.f32.mrb[0].mxu0
  %620 = vmatprep.mubr.f32.mxu0 %v85
  %621 = vmatmul.mubr.f32.gmra.mrb[0].mxu0 %v84
  %v622 = vpop.f32.mrb[0].mxu0
  %v623 = vadd.f32 %v336, %v622
  %v624 = vpop.f32.mrb[0].mxu0
  %625 = vmatprep.mubr.f32.mxu0 %v90
  %626 = vmatmul.mubr.f32.gmra.mrb[0].mxu0 %v89
  %v627 = vpop.f32.mrb[0].mxu0
  %v628 = vadd.f32 %v336, %v627
  %v629 = vpop.f32.mrb[0].mxu0
  %630 = vmatprep.mubr.f32.mxu0 %v95
  %631 = vmatmul.mubr.f32.gmra.mrb[0].mxu0 %v94
  %v632 = vpop.f32.mrb[0].mxu0
  %v633 = vadd.f32 %v336, %v632
  %v634 = vpop.f32.mrb[0].mxu0
  %635 = vmatprep.mubr.f32.mxu0 %v100
  %636 = vmatmul.mubr.f32.gmra.mrb[0].mxu0 %v99
  %v637 = vpop.f32.mrb[0].mxu0
  %v638 = vadd.f32 %v336, %v637
  %v639 = vpop.f32.mrb[0].mxu0
  %640 = vmatprep.mubr.f32.mxu0 %v105
  %641 = vmatmul.mubr.f32.gmra.mrb[0].mxu0 %v104
  %v642 = vpop.f32.mrb[0].mxu0
  %v643 = vadd.f32 %v336, %v642
  %v644 = vpop.f32.mrb[0].mxu0
  %645 = vmatprep.mubr.f32.mxu0 %v110
  %646 = vmatmul.mubr.f32.gmra.mrb[0].mxu0 %v109
  %v647 = vpop.f32.mrb[0].mxu0
  %v648 = vadd.f32 %v336, %v647
  %v649 = vpop.f32.mrb[0].mxu0
  %650 = vmatprep.mubr.f32.mxu0 %v115
  %651 = vmatmul.mubr.f32.gmra.mrb[0].mxu0 %v114
  %v652 = vpop.f32.mrb[0].mxu0
  %v653 = vadd.f32 %v336, %v652
  %v654 = vpop.f32.mrb[0].mxu0
  %655 = vmatprep.mubr.f32.mxu0 %v120
  %656 = vmatmul.mubr.f32.gmra.mrb[0].mxu0 %v119
  %v657 = vpop.f32.mrb[0].mxu0
  %v658 = vadd.f32 %v336, %v657
  %v659 = vpop.f32.mrb[0].mxu0
  %660 = vmatprep.mubr.f32.mxu0 %v125
  %661 = vmatmul.mubr.f32.gmra.mrb[0].mxu0 %v124
  %v662 = vpop.f32.mrb[0].mxu0
  %v663 = vadd.f32 %v336, %v662
  %v664 = vpop.f32.mrb[0].mxu0
  %665 = vmatprep.mubr.f32.mxu0 %v130
  %666 = vmatmul.mubr.f32.gmra.mrb[0].mxu0 %v129
  %v667 = vpop.f32.mrb[0].mxu0
  %v668 = vadd.f32 %v336, %v667
  %v669 = vpop.f32.mrb[0].mxu0
  %670 = vmatprep.mubr.f32.mxu0 %v135
  %671 = vmatmul.mubr.f32.gmra.mrb[0].mxu0 %v134
  %v672 = vpop.f32.mrb[0].mxu0
  %v673 = vadd.f32 %v336, %v672
  %v674 = vpop.f32.mrb[0].mxu0
  %675 = vmatprep.mubr.f32.mxu0 %v140
  %676 = vmatmul.mubr.f32.gmra.mrb[0].mxu0 %v139
  %v677 = vpop.f32.mrb[0].mxu0
  %v678 = vadd.f32 %v336, %v677
  %v679 = vpop.f32.mrb[0].mxu0
  %680 = vmatprep.mubr.f32.mxu0 %v145
  %681 = vmatmul.mubr.f32.gmra.mrb[0].mxu0 %v144
  %v682 = vpop.f32.mrb[0].mxu0
  %v683 = vadd.f32 %v336, %v682
  %v684 = vpop.f32.mrb[0].mxu0
  %685 = vmatprep.mubr.f32.mxu0 %v150
  %686 = vmatmul.mubr.f32.gmra.mrb[0].mxu0 %v149
  %v687 = vpop.f32.mrb[0].mxu0
  %v688 = vadd.f32 %v336, %v687
  %v689 = vpop.f32.mrb[0].mxu0
  %690 = vmatprep.mubr.f32.mxu0 %v155
  %691 = vmatmul.mubr.f32.gmra.mrb[0].mxu0 %v154
  %v692 = vpop.f32.mrb[0].mxu0
  %v693 = vadd.f32 %v336, %v692
  %v694 = vpop.f32.mrb[0].mxu0
  %695 = vmatprep.mubr.f32.mxu0 %v160
  %696 = vmatmul.mubr.f32.gmra.mrb[0].mxu0 %v159
  %v697 = vpop.f32.mrb[0].mxu0
  %v698 = vadd.f32 %v336, %v697
  %v699 = vpop.f32.mrb[0].mxu0
  %700 = vmatprep.mubr.f32.mxu0 %v165
  %701 = vmatmul.mubr.f32.gmra.mrb[0].mxu0 %v164
  %v702 = vpop.f32.mrb[0].mxu0
  %v703 = vadd.f32 %v336, %v702
  %v704 = vpop.f32.mrb[0].mxu0
  %705 = vmatprep.mubr.f32.mxu0 %v170
  %706 = vmatmul.mubr.f32.gmra.mrb[0].mxu0 %v169
  %v707 = vpop.f32.mrb[0].mxu0
  %v708 = vadd.f32 %v336, %v707
  %v709 = vpop.f32.mrb[0].mxu0
  %710 = vmatprep.mubr.f32.mxu0 %v175
  %711 = vmatmul.mubr.f32.gmra.mrb[0].mxu0 %v174
  %v712 = vpop.f32.mrb[0].mxu0
  %v713 = vadd.f32 %v336, %v712
  %v714 = vpop.f32.mrb[0].mxu0
  %715 = vmatprep.mubr.f32.mxu0 %v180
  %716 = vmatmul.mubr.f32.gmra.mrb[0].mxu0 %v179
  %v717 = vpop.f32.mrb[0].mxu0
  %v718 = vadd.f32 %v336, %v717
  %v719 = vpop.f32.mrb[0].mxu0
  %720 = vmatprep.mubr.f32.mxu0 %v185
  %721 = vmatmul.mubr.f32.gmra.mrb[0].mxu0 %v184
  %v722 = vpop.f32.mrb[0].mxu0
  %v723 = vadd.f32 %v336, %v722
  %v724 = vpop.f32.mrb[0].mxu0
  %725 = vmatprep.mubr.f32.mxu0 %v190
  %726 = vmatmul.mubr.f32.gmra.mrb[0].mxu0 %v189
  %v727 = vpop.f32.mrb[0].mxu0
  %v728 = vadd.f32 %v336, %v727
  %v729 = vpop.f32.mrb[0].mxu0
  %730 = vmatprep.mubr.f32.mxu0 %v195
  %731 = vmatmul.mubr.f32.gmra.mrb[0].mxu0 %v194
  %v732 = vpop.f32.mrb[0].mxu0
  %v733 = vadd.f32 %v336, %v732
  %v734 = vpop.f32.mrb[0].mxu0
  %735 = vmatprep.mubr.f32.mxu0 %v200
  %736 = vmatmul.mubr.f32.gmra.mrb[0].mxu0 %v199
  %v737 = vpop.f32.mrb[0].mxu0
  %v738 = vadd.f32 %v336, %v737
  %v739 = vpop.f32.mrb[0].mxu0
  %740 = vmatprep.mubr.f32.mxu0 %v205
  %741 = vmatmul.mubr.f32.gmra.mrb[0].mxu0 %v204
  %v742 = vpop.f32.mrb[0].mxu0
  %v743 = vadd.f32 %v336, %v742
  %v744 = vpop.f32.mrb[0].mxu0
  %745 = vmatprep.mubr.f32.mxu0 %v210
  %746 = vmatmul.mubr.f32.gmra.mrb[0].mxu0 %v209
  %v747 = vpop.f32.mrb[0].mxu0
  %v748 = vadd.f32 %v336, %v747
  %v749 = vpop.f32.mrb[0].mxu0
  %750 = vmatprep.mubr.f32.mxu0 %v215
  %751 = vmatmul.mubr.f32.gmra.mrb[0].mxu0 %v214
  %v752 = vpop.f32.mrb[0].mxu0
  %v753 = vadd.f32 %v336, %v752
  %v754 = vpop.f32.mrb[0].mxu0
  %755 = vmatprep.mubr.f32.mxu0 %v220
  %756 = vmatmul.mubr.f32.gmra.mrb[0].mxu0 %v219
  %v757 = vpop.f32.mrb[0].mxu0
  %v758 = vadd.f32 %v336, %v757
  %v759 = vpop.f32.mrb[0].mxu0
  %760 = vmatprep.mubr.f32.mxu0 %v225
  %761 = vmatmul.mubr.f32.gmra.mrb[0].mxu0 %v224
  %v762 = vpop.f32.mrb[0].mxu0
  %v763 = vadd.f32 %v336, %v762
  %v764 = vpop.f32.mrb[0].mxu0
  %765 = vmatprep.mubr.f32.mxu0 %v230
  %766 = vmatmul.mubr.f32.gmra.mrb[0].mxu0 %v229
  %v767 = vpop.f32.mrb[0].mxu0
  %v768 = vadd.f32 %v336, %v767
  %v769 = vpop.f32.mrb[0].mxu0
  %770 = vmatprep.mubr.f32.mxu0 %v235
  %771 = vmatmul.mubr.f32.gmra.mrb[0].mxu0 %v234
  %v772 = vpop.f32.mrb[0].mxu0
  %v773 = vadd.f32 %v336, %v772
  %v774 = vpop.f32.mrb[0].mxu0
  %775 = vmatprep.mubr.f32.mxu0 %v240
  %776 = vmatmul.mubr.f32.gmra.mrb[0].mxu0 %v239
  %v777 = vpop.f32.mrb[0].mxu0
  %v778 = vadd.f32 %v336, %v777
  %v779 = vpop.f32.mrb[0].mxu0
  %780 = vmatprep.mubr.f32.mxu0 %v245
  %781 = vmatmul.mubr.f32.gmra.mrb[0].mxu0 %v244
  %v782 = vpop.f32.mrb[0].mxu0
  %v783 = vadd.f32 %v336, %v782
  %v784 = vpop.f32.mrb[0].mxu0
  %785 = vmatprep.mubr.f32.mxu0 %v250
  %786 = vmatmul.mubr.f32.gmra.mrb[0].mxu0 %v249
  %v787 = vpop.f32.mrb[0].mxu0
  %v788 = vadd.f32 %v336, %v787
  %v789 = vpop.f32.mrb[0].mxu0
  %790 = vmatprep.mubr.f32.mxu0 %v255
  %791 = vmatmul.mubr.f32.gmra.mrb[0].mxu0 %v254
  %v792 = vpop.f32.mrb[0].mxu0
  %v793 = vadd.f32 %v336, %v792
  %v794 = vpop.f32.mrb[0].mxu0
  %795 = vdwg.mxu0
  %796 = vmatprep.subr.mxu0 0.0
  %797 = vmatpush1.msra.mxu0 %v291
  %798 = vmatprep.subr.mxu0 0.0
  %799 = vmatpush1.msra.mxu0 %v292
  %800 = vmatprep.subr.mxu0 0.0
  %801 = vmatpush1.msra.mxu0 %v293
  %802 = vmatprep.subr.mxu0 0.0
  %803 = vmatpush1.msra.mxu0 %v294
  %804 = vmatprep.subr.mxu0 0.0
  %805 = vmatpush1.msra.mxu0 %v295
  %806 = vmatprep.subr.mxu0 0.0
  %807 = vmatpush1.msra.mxu0 %v296
  %808 = vmatprep.subr.mxu0 0.0
  %809 = vmatpush1.msra.mxu0 %v297
  %810 = vmatprep.subr.mxu0 0.0
  %811 = vmatpush1.msra.mxu0 %v298
  %812 = vmatprep.subr.mxu0 0.0
  %813 = vmatpush1.msra.mxu0 %v299
  %814 = vmatprep.subr.mxu0 0.0
  %815 = vmatpush1.msra.mxu0 %v300
  %816 = vmatprep.subr.mxu0 0.0
  %817 = vmatpush1.msra.mxu0 %v301
  %818 = vmatprep.subr.mxu0 0.0
  %819 = vmatpush1.msra.mxu0 %v302
  %820 = vmatprep.subr.mxu0 0.0
  %821 = vmatpush1.msra.mxu0 %v303
  %822 = vmatprep.subr.mxu0 0.0
  %823 = vmatpush1.msra.mxu0 %v304
  %824 = vmatprep.subr.mxu0 0.0
  %825 = vmatpush1.msra.mxu0 %v305
  %826 = vmatprep.subr.mxu0 0.0
  %827 = vmatpush1.msra.mxu0 %v306
  %828 = vmatprep.subr.mxu0 0.0
  %829 = vmatpush1.msra.mxu0 %v307
  %830 = vmatprep.subr.mxu0 0.0
  %831 = vmatpush1.msra.mxu0 %v308
  %832 = vmatprep.subr.mxu0 0.0
  %833 = vmatpush1.msra.mxu0 %v309
  %834 = vmatprep.subr.mxu0 0.0
  %835 = vmatpush1.msra.mxu0 %v310
  %836 = vmatprep.subr.mxu0 0.0
  %837 = vmatpush1.msra.mxu0 %v311
  %838 = vmatprep.subr.mxu0 0.0
  %839 = vmatpush1.msra.mxu0 %v312
  %840 = vmatprep.subr.mxu0 0.0
  %841 = vmatpush1.msra.mxu0 %v313
  %842 = vmatprep.subr.mxu0 0.0
  %843 = vmatpush1.msra.mxu0 %v314
  %844 = vmatprep.subr.mxu0 0.0
  %845 = vmatpush1.msra.mxu0 %v315
  %846 = vmatprep.subr.mxu0 0.0
  %847 = vmatpush1.msra.mxu0 %v316
  %848 = vmatprep.subr.mxu0 0.0
  %849 = vmatpush1.msra.mxu0 %v317
  %850 = vmatprep.subr.mxu0 0.0
  %851 = vmatpush1.msra.mxu0 %v318
  %852 = vmatprep.subr.mxu0 0.0
  %853 = vmatpush1.msra.mxu0 %v319
  %854 = vmatprep.subr.mxu0 0.0
  %855 = vmatpush1.msra.mxu0 %v320
  %856 = vmatprep.subr.mxu0 0.0
  %857 = vmatpush1.msra.mxu0 %v321
  %858 = vmatprep.subr.mxu0 0.0
  %859 = vmatpush1.msra.mxu0 %v322
  %860 = vmatprep.mubr.f32.mxu0 %v17
  %861 = vmatmul.mubr.f32.gmra.mrb[0].mxu0 %v16
  %v862 = vpop.f32.mrb[0].mxu0
  %v863 = vadd.f32 %v553, %v862
  %v864 = vpop.f32.mrb[0].mxu0
  %865 = vmatprep.mubr.f32.mxu0 %v22
  %866 = vmatmul.mubr.f32.gmra.mrb[0].mxu0 %v21
  %v867 = vpop.f32.mrb[0].mxu0
  %v868 = vadd.f32 %v558, %v867
  %v869 = vpop.f32.mrb[0].mxu0
  %870 = vmatprep.mubr.f32.mxu0 %v27
  %871 = vmatmul.mubr.f32.gmra.mrb[0].mxu0 %v26
  %v872 = vpop.f32.mrb[0].mxu0
  %v873 = vadd.f32 %v563, %v872
  %v874 = vpop.f32.mrb[0].mxu0
  %875 = vmatprep.mubr.f32.mxu0 %v32
  %876 = vmatmul.mubr.f32.gmra.mrb[0].mxu0 %v31
  %v877 = vpop.f32.mrb[0].mxu0
  %v878 = vadd.f32 %v568, %v877
  %v879 = vpop.f32.mrb[0].mxu0
  %880 = vmatprep.mubr.f32.mxu0 %v37
  %881 = vmatmul.mubr.f32.gmra.mrb[0].mxu0 %v36
  %v882 = vpop.f32.mrb[0].mxu0
  %v883 = vadd.f32 %v573, %v882
  %v884 = vpop.f32.mrb[0].mxu0
  %885 = vmatprep.mubr.f32.mxu0 %v42
  %886 = vmatmul.mubr.f32.gmra.mrb[0].mxu0 %v41
  %v887 = vpop.f32.mrb[0].mxu0
  %v888 = vadd.f32 %v578, %v887
  %v889 = vpop.f32.mrb[0].mxu0
  %890 = vmatprep.mubr.f32.mxu0 %v47
  %891 = vmatmul.mubr.f32.gmra.mrb[0].mxu0 %v46
  %v892 = vpop.f32.mrb[0].mxu0
  %v893 = vadd.f32 %v583, %v892
  %v894 = vpop.f32.mrb[0].mxu0
  %895 = vmatprep.mubr.f32.mxu0 %v52
  %896 = vmatmul.mubr.f32.gmra.mrb[0].mxu0 %v51
  %v897 = vpop.f32.mrb[0].mxu0
  %v898 = vadd.f32 %v588, %v897
  %v899 = vpop.f32.mrb[0].mxu0
  %900 = vmatprep.mubr.f32.mxu0 %v57
  %901 = vmatmul.mubr.f32.gmra.mrb[0].mxu0 %v56
  %v902 = vpop.f32.mrb[0].mxu0
  %v903 = vadd.f32 %v593, %v902
  %v904 = vpop.f32.mrb[0].mxu0
  %905 = vmatprep.mubr.f32.mxu0 %v62
  %906 = vmatmul.mubr.f32.gmra.mrb[0].mxu0 %v61
  %v907 = vpop.f32.mrb[0].mxu0
  %v908 = vadd.f32 %v598, %v907
  %v909 = vpop.f32.mrb[0].mxu0
  %910 = vmatprep.mubr.f32.mxu0 %v67
  %911 = vmatmul.mubr.f32.gmra.mrb[0].mxu0 %v66
  %v912 = vpop.f32.mrb[0].mxu0
  %v913 = vadd.f32 %v603, %v912
  %v914 = vpop.f32.mrb[0].mxu0
  %915 = vmatprep.mubr.f32.mxu0 %v72
  %916 = vmatmul.mubr.f32.gmra.mrb[0].mxu0 %v71
  %v917 = vpop.f32.mrb[0].mxu0
  %v918 = vadd.f32 %v608, %v917
  %v919 = vpop.f32.mrb[0].mxu0
  %920 = vmatprep.mubr.f32.mxu0 %v77
  %921 = vmatmul.mubr.f32.gmra.mrb[0].mxu0 %v76
  %v922 = vpop.f32.mrb[0].mxu0
  %v923 = vadd.f32 %v613, %v922
  %v924 = vpop.f32.mrb[0].mxu0
  %925 = vmatprep.mubr.f32.mxu0 %v82
  %926 = vmatmul.mubr.f32.gmra.mrb[0].mxu0 %v81
  %v927 = vpop.f32.mrb[0].mxu0
  %v928 = vadd.f32 %v618, %v927
  %v929 = vpop.f32.mrb[0].mxu0
  %930 = vmatprep.mubr.f32.mxu0 %v87
  %931 = vmatmul.mubr.f32.gmra.mrb[0].mxu0 %v86
  %v932 = vpop.f32.mrb[0].mxu0
  %v933 = vadd.f32 %v623, %v932
  %v934 = vpop.f32.mrb[0].mxu0
  %935 = vmatprep.mubr.f32.mxu0 %v92
  %936 = vmatmul.mubr.f32.gmra.mrb[0].mxu0 %v91
  %v937 = vpop.f32.mrb[0].mxu0
  %v938 = vadd.f32 %v628, %v937
  %v939 = vpop.f32.mrb[0].mxu0
  %940 = vmatprep.mubr.f32.mxu0 %v97
  %941 = vmatmul.mubr.f32.gmra.mrb[0].mxu0 %v96
  %v942 = vpop.f32.mrb[0].mxu0
  %v943 = vadd.f32 %v633, %v942
  %v944 = vpop.f32.mrb[0].mxu0
  %945 = vmatprep.mubr.f32.mxu0 %v102
  %946 = vmatmul.mubr.f32.gmra.mrb[0].mxu0 %v101
  %v947 = vpop.f32.mrb[0].mxu0
  %v948 = vadd.f32 %v638, %v947
  %v949 = vpop.f32.mrb[0].mxu0
  %950 = vmatprep.mubr.f32.mxu0 %v107
  %951 = vmatmul.mubr.f32.gmra.mrb[0].mxu0 %v106
  %v952 = vpop.f32.mrb[0].mxu0
  %v953 = vadd.f32 %v643, %v952
  %v954 = vpop.f32.mrb[0].mxu0
  %955 = vmatprep.mubr.f32.mxu0 %v112
  %956 = vmatmul.mubr.f32.gmra.mrb[0].mxu0 %v111
  %v957 = vpop.f32.mrb[0].mxu0
  %v958 = vadd.f32 %v648, %v957
  %v959 = vpop.f32.mrb[0].mxu0
  %960 = vmatprep.mubr.f32.mxu0 %v117
  %961 = vmatmul.mubr.f32.gmra.mrb[0].mxu0 %v116
  %v962 = vpop.f32.mrb[0].mxu0
  %v963 = vadd.f32 %v653, %v962
  %v964 = vpop.f32.mrb[0].mxu0
  %965 = vmatprep.mubr.f32.mxu0 %v122
  %966 = vmatmul.mubr.f32.gmra.mrb[0].mxu0 %v121
  %v967 = vpop.f32.mrb[0].mxu0
  %v968 = vadd.f32 %v658, %v967
  %v969 = vpop.f32.mrb[0].mxu0
  %970 = vmatprep.mubr.f32.mxu0 %v127
  %971 = vmatmul.mubr.f32.gmra.mrb[0].mxu0 %v126
  %v972 = vpop.f32.mrb[0].mxu0
  %v973 = vadd.f32 %v663, %v972
  %v974 = vpop.f32.mrb[0].mxu0
  %975 = vmatprep.mubr.f32.mxu0 %v132
  %976 = vmatmul.mubr.f32.gmra.mrb[0].mxu0 %v131
  %v977 = vpop.f32.mrb[0].mxu0
  %v978 = vadd.f32 %v668, %v977
  %v979 = vpop.f32.mrb[0].mxu0
  %980 = vmatprep.mubr.f32.mxu0 %v137
  %981 = vmatmul.mubr.f32.gmra.mrb[0].mxu0 %v136
  %v982 = vpop.f32.mrb[0].mxu0
  %v983 = vadd.f32 %v673, %v982
  %v984 = vpop.f32.mrb[0].mxu0
  %985 = vmatprep.mubr.f32.mxu0 %v142
  %986 = vmatmul.mubr.f32.gmra.mrb[0].mxu0 %v141
  %v987 = vpop.f32.mrb[0].mxu0
  %v988 = vadd.f32 %v678, %v987
  %v989 = vpop.f32.mrb[0].mxu0
  %990 = vmatprep.mubr.f32.mxu0 %v147
  %991 = vmatmul.mubr.f32.gmra.mrb[0].mxu0 %v146
  %v992 = vpop.f32.mrb[0].mxu0
  %v993 = vadd.f32 %v683, %v992
  %v994 = vpop.f32.mrb[0].mxu0
  %995 = vmatprep.mubr.f32.mxu0 %v152
  %996 = vmatmul.mubr.f32.gmra.mrb[0].mxu0 %v151
  %v997 = vpop.f32.mrb[0].mxu0
  %v998 = vadd.f32 %v688, %v997
  %v999 = vpop.f32.mrb[0].mxu0
  %1000 = vmatprep.mubr.f32.mxu0 %v157
  %1001 = vmatmul.mubr.f32.gmra.mrb[0].mxu0 %v156
  %v1002 = vpop.f32.mrb[0].mxu0
  %v1003 = vadd.f32 %v693, %v1002
  %v1004 = vpop.f32.mrb[0].mxu0
  %1005 = vmatprep.mubr.f32.mxu0 %v162
  %1006 = vmatmul.mubr.f32.gmra.mrb[0].mxu0 %v161
  %v1007 = vpop.f32.mrb[0].mxu0
  %v1008 = vadd.f32 %v698, %v1007
  %v1009 = vpop.f32.mrb[0].mxu0
  %1010 = vmatprep.mubr.f32.mxu0 %v167
  %1011 = vmatmul.mubr.f32.gmra.mrb[0].mxu0 %v166
  %v1012 = vpop.f32.mrb[0].mxu0
  %v1013 = vadd.f32 %v703, %v1012
  %v1014 = vpop.f32.mrb[0].mxu0
  %1015 = vmatprep.mubr.f32.mxu0 %v172
  %1016 = vmatmul.mubr.f32.gmra.mrb[0].mxu0 %v171
  %v1017 = vpop.f32.mrb[0].mxu0
  %v1018 = vadd.f32 %v708, %v1017
  %v1019 = vpop.f32.mrb[0].mxu0
  %1020 = vmatprep.mubr.f32.mxu0 %v177
  %1021 = vmatmul.mubr.f32.gmra.mrb[0].mxu0 %v176
  %v1022 = vpop.f32.mrb[0].mxu0
  %v1023 = vadd.f32 %v713, %v1022
  %v1024 = vpop.f32.mrb[0].mxu0
  %1025 = vmatprep.mubr.f32.mxu0 %v182
  %1026 = vmatmul.mubr.f32.gmra.mrb[0].mxu0 %v181
  %v1027 = vpop.f32.mrb[0].mxu0
  %v1028 = vadd.f32 %v718, %v1027
  %v1029 = vpop.f32.mrb[0].mxu0
  %1030 = vmatprep.mubr.f32.mxu0 %v187
  %1031 = vmatmul.mubr.f32.gmra.mrb[0].mxu0 %v186
  %v1032 = vpop.f32.mrb[0].mxu0
  %v1033 = vadd.f32 %v723, %v1032
  %v1034 = vpop.f32.mrb[0].mxu0
  %1035 = vmatprep.mubr.f32.mxu0 %v192
  %1036 = vmatmul.mubr.f32.gmra.mrb[0].mxu0 %v191
  %v1037 = vpop.f32.mrb[0].mxu0
  %v1038 = vadd.f32 %v728, %v1037
  %v1039 = vpop.f32.mrb[0].mxu0
  %1040 = vmatprep.mubr.f32.mxu0 %v197
  %1041 = vmatmul.mubr.f32.gmra.mrb[0].mxu0 %v196
  %v1042 = vpop.f32.mrb[0].mxu0
  %v1043 = vadd.f32 %v733, %v1042
  %v1044 = vpop.f32.mrb[0].mxu0
  %1045 = vmatprep.mubr.f32.mxu0 %v202
  %1046 = vmatmul.mubr.f32.gmra.mrb[0].mxu0 %v201
  %v1047 = vpop.f32.mrb[0].mxu0
  %v1048 = vadd.f32 %v738, %v1047
  %v1049 = vpop.f32.mrb[0].mxu0
  %1050 = vmatprep.mubr.f32.mxu0 %v207
  %1051 = vmatmul.mubr.f32.gmra.mrb[0].mxu0 %v206
  %v1052 = vpop.f32.mrb[0].mxu0
  %v1053 = vadd.f32 %v743, %v1052
  %v1054 = vpop.f32.mrb[0].mxu0
  %1055 = vmatprep.mubr.f32.mxu0 %v212
  %1056 = vmatmul.mubr.f32.gmra.mrb[0].mxu0 %v211
  %v1057 = vpop.f32.mrb[0].mxu0
  %v1058 = vadd.f32 %v748, %v1057
  %v1059 = vpop.f32.mrb[0].mxu0
  %1060 = vmatprep.mubr.f32.mxu0 %v217
  %1061 = vmatmul.mubr.f32.gmra.mrb[0].mxu0 %v216
  %v1062 = vpop.f32.mrb[0].mxu0
  %v1063 = vadd.f32 %v753, %v1062
  %v1064 = vpop.f32.mrb[0].mxu0
  %1065 = vmatprep.mubr.f32.mxu0 %v222
  %1066 = vmatmul.mubr.f32.gmra.mrb[0].mxu0 %v221
  %v1067 = vpop.f32.mrb[0].mxu0
  %v1068 = vadd.f32 %v758, %v1067
  %v1069 = vpop.f32.mrb[0].mxu0
  %1070 = vmatprep.mubr.f32.mxu0 %v227
  %1071 = vmatmul.mubr.f32.gmra.mrb[0].mxu0 %v226
  %v1072 = vpop.f32.mrb[0].mxu0
  %v1073 = vadd.f32 %v763, %v1072
  %v1074 = vpop.f32.mrb[0].mxu0
  %1075 = vmatprep.mubr.f32.mxu0 %v232
  %1076 = vmatmul.mubr.f32.gmra.mrb[0].mxu0 %v231
  %v1077 = vpop.f32.mrb[0].mxu0
  %v1078 = vadd.f32 %v768, %v1077
  %v1079 = vpop.f32.mrb[0].mxu0
  %1080 = vmatprep.mubr.f32.mxu0 %v237
  %1081 = vmatmul.mubr.f32.gmra.mrb[0].mxu0 %v236
  %v1082 = vpop.f32.mrb[0].mxu0
  %v1083 = vadd.f32 %v773, %v1082
  %v1084 = vpop.f32.mrb[0].mxu0
  %1085 = vmatprep.mubr.f32.mxu0 %v242
  %1086 = vmatmul.mubr.f32.gmra.mrb[0].mxu0 %v241
  %v1087 = vpop.f32.mrb[0].mxu0
  %v1088 = vadd.f32 %v778, %v1087
  %v1089 = vpop.f32.mrb[0].mxu0
  %1090 = vmatprep.mubr.f32.mxu0 %v247
  %1091 = vmatmul.mubr.f32.gmra.mrb[0].mxu0 %v246
  %v1092 = vpop.f32.mrb[0].mxu0
  %v1093 = vadd.f32 %v783, %v1092
  %v1094 = vpop.f32.mrb[0].mxu0
  %1095 = vmatprep.mubr.f32.mxu0 %v252
  %1096 = vmatmul.mubr.f32.gmra.mrb[0].mxu0 %v251
  %v1097 = vpop.f32.mrb[0].mxu0
  %v1098 = vadd.f32 %v788, %v1097
  %v1099 = vpop.f32.mrb[0].mxu0
  %1100 = vmatprep.mubr.f32.mxu0 %v257
  %1101 = vmatmul.mubr.f32.gmra.mrb[0].mxu0 %v256
  %v1102 = vpop.f32.mrb[0].mxu0
  %v1103 = vadd.f32 %v793, %v1102
  %v1104 = vpop.f32.mrb[0].mxu0
  %1105 = vdwg.mxu0
  %1106 = vmatprep.subr.mxu0 0.0
  %1107 = vmatpush1.msra.mxu0 %v323
  %1108 = vmatprep.subr.mxu0 0.0
  %1109 = vmatpush1.msra.mxu0 %v324
  %1110 = vmatprep.subr.mxu0 0.0
  %1111 = vmatpush1.msra.mxu0 %v325
  %1112 = vmatprep.subr.mxu0 0.0
  %1113 = vmatpush1.msra.mxu0 %v326
  %1114 = vmatprep.subr.mxu0 0.0
  %1115 = vmatpush1.msra.mxu0 %v327
  %1116 = vmatprep.subr.mxu0 0.0
  %1117 = vmatpush1.msra.mxu0 %v328
  %1118 = vmatprep.subr.mxu0 0.0
  %1119 = vmatpush1.msra.mxu0 %v329
  %1120 = vmatprep.subr.mxu0 0.0
  %1121 = vmatpush1.msra.mxu0 %v330
  %1122 = vmatprep.subr.mxu0 0.0
  %1123 = vmatpush1.msra.mxu0 0.0
  %1124 = vmatprep.subr.mxu0 0.0
  %1125 = vmatpush1.msra.mxu0 0.0
  %1126 = vmatprep.subr.mxu0 0.0
  %1127 = vmatpush1.msra.mxu0 0.0
  %1128 = vmatprep.subr.mxu0 0.0
  %1129 = vmatpush1.msra.mxu0 0.0
  %1130 = vmatprep.subr.mxu0 0.0
  %1131 = vmatpush1.msra.mxu0 0.0
  %1132 = vmatprep.subr.mxu0 0.0
  %1133 = vmatpush1.msra.mxu0 0.0
  %1134 = vmatprep.subr.mxu0 0.0
  %1135 = vmatpush1.msra.mxu0 0.0
  %1136 = vmatprep.subr.mxu0 0.0
  %1137 = vmatpush1.msra.mxu0 0.0
  %1138 = vmatprep.subr.mxu0 0.0
  %1139 = vmatpush1.msra.mxu0 0.0
  %1140 = vmatprep.subr.mxu0 0.0
  %1141 = vmatpush1.msra.mxu0 0.0
  %1142 = vmatprep.subr.mxu0 0.0
  %1143 = vmatpush1.msra.mxu0 0.0
  %1144 = vmatprep.subr.mxu0 0.0
  %1145 = vmatpush1.msra.mxu0 0.0
  %1146 = vmatprep.subr.mxu0 0.0
  %1147 = vmatpush1.msra.mxu0 0.0
  %1148 = vmatprep.subr.mxu0 0.0
  %1149 = vmatpush1.msra.mxu0 0.0
  %1150 = vmatprep.subr.mxu0 0.0
  %1151 = vmatpush1.msra.mxu0 0.0
  %1152 = vmatprep.subr.mxu0 0.0
  %1153 = vmatpush1.msra.mxu0 0.0
  %1154 = vmatprep.subr.mxu0 0.0
  %1155 = vmatpush1.msra.mxu0 0.0
  %1156 = vmatprep.subr.mxu0 0.0
  %1157 = vmatpush1.msra.mxu0 0.0
  %1158 = vmatprep.subr.mxu0 0.0
  %1159 = vmatpush1.msra.mxu0 0.0
  %1160 = vmatprep.subr.mxu0 0.0
  %1161 = vmatpush1.msra.mxu0 0.0
  %1162 = vmatprep.subr.mxu0 0.0
  %1163 = vmatpush1.msra.mxu0 0.0
  %1164 = vmatprep.subr.mxu0 0.0
  %1165 = vmatpush1.msra.mxu0 0.0
  %1166 = vmatprep.subr.mxu0 0.0
  %1167 = vmatpush1.msra.mxu0 0.0
  %1168 = vmatprep.subr.mxu0 0.0
  %1169 = vmatpush1.msra.mxu0 0.0
  %1170 = vmatprep.mubr.f32.mxu0 0.0
  %1171 = vmatmul.mubr.f32.gmra.mrb[0].mxu0 %v340
  %v1172 = vpop.f32.mrb[0].mxu0
  %v1173 = vadd.f32 %v863, %v1172
  %v1174 = vpop.f32.mrb[0].mxu0
  %1175 = vmatprep.mubr.f32.mxu0 0.0
  %1176 = vmatmul.mubr.f32.gmra.mrb[0].mxu0 %v343
  %v1177 = vpop.f32.mrb[0].mxu0
  %v1178 = vadd.f32 %v868, %v1177
  %v1179 = vpop.f32.mrb[0].mxu0
  %1180 = vmatprep.mubr.f32.mxu0 0.0
  %1181 = vmatmul.mubr.f32.gmra.mrb[0].mxu0 %v346
  %v1182 = vpop.f32.mrb[0].mxu0
  %v1183 = vadd.f32 %v873, %v1182
  %v1184 = vpop.f32.mrb[0].mxu0
  %1185 = vmatprep.mubr.f32.mxu0 0.0
  %1186 = vmatmul.mubr.f32.gmra.mrb[0].mxu0 %v349
  %v1187 = vpop.f32.mrb[0].mxu0
  %v1188 = vadd.f32 %v878, %v1187
  %v1189 = vpop.f32.mrb[0].mxu0
  %1190 = vmatprep.mubr.f32.mxu0 0.0
  %1191 = vmatmul.mubr.f32.gmra.mrb[0].mxu0 %v352
  %v1192 = vpop.f32.mrb[0].mxu0
  %v1193 = vadd.f32 %v883, %v1192
  %v1194 = vpop.f32.mrb[0].mxu0
  %1195 = vmatprep.mubr.f32.mxu0 0.0
  %1196 = vmatmul.mubr.f32.gmra.mrb[0].mxu0 %v355
  %v1197 = vpop.f32.mrb[0].mxu0
  %v1198 = vadd.f32 %v888, %v1197
  %v1199 = vpop.f32.mrb[0].mxu0
  %1200 = vmatprep.mubr.f32.mxu0 0.0
  %1201 = vmatmul.mubr.f32.gmra.mrb[0].mxu0 %v358
  %v1202 = vpop.f32.mrb[0].mxu0
  %v1203 = vadd.f32 %v893, %v1202
  %v1204 = vpop.f32.mrb[0].mxu0
  %1205 = vmatprep.mubr.f32.mxu0 0.0
  %1206 = vmatmul.mubr.f32.gmra.mrb[0].mxu0 %v361
  %v1207 = vpop.f32.mrb[0].mxu0
  %v1208 = vadd.f32 %v898, %v1207
  %v1209 = vpop.f32.mrb[0].mxu0
  %1210 = vmatprep.mubr.f32.mxu0 0.0
  %1211 = vmatmul.mubr.f32.gmra.mrb[0].mxu0 %v364
  %v1212 = vpop.f32.mrb[0].mxu0
  %v1213 = vadd.f32 %v903, %v1212
  %v1214 = vpop.f32.mrb[0].mxu0
  %1215 = vmatprep.mubr.f32.mxu0 0.0
  %1216 = vmatmul.mubr.f32.gmra.mrb[0].mxu0 %v367
  %v1217 = vpop.f32.mrb[0].mxu0
  %v1218 = vadd.f32 %v908, %v1217
  %v1219 = vpop.f32.mrb[0].mxu0
  %1220 = vmatprep.mubr.f32.mxu0 0.0
  %1221 = vmatmul.mubr.f32.gmra.mrb[0].mxu0 %v370
  %v1222 = vpop.f32.mrb[0].mxu0
  %v1223 = vadd.f32 %v913, %v1222
  %v1224 = vpop.f32.mrb[0].mxu0
  %1225 = vmatprep.mubr.f32.mxu0 0.0
  %1226 = vmatmul.mubr.f32.gmra.mrb[0].mxu0 %v373
  %v1227 = vpop.f32.mrb[0].mxu0
  %v1228 = vadd.f32 %v918, %v1227
  %v1229 = vpop.f32.mrb[0].mxu0
  %1230 = vmatprep.mubr.f32.mxu0 0.0
  %1231 = vmatmul.mubr.f32.gmra.mrb[0].mxu0 %v376
  %v1232 = vpop.f32.mrb[0].mxu0
  %v1233 = vadd.f32 %v923, %v1232
  %v1234 = vpop.f32.mrb[0].mxu0
  %1235 = vmatprep.mubr.f32.mxu0 0.0
  %1236 = vmatmul.mubr.f32.gmra.mrb[0].mxu0 %v379
  %v1237 = vpop.f32.mrb[0].mxu0
  %v1238 = vadd.f32 %v928, %v1237
  %v1239 = vpop.f32.mrb[0].mxu0
  %1240 = vmatprep.mubr.f32.mxu0 0.0
  %1241 = vmatmul.mubr.f32.gmra.mrb[0].mxu0 %v382
  %v1242 = vpop.f32.mrb[0].mxu0
  %v1243 = vadd.f32 %v933, %v1242
  %v1244 = vpop.f32.mrb[0].mxu0
  %1245 = vmatprep.mubr.f32.mxu0 0.0
  %1246 = vmatmul.mubr.f32.gmra.mrb[0].mxu0 %v385
  %v1247 = vpop.f32.mrb[0].mxu0
  %v1248 = vadd.f32 %v938, %v1247
  %v1249 = vpop.f32.mrb[0].mxu0
  %1250 = vmatprep.mubr.f32.mxu0 0.0
  %1251 = vmatmul.mubr.f32.gmra.mrb[0].mxu0 %v388
  %v1252 = vpop.f32.mrb[0].mxu0
  %v1253 = vadd.f32 %v943, %v1252
  %v1254 = vpop.f32.mrb[0].mxu0
  %1255 = vmatprep.mubr.f32.mxu0 0.0
  %1256 = vmatmul.mubr.f32.gmra.mrb[0].mxu0 %v391
  %v1257 = vpop.f32.mrb[0].mxu0
  %v1258 = vadd.f32 %v948, %v1257
  %v1259 = vpop.f32.mrb[0].mxu0
  %1260 = vmatprep.mubr.f32.mxu0 0.0
  %1261 = vmatmul.mubr.f32.gmra.mrb[0].mxu0 %v394
  %v1262 = vpop.f32.mrb[0].mxu0
  %v1263 = vadd.f32 %v953, %v1262
  %v1264 = vpop.f32.mrb[0].mxu0
  %1265 = vmatprep.mubr.f32.mxu0 0.0
  %1266 = vmatmul.mubr.f32.gmra.mrb[0].mxu0 %v397
  %v1267 = vpop.f32.mrb[0].mxu0
  %v1268 = vadd.f32 %v958, %v1267
  %v1269 = vpop.f32.mrb[0].mxu0
  %1270 = vmatprep.mubr.f32.mxu0 0.0
  %1271 = vmatmul.mubr.f32.gmra.mrb[0].mxu0 %v400
  %v1272 = vpop.f32.mrb[0].mxu0
  %v1273 = vadd.f32 %v963, %v1272
  %v1274 = vpop.f32.mrb[0].mxu0
  %1275 = vmatprep.mubr.f32.mxu0 0.0
  %1276 = vmatmul.mubr.f32.gmra.mrb[0].mxu0 %v403
  %v1277 = vpop.f32.mrb[0].mxu0
  %v1278 = vadd.f32 %v968, %v1277
  %v1279 = vpop.f32.mrb[0].mxu0
  %1280 = vmatprep.mubr.f32.mxu0 0.0
  %1281 = vmatmul.mubr.f32.gmra.mrb[0].mxu0 %v406
  %v1282 = vpop.f32.mrb[0].mxu0
  %v1283 = vadd.f32 %v973, %v1282
  %v1284 = vpop.f32.mrb[0].mxu0
  %1285 = vmatprep.mubr.f32.mxu0 0.0
  %1286 = vmatmul.mubr.f32.gmra.mrb[0].mxu0 %v409
  %v1287 = vpop.f32.mrb[0].mxu0
  %v1288 = vadd.f32 %v978, %v1287
  %v1289 = vpop.f32.mrb[0].mxu0
  %1290 = vmatprep.mubr.f32.mxu0 0.0
  %1291 = vmatmul.mubr.f32.gmra.mrb[0].mxu0 %v412
  %v1292 = vpop.f32.mrb[0].mxu0
  %v1293 = vadd.f32 %v983, %v1292
  %v1294 = vpop.f32.mrb[0].mxu0
  %1295 = vmatprep.mubr.f32.mxu0 0.0
  %1296 = vmatmul.mubr.f32.gmra.mrb[0].mxu0 %v415
  %v1297 = vpop.f32.mrb[0].mxu0
  %v1298 = vadd.f32 %v988, %v1297
  %v1299 = vpop.f32.mrb[0].mxu0
  %1300 = vmatprep.mubr.f32.mxu0 0.0
  %1301 = vmatmul.mubr.f32.gmra.mrb[0].mxu0 %v418
  %v1302 = vpop.f32.mrb[0].mxu0
  %v1303 = vadd.f32 %v993, %v1302
  %v1304 = vpop.f32.mrb[0].mxu0
  %1305 = vmatprep.mubr.f32.mxu0 0.0
  %1306 = vmatmul.mubr.f32.gmra.mrb[0].mxu0 %v421
  %v1307 = vpop.f32.mrb[0].mxu0
  %v1308 = vadd.f32 %v998, %v1307
  %v1309 = vpop.f32.mrb[0].mxu0
  %1310 = vmatprep.mubr.f32.mxu0 0.0
  %1311 = vmatmul.mubr.f32.gmra.mrb[0].mxu0 %v424
  %v1312 = vpop.f32.mrb[0].mxu0
  %v1313 = vadd.f32 %v1003, %v1312
  %v1314 = vpop.f32.mrb[0].mxu0
  %1315 = vmatprep.mubr.f32.mxu0 0.0
  %1316 = vmatmul.mubr.f32.gmra.mrb[0].mxu0 %v427
  %v1317 = vpop.f32.mrb[0].mxu0
  %v1318 = vadd.f32 %v1008, %v1317
  %v1319 = vpop.f32.mrb[0].mxu0
  %1320 = vmatprep.mubr.f32.mxu0 0.0
  %1321 = vmatmul.mubr.f32.gmra.mrb[0].mxu0 %v430
  %v1322 = vpop.f32.mrb[0].mxu0
  %v1323 = vadd.f32 %v1013, %v1322
  %v1324 = vpop.f32.mrb[0].mxu0
  %1325 = vmatprep.mubr.f32.mxu0 0.0
  %1326 = vmatmul.mubr.f32.gmra.mrb[0].mxu0 %v433
  %v1327 = vpop.f32.mrb[0].mxu0
  %v1328 = vadd.f32 %v1018, %v1327
  %v1329 = vpop.f32.mrb[0].mxu0
  %1330 = vmatprep.mubr.f32.mxu0 0.0
  %1331 = vmatmul.mubr.f32.gmra.mrb[0].mxu0 %v436
  %v1332 = vpop.f32.mrb[0].mxu0
  %v1333 = vadd.f32 %v1023, %v1332
  %v1334 = vpop.f32.mrb[0].mxu0
  %1335 = vmatprep.mubr.f32.mxu0 0.0
  %1336 = vmatmul.mubr.f32.gmra.mrb[0].mxu0 %v439
  %v1337 = vpop.f32.mrb[0].mxu0
  %v1338 = vadd.f32 %v1028, %v1337
  %v1339 = vpop.f32.mrb[0].mxu0
  %1340 = vmatprep.mubr.f32.mxu0 0.0
  %1341 = vmatmul.mubr.f32.gmra.mrb[0].mxu0 %v442
  %v1342 = vpop.f32.mrb[0].mxu0
  %v1343 = vadd.f32 %v1033, %v1342
  %v1344 = vpop.f32.mrb[0].mxu0
  %1345 = vmatprep.mubr.f32.mxu0 0.0
  %1346 = vmatmul.mubr.f32.gmra.mrb[0].mxu0 %v445
  %v1347 = vpop.f32.mrb[0].mxu0
  %v1348 = vadd.f32 %v1038, %v1347
  %v1349 = vpop.f32.mrb[0].mxu0
  %1350 = vmatprep.mubr.f32.mxu0 0.0
  %1351 = vmatmul.mubr.f32.gmra.mrb[0].mxu0 %v448
  %v1352 = vpop.f32.mrb[0].mxu0
  %v1353 = vadd.f32 %v1043, %v1352
  %v1354 = vpop.f32.mrb[0].mxu0
  %1355 = vmatprep.mubr.f32.mxu0 0.0
  %1356 = vmatmul.mubr.f32.gmra.mrb[0].mxu0 %v451
  %v1357 = vpop.f32.mrb[0].mxu0
  %v1358 = vadd.f32 %v1048, %v1357
  %v1359 = vpop.f32.mrb[0].mxu0
  %1360 = vmatprep.mubr.f32.mxu0 0.0
  %1361 = vmatmul.mubr.f32.gmra.mrb[0].mxu0 %v454
  %v1362 = vpop.f32.mrb[0].mxu0
  %v1363 = vadd.f32 %v1053, %v1362
  %v1364 = vpop.f32.mrb[0].mxu0
  %1365 = vmatprep.mubr.f32.mxu0 0.0
  %1366 = vmatmul.mubr.f32.gmra.mrb[0].mxu0 %v457
  %v1367 = vpop.f32.mrb[0].mxu0
  %v1368 = vadd.f32 %v1058, %v1367
  %v1369 = vpop.f32.mrb[0].mxu0
  %1370 = vmatprep.mubr.f32.mxu0 0.0
  %1371 = vmatmul.mubr.f32.gmra.mrb[0].mxu0 %v460
  %v1372 = vpop.f32.mrb[0].mxu0
  %v1373 = vadd.f32 %v1063, %v1372
  %v1374 = vpop.f32.mrb[0].mxu0
  %1375 = vmatprep.mubr.f32.mxu0 0.0
  %1376 = vmatmul.mubr.f32.gmra.mrb[0].mxu0 %v463
  %v1377 = vpop.f32.mrb[0].mxu0
  %v1378 = vadd.f32 %v1068, %v1377
  %v1379 = vpop.f32.mrb[0].mxu0
  %1380 = vmatprep.mubr.f32.mxu0 0.0
  %1381 = vmatmul.mubr.f32.gmra.mrb[0].mxu0 %v466
  %v1382 = vpop.f32.mrb[0].mxu0
  %v1383 = vadd.f32 %v1073, %v1382
  %v1384 = vpop.f32.mrb[0].mxu0
  %1385 = vmatprep.mubr.f32.mxu0 0.0
  %1386 = vmatmul.mubr.f32.gmra.mrb[0].mxu0 %v469
  %v1387 = vpop.f32.mrb[0].mxu0
  %v1388 = vadd.f32 %v1078, %v1387
  %v1389 = vpop.f32.mrb[0].mxu0
  %1390 = vmatprep.mubr.f32.mxu0 0.0
  %1391 = vmatmul.mubr.f32.gmra.mrb[0].mxu0 %v472
  %v1392 = vpop.f32.mrb[0].mxu0
  %v1393 = vadd.f32 %v1083, %v1392
  %v1394 = vpop.f32.mrb[0].mxu0
  %1395 = vmatprep.mubr.f32.mxu0 0.0
  %1396 = vmatmul.mubr.f32.gmra.mrb[0].mxu0 %v475
  %v1397 = vpop.f32.mrb[0].mxu0
  %v1398 = vadd.f32 %v1088, %v1397
  %v1399 = vpop.f32.mrb[0].mxu0
  %1400 = vmatprep.mubr.f32.mxu0 0.0
  %1401 = vmatmul.mubr.f32.gmra.mrb[0].mxu0 %v478
  %v1402 = vpop.f32.mrb[0].mxu0
  %v1403 = vadd.f32 %v1093, %v1402
  %v1404 = vpop.f32.mrb[0].mxu0
  %1405 = vmatprep.mubr.f32.mxu0 0.0
  %1406 = vmatmul.mubr.f32.gmra.mrb[0].mxu0 %v481
  %v1407 = vpop.f32.mrb[0].mxu0
  %v1408 = vadd.f32 %v1098, %v1407
  %v1409 = vpop.f32.mrb[0].mxu0
  %1410 = vmatprep.mubr.f32.mxu0 0.0
  %1411 = vmatmul.mubr.f32.gmra.mrb[0].mxu0 %v484
  %v1412 = vpop.f32.mrb[0].mxu0
  %v1413 = vadd.f32 %v1103, %v1412
  %v1414 = vpop.f32.mrb[0].mxu0
  %1415 = vdwg.mxu0
  %v1416 = vmax.f32 %v1173, 0.0
  %v1417 = vmax.f32 %v1178, 0.0
  %v1418 = vmax.f32 %v1183, 0.0
  %v1419 = vmax.f32 %v1188, 0.0
  %v1420 = vmax.f32 %v1193, 0.0
  %v1421 = vmax.f32 %v1198, 0.0
  %v1422 = vmax.f32 %v1203, 0.0
  %v1423 = vmax.f32 %v1208, 0.0
  %v1424 = vmax.f32 %v1213, 0.0
  %v1425 = vmax.f32 %v1218, 0.0
  %v1426 = vmax.f32 %v1223, 0.0
  %v1427 = vmax.f32 %v1228, 0.0
  %v1428 = vmax.f32 %v1233, 0.0
  %v1429 = vmax.f32 %v1238, 0.0
  %v1430 = vmax.f32 %v1243, 0.0
  %v1431 = vmax.f32 %v1248, 0.0
  %v1432 = vmax.f32 %v1253, 0.0
  %v1433 = vmax.f32 %v1258, 0.0
  %v1434 = vmax.f32 %v1263, 0.0
  %v1435 = vmax.f32 %v1268, 0.0
  %v1436 = vmax.f32 %v1273, 0.0
  %v1437 = vmax.f32 %v1278, 0.0
  %v1438 = vmax.f32 %v1283, 0.0
  %v1439 = vmax.f32 %v1288, 0.0
  %v1440 = vmax.f32 %v1293, 0.0
  %v1441 = vmax.f32 %v1298, 0.0
  %v1442 = vmax.f32 %v1303, 0.0
  %v1443 = vmax.f32 %v1308, 0.0
  %v1444 = vmax.f32 %v1313, 0.0
  %v1445 = vmax.f32 %v1318, 0.0
  %v1446 = vmax.f32 %v1323, 0.0
  %v1447 = vmax.f32 %v1328, 0.0
  %v1448 = vmax.f32 %v1333, 0.0
  %v1449 = vmax.f32 %v1338, 0.0
  %v1450 = vmax.f32 %v1343, 0.0
  %v1451 = vmax.f32 %v1348, 0.0
  %v1452 = vmax.f32 %v1353, 0.0
  %v1453 = vmax.f32 %v1358, 0.0
  %v1454 = vmax.f32 %v1363, 0.0
  %v1455 = vmax.f32 %v1368, 0.0
  %v1456 = vmax.f32 %v1373, 0.0
  %v1457 = vmax.f32 %v1378, 0.0
  %v1458 = vmax.f32 %v1383, 0.0
  %v1459 = vmax.f32 %v1388, 0.0
  %v1460 = vmax.f32 %v1393, 0.0
  %v1461 = vmax.f32 %v1398, 0.0
  %v1462 = vmax.f32 %v1403, 0.0
  %v1463 = vmax.f32 %v1408, 0.0
  %v1464 = vmax.f32 %v1413, 0.0
  %vm1478 = vcmask 1045504
  %v1479 = vrot.slane %v1428, 2
  %v1480 = vrot.slane %v1429, 2
  %v1481 = vsel %vm1478, %v1479, %v1480
  %v1482 = vrot.slane %v1430, 2
  %v1483 = vsel %vm1478, %v1480, %v1482
  %v1484 = vrot.slane %v1431, 2
  %v1485 = vsel %vm1478, %v1482, %v1484
  %v1486 = vrot.slane %v1432, 2
  %v1487 = vsel %vm1478, %v1484, %v1486
  %v1488 = vrot.slane %v1433, 2
  %v1489 = vsel %vm1478, %v1486, %v1488
  %v1490 = vrot.slane %v1434, 2
  %v1491 = vsel %vm1478, %v1488, %v1490
  %v1492 = vrot.slane %v1435, 2
  %v1493 = vsel %vm1478, %v1490, %v1492
  %v1494 = vrot.slane %v1436, 2
  %v1495 = vsel %vm1478, %v1492, %v1494
  %v1496 = vrot.slane %v1437, 2
  %v1497 = vsel %vm1478, %v1494, %v1496
  %v1498 = vrot.slane %v1438, 2
  %v1499 = vsel %vm1478, %v1496, %v1498
  %v1500 = vrot.slane %v1439, 2
  %v1501 = vsel %vm1478, %v1498, %v1500
  %v1502 = vrot.slane %v1440, 2
  %v1503 = vsel %vm1478, %v1500, %v1502
  %v1517 = vmax.f32 %v1416, %v1481
  %v1518 = vmax.f32 %v1417, %v1483
  %v1519 = vmax.f32 %v1418, %v1485
  %v1520 = vmax.f32 %v1419, %v1487
  %v1521 = vmax.f32 %v1420, %v1489
  %v1522 = vmax.f32 %v1421, %v1491
  %v1523 = vmax.f32 %v1422, %v1493
  %v1524 = vmax.f32 %v1423, %v1495
  %v1525 = vmax.f32 %v1424, %v1497
  %v1526 = vmax.f32 %v1425, %v1499
  %v1527 = vmax.f32 %v1426, %v1501
  %v1528 = vmax.f32 %v1427, %v1503
  %v1529 = vmax.f32 %v1428, %v1502
  %vm1542 = vcmask 1043456
  %v1543 = vrot.slane %v1440, 4
  %v1544 = vrot.slane %v1441, 4
  %v1545 = vsel %vm1542, %v1543, %v1544
  %v1546 = vrot.slane %v1442, 4
  %v1547 = vsel %vm1542, %v1544, %v1546
  %v1548 = vrot.slane %v1443, 4
  %v1549 = vsel %vm1542, %v1546, %v1548
  %v1550 = vrot.slane %v1444, 4
  %v1551 = vsel %vm1542, %v1548, %v1550
  %v1552 = vrot.slane %v1445, 4
  %v1553 = vsel %vm1542, %v1550, %v1552
  %v1554 = vrot.slane %v1446, 4
  %v1555 = vsel %vm1542, %v1552, %v1554
  %v1556 = vrot.slane %v1447, 4
  %v1557 = vsel %vm1542, %v1554, %v1556
  %v1558 = vrot.slane %v1448, 4
  %v1559 = vsel %vm1542, %v1556, %v1558
  %v1560 = vrot.slane %v1449, 4
  %v1561 = vsel %vm1542, %v1558, %v1560
  %v1562 = vrot.slane %v1450, 4
  %v1563 = vsel %vm1542, %v1560, %v1562
  %v1564 = vrot.slane %v1451, 4
  %v1565 = vsel %vm1542, %v1562, %v1564
  %v1566 = vrot.slane %v1452, 4
  %v1567 = vsel %vm1542, %v1564, %v1566
  %v1581 = vmax.f32 %v1517, %v1545
  %v1582 = vmax.f32 %v1518, %v1547
  %v1583 = vmax.f32 %v1519, %v1549
  %v1584 = vmax.f32 %v1520, %v1551
  %v1585 = vmax.f32 %v1521, %v1553
  %v1586 = vmax.f32 %v1522, %v1555
  %v1587 = vmax.f32 %v1523, %v1557
  %v1588 = vmax.f32 %v1524, %v1559
  %v1589 = vmax.f32 %v1525, %v1561
  %v1590 = vmax.f32 %v1526, %v1563
  %v1591 = vmax.f32 %v1527, %v1565
  %v1592 = vmax.f32 %v1528, %v1567
  %v1593 = vmax.f32 %v1529, %v1566
  %vm1606 = vcmask 1041408
  %v1607 = vrot.slane %v1452, 6
  %v1608 = vrot.slane %v1453, 6
  %v1609 = vsel %vm1606, %v1607, %v1608
  %v1610 = vrot.slane %v1454, 6
  %v1611 = vsel %vm1606, %v1608, %v1610
  %v1612 = vrot.slane %v1455, 6
  %v1613 = vsel %vm1606, %v1610, %v1612
  %v1614 = vrot.slane %v1456, 6
  %v1615 = vsel %vm1606, %v1612, %v1614
  %v1616 = vrot.slane %v1457, 6
  %v1617 = vsel %vm1606, %v1614, %v1616
  %v1618 = vrot.slane %v1458, 6
  %v1619 = vsel %vm1606, %v1616, %v1618
  %v1620 = vrot.slane %v1459, 6
  %v1621 = vsel %vm1606, %v1618, %v1620
  %v1622 = vrot.slane %v1460, 6
  %v1623 = vsel %vm1606, %v1620, %v1622
  %v1624 = vrot.slane %v1461, 6
  %v1625 = vsel %vm1606, %v1622, %v1624
  %v1626 = vrot.slane %v1462, 6
  %v1627 = vsel %vm1606, %v1624, %v1626
  %v1628 = vrot.slane %v1463, 6
  %v1629 = vsel %vm1606, %v1626, %v1628
  %v1630 = vrot.slane %v1464, 6
  %v1631 = vsel %vm1606, %v1628, %v1630
  %v1645 = vmax.f32 %v1581, %v1609
  %v1646 = vmax.f32 %v1582, %v1611
  %v1647 = vmax.f32 %v1583, %v1613
  %v1648 = vmax.f32 %v1584, %v1615
  %v1649 = vmax.f32 %v1585, %v1617
  %v1650 = vmax.f32 %v1586, %v1619
  %v1651 = vmax.f32 %v1587, %v1621
  %v1652 = vmax.f32 %v1588, %v1623
  %v1653 = vmax.f32 %v1589, %v1625
  %v1654 = vmax.f32 %v1590, %v1627
  %v1655 = vmax.f32 %v1591, %v1629
  %v1656 = vmax.f32 %v1592, %v1631
  %v1657 = vmax.f32 %v1593, %v1630
  %1658 = vst [vmem:[%s3] sm:$0xff] %v1645
  %1659 = vst [vmem:[%s3 + $0x8] sm:$0xff] %v1646
  %1660 = vst [vmem:[%s3 + $0x10] sm:$0xff] %v1647
  %1661 = vst [vmem:[%s3 + $0x18] sm:$0xff] %v1648
  %1662 = vst [vmem:[%s3 + $0x20] sm:$0xff] %v1649
  %1663 = vst [vmem:[%s3 + $0x28] sm:$0xff] %v1650
  %1664 = vst [vmem:[%s3 + $0x30] sm:$0xff] %v1651
  %1665 = vst [vmem:[%s3 + $0x38] sm:$0xff] %v1652
  %1666 = vst [vmem:[%s3 + $0x40] sm:$0xff] %v1653
  %1667 = vst [vmem:[%s3 + $0x48] sm:$0xff] %v1654
  %1668 = vst [vmem:[%s3 + $0x50] sm:$0xff] %v1655
  %1669 = vst [vmem:[%s3 + $0x58] sm:$0xff] %v1656
  %1670 = vst [vmem:[%s3 + $0x60] sm:$0x3] %v1657
  // Predicated region
  $region14: #{forward.5} parent=0 // pred_check
    _
  $region15: #{forward.5} parent=0 // pred_check_branch
    %1672 = sbr.rel (0) target = $region17
  $region16: #{forward.5} parent=0 // pred_region
    _
  $region17: #{forward.5} parent=0 // pred_fallthru
    _
  // Predicated region
  $region18: #{forward.5} parent=0 // pred_check
    _
  $region19: #{forward.5} parent=0 // pred_check_branch
    %1674 = sbr.rel (0) target = $region21
  $region20: #{forward.5} parent=0 // pred_region
    _
  $region21: #{forward.5} parent=0 // pred_fallthru
    _

// kernel: forward.6
$region0: #{forward.6}
  #allocation0 [shape = 'u32[]', space=smem, size = 0x4, offset = 0x4, fixed_abs, tag = 'smem constant byte address 0x4 - core index']
  #allocation1 [shape = 'u32[144,128]{1,0:T(1,128)}', space=vmem, size = 0x12000, scoped, tag = 'internal scratch']
  %s0 = inlined_call_operand.vmem [shape: f32[128,1152], index: 0, kind: input, shape index: {}]
  %s1 = inlined_call_operand.vmem [shape: f32[1152,128], index: 1, kind: input, shape index: {}]
  %s2 = inlined_call_operand.vmem [shape: f32[1,128], index: 2, kind: input, shape index: {}]
  %s3 = inlined_call_operand.vmem [shape: f32[32,128], index: 3, kind: output, shape index: {}]
  %s4 = sld [smem:[#allocation0]]
  $region22: #{forward.6} parent=0
    _
  %s6 = ssub.s32 1, %s4
  %s7 = scalar_select 0, %s6, %s4
  // Predicated region
  $region2: #{forward.6} parent=0 // pred_check
    _
  $region3: #{forward.6} parent=0 // pred_check_branch
    %9 = sbr.rel (0) target = $region5
  $region4: #{forward.6} parent=0 // pred_region
    _
  $region5: #{forward.6} parent=0 // pred_fallthru
    _
  // Predicated region
  $region6: #{forward.6} parent=0 // pred_check
    _
  $region7: #{forward.6} parent=0 // pred_check_branch
    %11 = sbr.rel (0) target = $region9
  $region8: #{forward.6} parent=0 // pred_region
    _
  $region9: #{forward.6} parent=0 // pred_fallthru
    _
  // Predicated region
  $region10: #{forward.6} parent=0 // pred_check
    _
  $region11: #{forward.6} parent=0 // pred_check_branch
    %13 = sbr.rel (0) target = $region13
  $region12: #{forward.6} parent=0 // pred_region
    _
  $region13: #{forward.6} parent=0 // pred_fallthru
    _
  %v14 = vld [vmem:[%s0] sm:$0xff]
  %v15 = vld [vmem:[%s0 + $0x8] sm:$0xff]
  %v16 = vld [vmem:[%s0 + $0x10] sm:$0xff]
  %v17 = vld [vmem:[%s0 + $0x18] sm:$0xff]
  %v18 = vld [vmem:[%s0 + $0x20] sm:$0xff]
  %v19 = vld [vmem:[%s0 + $0x28] sm:$0xff]
  %v20 = vld [vmem:[%s0 + $0x30] sm:$0xff]
  %v21 = vld [vmem:[%s0 + $0x38] sm:$0xff]
  %v22 = vld [vmem:[%s0 + $0x40] sm:$0xff]
  %v23 = vld [vmem:[%s0 + $0x48] sm:$0xff]
  %v24 = vld [vmem:[%s0 + $0x50] sm:$0xff]
  %v25 = vld [vmem:[%s0 + $0x58] sm:$0xff]
  %v26 = vld [vmem:[%s0 + $0x60] sm:$0xff]
  %v27 = vld [vmem:[%s0 + $0x68] sm:$0xff]
  %v28 = vld [vmem:[%s0 + $0x70] sm:$0xff]
  %v29 = vld [vmem:[%s0 + $0x78] sm:$0xff]
  %v30 = vld [vmem:[%s0 + $0x80] sm:$0xff]
  %v31 = vld [vmem:[%s0 + $0x88] sm:$0xff]
  %v32 = vld [vmem:[%s0 + $0x90] sm:$0xff]
  %v33 = vld [vmem:[%s0 + $0x98] sm:$0xff]
  %v34 = vld [vmem:[%s0 + $0xa0] sm:$0xff]
  %v35 = vld [vmem:[%s0 + $0xa8] sm:$0xff]
  %v36 = vld [vmem:[%s0 + $0xb0] sm:$0xff]
  %v37 = vld [vmem:[%s0 + $0xb8] sm:$0xff]
  %v38 = vld [vmem:[%s0 + $0xc0] sm:$0xff]
  %v39 = vld [vmem:[%s0 + $0xc8] sm:$0xff]
  %v40 = vld [vmem:[%s0 + $0xd0] sm:$0xff]
  %v41 = vld [vmem:[%s0 + $0xd8] sm:$0xff]
  %v42 = vld [vmem:[%s0 + $0xe0] sm:$0xff]
  %v43 = vld [vmem:[%s0 + $0xe8] sm:$0xff]
  %v44 = vld [vmem:[%s0 + $0xf0] sm:$0xff]
  %v45 = vld [vmem:[%s0 + $0xf8] sm:$0xff]
  %v46 = vld [vmem:[%s0 + $0x100] sm:$0xff]
  %v47 = vld [vmem:[%s0 + $0x108] sm:$0xff]
  %v48 = vld [vmem:[%s0 + $0x110] sm:$0xff]
  %v49 = vld [vmem:[%s0 + $0x118] sm:$0xff]
  %v50 = vld [vmem:[%s0 + $0x120] sm:$0xff]
  %v51 = vld [vmem:[%s0 + $0x128] sm:$0xff]
  %v52 = vld [vmem:[%s0 + $0x130] sm:$0xff]
  %v53 = vld [vmem:[%s0 + $0x138] sm:$0xff]
  %v54 = vld [vmem:[%s0 + $0x140] sm:$0xff]
  %v55 = vld [vmem:[%s0 + $0x148] sm:$0xff]
  %v56 = vld [vmem:[%s0 + $0x150] sm:$0xff]
  %v57 = vld [vmem:[%s0 + $0x158] sm:$0xff]
  %v58 = vld [vmem:[%s0 + $0x160] sm:$0xff]
  %v59 = vld [vmem:[%s0 + $0x168] sm:$0xff]
  %v60 = vld [vmem:[%s0 + $0x170] sm:$0xff]
  %v61 = vld [vmem:[%s0 + $0x178] sm:$0xff]
  %v62 = vld [vmem:[%s0 + $0x180] sm:$0xff]
  %v63 = vld [vmem:[%s0 + $0x188] sm:$0xff]
  %v64 = vld [vmem:[%s0 + $0x190] sm:$0xff]
  %v65 = vld [vmem:[%s0 + $0x198] sm:$0xff]
  %v66 = vld [vmem:[%s0 + $0x1a0] sm:$0xff]
  %v67 = vld [vmem:[%s0 + $0x1a8] sm:$0xff]
  %v68 = vld [vmem:[%s0 + $0x1b0] sm:$0xff]
  %v69 = vld [vmem:[%s0 + $0x1b8] sm:$0xff]
  %v70 = vld [vmem:[%s0 + $0x1c0] sm:$0xff]
  %v71 = vld [vmem:[%s0 + $0x1c8] sm:$0xff]
  %v72 = vld [vmem:[%s0 + $0x1d0] sm:$0xff]
  %v73 = vld [vmem:[%s0 + $0x1d8] sm:$0xff]
  %v74 = vld [vmem:[%s0 + $0x1e0] sm:$0xff]
  %v75 = vld [vmem:[%s0 + $0x1e8] sm:$0xff]
  %v76 = vld [vmem:[%s0 + $0x1f0] sm:$0xff]
  %v77 = vld [vmem:[%s0 + $0x1f8] sm:$0xff]
  %v78 = vld [vmem:[%s0 + $0x200] sm:$0xff]
  %v79 = vld [vmem:[%s0 + $0x208] sm:$0xff]
  %v80 = vld [vmem:[%s0 + $0x210] sm:$0xff]
  %v81 = vld [vmem:[%s0 + $0x218] sm:$0xff]
  %v82 = vld [vmem:[%s0 + $0x220] sm:$0xff]
  %v83 = vld [vmem:[%s0 + $0x228] sm:$0xff]
  %v84 = vld [vmem:[%s0 + $0x230] sm:$0xff]
  %v85 = vld [vmem:[%s0 + $0x238] sm:$0xff]
  %v86 = vld [vmem:[%s0 + $0x240] sm:$0xff]
  %v87 = vld [vmem:[%s0 + $0x248] sm:$0xff]
  %v88 = vld [vmem:[%s0 + $0x250] sm:$0xff]
  %v89 = vld [vmem:[%s0 + $0x258] sm:$0xff]
  %v90 = vld [vmem:[%s0 + $0x260] sm:$0xff]
  %v91 = vld [vmem:[%s0 + $0x268] sm:$0xff]
  %v92 = vld [vmem:[%s0 + $0x270] sm:$0xff]
  %v93 = vld [vmem:[%s0 + $0x278] sm:$0xff]
  %v94 = vld [vmem:[%s0 + $0x280] sm:$0xff]
  %v95 = vld [vmem:[%s0 + $0x288] sm:$0xff]
  %v96 = vld [vmem:[%s0 + $0x290] sm:$0xff]
  %v97 = vld [vmem:[%s0 + $0x298] sm:$0xff]
  %v98 = vld [vmem:[%s0 + $0x2a0] sm:$0xff]
  %v99 = vld [vmem:[%s0 + $0x2a8] sm:$0xff]
  %v100 = vld [vmem:[%s0 + $0x2b0] sm:$0xff]
  %v101 = vld [vmem:[%s0 + $0x2b8] sm:$0xff]
  %v102 = vld [vmem:[%s0 + $0x2c0] sm:$0xff]
  %v103 = vld [vmem:[%s0 + $0x2c8] sm:$0xff]
  %v104 = vld [vmem:[%s0 + $0x2d0] sm:$0xff]
  %v105 = vld [vmem:[%s0 + $0x2d8] sm:$0xff]
  %v106 = vld [vmem:[%s0 + $0x2e0] sm:$0xff]
  %v107 = vld [vmem:[%s0 + $0x2e8] sm:$0xff]
  %v108 = vld [vmem:[%s0 + $0x2f0] sm:$0xff]
  %v109 = vld [vmem:[%s0 + $0x2f8] sm:$0xff]
  %v110 = vld [vmem:[%s0 + $0x300] sm:$0xff]
  %v111 = vld [vmem:[%s0 + $0x308] sm:$0xff]
  %v112 = vld [vmem:[%s0 + $0x310] sm:$0xff]
  %v113 = vld [vmem:[%s0 + $0x318] sm:$0xff]
  %v114 = vld [vmem:[%s0 + $0x320] sm:$0xff]
  %v115 = vld [vmem:[%s0 + $0x328] sm:$0xff]
  %v116 = vld [vmem:[%s0 + $0x330] sm:$0xff]
  %v117 = vld [vmem:[%s0 + $0x338] sm:$0xff]
  %v118 = vld [vmem:[%s0 + $0x340] sm:$0xff]
  %v119 = vld [vmem:[%s0 + $0x348] sm:$0xff]
  %v120 = vld [vmem:[%s0 + $0x350] sm:$0xff]
  %v121 = vld [vmem:[%s0 + $0x358] sm:$0xff]
  %v122 = vld [vmem:[%s0 + $0x360] sm:$0xff]
  %v123 = vld [vmem:[%s0 + $0x368] sm:$0xff]
  %v124 = vld [vmem:[%s0 + $0x370] sm:$0xff]
  %v125 = vld [vmem:[%s0 + $0x378] sm:$0xff]
  %v126 = vld [vmem:[%s0 + $0x380] sm:$0xff]
  %v127 = vld [vmem:[%s0 + $0x388] sm:$0xff]
  %v128 = vld [vmem:[%s0 + $0x390] sm:$0xff]
  %v129 = vld [vmem:[%s0 + $0x398] sm:$0xff]
  %v130 = vld [vmem:[%s0 + $0x3a0] sm:$0xff]
  %v131 = vld [vmem:[%s0 + $0x3a8] sm:$0xff]
  %v132 = vld [vmem:[%s0 + $0x3b0] sm:$0xff]
  %v133 = vld [vmem:[%s0 + $0x3b8] sm:$0xff]
  %v134 = vld [vmem:[%s0 + $0x3c0] sm:$0xff]
  %v135 = vld [vmem:[%s0 + $0x3c8] sm:$0xff]
  %v136 = vld [vmem:[%s0 + $0x3d0] sm:$0xff]
  %v137 = vld [vmem:[%s0 + $0x3d8] sm:$0xff]
  %v138 = vld [vmem:[%s0 + $0x3e0] sm:$0xff]
  %v139 = vld [vmem:[%s0 + $0x3e8] sm:$0xff]
  %v140 = vld [vmem:[%s0 + $0x3f0] sm:$0xff]
  %v141 = vld [vmem:[%s0 + $0x3f8] sm:$0xff]
  %v142 = vld [vmem:[%s0 + $0x400] sm:$0xff]
  %v143 = vld [vmem:[%s0 + $0x408] sm:$0xff]
  %v144 = vld [vmem:[%s0 + $0x410] sm:$0xff]
  %v145 = vld [vmem:[%s0 + $0x418] sm:$0xff]
  %v146 = vld [vmem:[%s0 + $0x420] sm:$0xff]
  %v147 = vld [vmem:[%s0 + $0x428] sm:$0xff]
  %v148 = vld [vmem:[%s0 + $0x430] sm:$0xff]
  %v149 = vld [vmem:[%s0 + $0x438] sm:$0xff]
  %v150 = vld [vmem:[%s0 + $0x440] sm:$0xff]
  %v151 = vld [vmem:[%s0 + $0x448] sm:$0xff]
  %v152 = vld [vmem:[%s0 + $0x450] sm:$0xff]
  %v153 = vld [vmem:[%s0 + $0x458] sm:$0xff]
  %v154 = vld [vmem:[%s0 + $0x460] sm:$0xff]
  %v155 = vld [vmem:[%s0 + $0x468] sm:$0xff]
  %v156 = vld [vmem:[%s0 + $0x470] sm:$0xff]
  %v157 = vld [vmem:[%s0 + $0x478] sm:$0xff]
  %v158 = vld [vmem:[%s1] sm:$0xff]
  %v159 = vld [vmem:[%s1 + $0x8] sm:$0xff]
  %v160 = vld [vmem:[%s1 + $0x10] sm:$0xff]
  %v161 = vld [vmem:[%s1 + $0x18] sm:$0xff]
  %v162 = vld [vmem:[%s1 + $0x20] sm:$0xff]
  %v163 = vld [vmem:[%s1 + $0x28] sm:$0xff]
  %v164 = vld [vmem:[%s1 + $0x30] sm:$0xff]
  %v165 = vld [vmem:[%s1 + $0x38] sm:$0xff]
  %v166 = vld [vmem:[%s1 + $0x40] sm:$0xff]
  %v167 = vld [vmem:[%s1 + $0x48] sm:$0xff]
  %v168 = vld [vmem:[%s1 + $0x50] sm:$0xff]
  %v169 = vld [vmem:[%s1 + $0x58] sm:$0xff]
  %v170 = vld [vmem:[%s1 + $0x60] sm:$0xff]
  %v171 = vld [vmem:[%s1 + $0x68] sm:$0xff]
  %v172 = vld [vmem:[%s1 + $0x70] sm:$0xff]
  %v173 = vld [vmem:[%s1 + $0x78] sm:$0xff]
  %v174 = vld [vmem:[%s1 + $0x80] sm:$0xff]
  %v175 = vld [vmem:[%s1 + $0x88] sm:$0xff]
  %v176 = vld [vmem:[%s1 + $0x90] sm:$0xff]
  %v177 = vld [vmem:[%s1 + $0x98] sm:$0xff]
  %v178 = vld [vmem:[%s1 + $0xa0] sm:$0xff]
  %v179 = vld [vmem:[%s1 + $0xa8] sm:$0xff]
  %v180 = vld [vmem:[%s1 + $0xb0] sm:$0xff]
  %v181 = vld [vmem:[%s1 + $0xb8] sm:$0xff]
  %v182 = vld [vmem:[%s1 + $0xc0] sm:$0xff]
  %v183 = vld [vmem:[%s1 + $0xc8] sm:$0xff]
  %v184 = vld [vmem:[%s1 + $0xd0] sm:$0xff]
  %v185 = vld [vmem:[%s1 + $0xd8] sm:$0xff]
  %v186 = vld [vmem:[%s1 + $0xe0] sm:$0xff]
  %v187 = vld [vmem:[%s1 + $0xe8] sm:$0xff]
  %v188 = vld [vmem:[%s1 + $0xf0] sm:$0xff]
  %v189 = vld [vmem:[%s1 + $0xf8] sm:$0xff]
  %v190 = vld [vmem:[%s1 + $0x100] sm:$0xff]
  %v191 = vld [vmem:[%s1 + $0x108] sm:$0xff]
  %v192 = vld [vmem:[%s1 + $0x110] sm:$0xff]
  %v193 = vld [vmem:[%s1 + $0x118] sm:$0xff]
  %v194 = vld [vmem:[%s1 + $0x120] sm:$0xff]
  %v195 = vld [vmem:[%s1 + $0x128] sm:$0xff]
  %v196 = vld [vmem:[%s1 + $0x130] sm:$0xff]
  %v197 = vld [vmem:[%s1 + $0x138] sm:$0xff]
  %v198 = vld [vmem:[%s1 + $0x140] sm:$0xff]
  %v199 = vld [vmem:[%s1 + $0x148] sm:$0xff]
  %v200 = vld [vmem:[%s1 + $0x150] sm:$0xff]
  %v201 = vld [vmem:[%s1 + $0x158] sm:$0xff]
  %v202 = vld [vmem:[%s1 + $0x160] sm:$0xff]
  %v203 = vld [vmem:[%s1 + $0x168] sm:$0xff]
  %v204 = vld [vmem:[%s1 + $0x170] sm:$0xff]
  %v205 = vld [vmem:[%s1 + $0x178] sm:$0xff]
  %v206 = vld [vmem:[%s1 + $0x180] sm:$0xff]
  %v207 = vld [vmem:[%s1 + $0x188] sm:$0xff]
  %v208 = vld [vmem:[%s1 + $0x190] sm:$0xff]
  %v209 = vld [vmem:[%s1 + $0x198] sm:$0xff]
  %v210 = vld [vmem:[%s1 + $0x1a0] sm:$0xff]
  %v211 = vld [vmem:[%s1 + $0x1a8] sm:$0xff]
  %v212 = vld [vmem:[%s1 + $0x1b0] sm:$0xff]
  %v213 = vld [vmem:[%s1 + $0x1b8] sm:$0xff]
  %v214 = vld [vmem:[%s1 + $0x1c0] sm:$0xff]
  %v215 = vld [vmem:[%s1 + $0x1c8] sm:$0xff]
  %v216 = vld [vmem:[%s1 + $0x1d0] sm:$0xff]
  %v217 = vld [vmem:[%s1 + $0x1d8] sm:$0xff]
  %v218 = vld [vmem:[%s1 + $0x1e0] sm:$0xff]
  %v219 = vld [vmem:[%s1 + $0x1e8] sm:$0xff]
  %v220 = vld [vmem:[%s1 + $0x1f0] sm:$0xff]
  %v221 = vld [vmem:[%s1 + $0x1f8] sm:$0xff]
  %v222 = vld [vmem:[%s1 + $0x200] sm:$0xff]
  %v223 = vld [vmem:[%s1 + $0x208] sm:$0xff]
  %v224 = vld [vmem:[%s1 + $0x210] sm:$0xff]
  %v225 = vld [vmem:[%s1 + $0x218] sm:$0xff]
  %v226 = vld [vmem:[%s1 + $0x220] sm:$0xff]
  %v227 = vld [vmem:[%s1 + $0x228] sm:$0xff]
  %v228 = vld [vmem:[%s1 + $0x230] sm:$0xff]
  %v229 = vld [vmem:[%s1 + $0x238] sm:$0xff]
  %v230 = vld [vmem:[%s1 + $0x240] sm:$0xff]
  %v231 = vld [vmem:[%s1 + $0x248] sm:$0xff]
  %v232 = vld [vmem:[%s1 + $0x250] sm:$0xff]
  %v233 = vld [vmem:[%s1 + $0x258] sm:$0xff]
  %v234 = vld [vmem:[%s1 + $0x260] sm:$0xff]
  %v235 = vld [vmem:[%s1 + $0x268] sm:$0xff]
  %v236 = vld [vmem:[%s1 + $0x270] sm:$0xff]
  %v237 = vld [vmem:[%s1 + $0x278] sm:$0xff]
  %v238 = vld [vmem:[%s1 + $0x280] sm:$0xff]
  %v239 = vld [vmem:[%s1 + $0x288] sm:$0xff]
  %v240 = vld [vmem:[%s1 + $0x290] sm:$0xff]
  %v241 = vld [vmem:[%s1 + $0x298] sm:$0xff]
  %v242 = vld [vmem:[%s1 + $0x2a0] sm:$0xff]
  %v243 = vld [vmem:[%s1 + $0x2a8] sm:$0xff]
  %v244 = vld [vmem:[%s1 + $0x2b0] sm:$0xff]
  %v245 = vld [vmem:[%s1 + $0x2b8] sm:$0xff]
  %v246 = vld [vmem:[%s1 + $0x2c0] sm:$0xff]
  %v247 = vld [vmem:[%s1 + $0x2c8] sm:$0xff]
  %v248 = vld [vmem:[%s1 + $0x2d0] sm:$0xff]
  %v249 = vld [vmem:[%s1 + $0x2d8] sm:$0xff]
  %v250 = vld [vmem:[%s1 + $0x2e0] sm:$0xff]
  %v251 = vld [vmem:[%s1 + $0x2e8] sm:$0xff]
  %v252 = vld [vmem:[%s1 + $0x2f0] sm:$0xff]
  %v253 = vld [vmem:[%s1 + $0x2f8] sm:$0xff]
  %v254 = vld [vmem:[%s1 + $0x300] sm:$0xff]
  %v255 = vld [vmem:[%s1 + $0x308] sm:$0xff]
  %v256 = vld [vmem:[%s1 + $0x310] sm:$0xff]
  %v257 = vld [vmem:[%s1 + $0x318] sm:$0xff]
  %v258 = vld [vmem:[%s1 + $0x320] sm:$0xff]
  %v259 = vld [vmem:[%s1 + $0x328] sm:$0xff]
  %v260 = vld [vmem:[%s1 + $0x330] sm:$0xff]
  %v261 = vld [vmem:[%s1 + $0x338] sm:$0xff]
  %v262 = vld [vmem:[%s1 + $0x340] sm:$0xff]
  %v263 = vld [vmem:[%s1 + $0x348] sm:$0xff]
  %v264 = vld [vmem:[%s1 + $0x350] sm:$0xff]
  %v265 = vld [vmem:[%s1 + $0x358] sm:$0xff]
  %v266 = vld [vmem:[%s1 + $0x360] sm:$0xff]
  %v267 = vld [vmem:[%s1 + $0x368] sm:$0xff]
  %v268 = vld [vmem:[%s1 + $0x370] sm:$0xff]
  %v269 = vld [vmem:[%s1 + $0x378] sm:$0xff]
  %v270 = vld [vmem:[%s1 + $0x380] sm:$0xff]
  %v271 = vld [vmem:[%s1 + $0x388] sm:$0xff]
  %v272 = vld [vmem:[%s1 + $0x390] sm:$0xff]
  %v273 = vld [vmem:[%s1 + $0x398] sm:$0xff]
  %v274 = vld [vmem:[%s1 + $0x3a0] sm:$0xff]
  %v275 = vld [vmem:[%s1 + $0x3a8] sm:$0xff]
  %v276 = vld [vmem:[%s1 + $0x3b0] sm:$0xff]
  %v277 = vld [vmem:[%s1 + $0x3b8] sm:$0xff]
  %v278 = vld [vmem:[%s1 + $0x3c0] sm:$0xff]
  %v279 = vld [vmem:[%s1 + $0x3c8] sm:$0xff]
  %v280 = vld [vmem:[%s1 + $0x3d0] sm:$0xff]
  %v281 = vld [vmem:[%s1 + $0x3d8] sm:$0xff]
  %v282 = vld [vmem:[%s1 + $0x3e0] sm:$0xff]
  %v283 = vld [vmem:[%s1 + $0x3e8] sm:$0xff]
  %v284 = vld [vmem:[%s1 + $0x3f0] sm:$0xff]
  %v285 = vld [vmem:[%s1 + $0x3f8] sm:$0xff]
  %v286 = vld [vmem:[%s1 + $0x400] sm:$0xff]
  %v287 = vld [vmem:[%s1 + $0x408] sm:$0xff]
  %v288 = vld [vmem:[%s1 + $0x410] sm:$0xff]
  %v289 = vld [vmem:[%s1 + $0x418] sm:$0xff]
  %v290 = vld [vmem:[%s1 + $0x420] sm:$0xff]
  %v291 = vld [vmem:[%s1 + $0x428] sm:$0xff]
  %v292 = vld [vmem:[%s1 + $0x430] sm:$0xff]
  %v293 = vld [vmem:[%s1 + $0x438] sm:$0xff]
  %v294 = vld [vmem:[%s1 + $0x440] sm:$0xff]
  %v295 = vld [vmem:[%s1 + $0x448] sm:$0xff]
  %v296 = vld [vmem:[%s1 + $0x450] sm:$0xff]
  %v297 = vld [vmem:[%s1 + $0x458] sm:$0xff]
  %v298 = vld [vmem:[%s1 + $0x460] sm:$0xff]
  %v299 = vld [vmem:[%s1 + $0x468] sm:$0xff]
  %v300 = vld [vmem:[%s1 + $0x470] sm:$0xff]
  %v301 = vld [vmem:[%s1 + $0x478] sm:$0xff]
  %v302 = vld [vmem:[%s2] sm:$0x1]
  %v304 = vlaneseq
  %v305 = vshrl.u32 %v304, 7
  %v306 = vsub.s32 0, %v305
  %v307 = vrot.slane %v302, %v306
  %309 = vmatprep.subr.mxu0 0.0
  %310 = vmatpush1.msra.mxu0 %v158
  %311 = vmatprep.subr.mxu0 0.0
  %312 = vmatpush1.msra.mxu0 %v159
  %313 = vmatprep.subr.mxu0 0.0
  %314 = vmatpush1.msra.mxu0 %v160
  %315 = vmatprep.subr.mxu0 0.0
  %316 = vmatpush1.msra.mxu0 %v161
  %317 = vmatprep.subr.mxu0 0.0
  %318 = vmatpush1.msra.mxu0 %v162
  %319 = vmatprep.subr.mxu0 0.0
  %320 = vmatpush1.msra.mxu0 %v163
  %321 = vmatprep.subr.mxu0 0.0
  %322 = vmatpush1.msra.mxu0 %v164
  %323 = vmatprep.subr.mxu0 0.0
  %324 = vmatpush1.msra.mxu0 %v165
  %325 = vmatprep.subr.mxu0 0.0
  %326 = vmatpush1.msra.mxu0 %v166
  %327 = vmatprep.subr.mxu0 0.0
  %328 = vmatpush1.msra.mxu0 %v167
  %329 = vmatprep.subr.mxu0 0.0
  %330 = vmatpush1.msra.mxu0 %v168
  %331 = vmatprep.subr.mxu0 0.0
  %332 = vmatpush1.msra.mxu0 %v169
  %333 = vmatprep.subr.mxu0 0.0
  %334 = vmatpush1.msra.mxu0 %v170
  %335 = vmatprep.subr.mxu0 0.0
  %336 = vmatpush1.msra.mxu0 %v171
  %337 = vmatprep.subr.mxu0 0.0
  %338 = vmatpush1.msra.mxu0 %v172
  %339 = vmatprep.subr.mxu0 0.0
  %340 = vmatpush1.msra.mxu0 %v173
  %341 = vmatprep.subr.mxu0 0.0
  %342 = vmatpush1.msra.mxu0 %v174
  %343 = vmatprep.subr.mxu0 0.0
  %344 = vmatpush1.msra.mxu0 %v175
  %345 = vmatprep.subr.mxu0 0.0
  %346 = vmatpush1.msra.mxu0 %v176
  %347 = vmatprep.subr.mxu0 0.0
  %348 = vmatpush1.msra.mxu0 %v177
  %349 = vmatprep.subr.mxu0 0.0
  %350 = vmatpush1.msra.mxu0 %v178
  %351 = vmatprep.subr.mxu0 0.0
  %352 = vmatpush1.msra.mxu0 %v179
  %353 = vmatprep.subr.mxu0 0.0
  %354 = vmatpush1.msra.mxu0 %v180
  %355 = vmatprep.subr.mxu0 0.0
  %356 = vmatpush1.msra.mxu0 %v181
  %357 = vmatprep.subr.mxu0 0.0
  %358 = vmatpush1.msra.mxu0 %v182
  %359 = vmatprep.subr.mxu0 0.0
  %360 = vmatpush1.msra.mxu0 %v183
  %361 = vmatprep.subr.mxu0 0.0
  %362 = vmatpush1.msra.mxu0 %v184
  %363 = vmatprep.subr.mxu0 0.0
  %364 = vmatpush1.msra.mxu0 %v185
  %365 = vmatprep.subr.mxu0 0.0
  %366 = vmatpush1.msra.mxu0 %v186
  %367 = vmatprep.subr.mxu0 0.0
  %368 = vmatpush1.msra.mxu0 %v187
  %369 = vmatprep.subr.mxu0 0.0
  %370 = vmatpush1.msra.mxu0 %v188
  %371 = vmatprep.subr.mxu0 0.0
  %372 = vmatpush1.msra.mxu0 %v189
  %373 = vmatprep.mubr.f32.mxu0 %v15
  %374 = vmatmul.mubr.f32.gmra.mrb[0].mxu0 %v14
  %v375 = vpop.f32.mrb[0].mxu0
  %v376 = vadd.f32 %v307, %v375
  %v377 = vpop.f32.mrb[0].mxu0
  %378 = vmatprep.mubr.f32.mxu0 %v24
  %379 = vmatmul.mubr.f32.gmra.mrb[0].mxu0 %v23
  %v380 = vpop.f32.mrb[0].mxu0
  %v381 = vadd.f32 %v307, %v380
  %v382 = vpop.f32.mrb[0].mxu0
  %383 = vmatprep.mubr.f32.mxu0 %v33
  %384 = vmatmul.mubr.f32.gmra.mrb[0].mxu0 %v32
  %v385 = vpop.f32.mrb[0].mxu0
  %v386 = vadd.f32 %v307, %v385
  %v387 = vpop.f32.mrb[0].mxu0
  %388 = vmatprep.mubr.f32.mxu0 %v42
  %389 = vmatmul.mubr.f32.gmra.mrb[0].mxu0 %v41
  %v390 = vpop.f32.mrb[0].mxu0
  %v391 = vadd.f32 %v307, %v390
  %v392 = vpop.f32.mrb[0].mxu0
  %393 = vmatprep.mubr.f32.mxu0 %v51
  %394 = vmatmul.mubr.f32.gmra.mrb[0].mxu0 %v50
  %v395 = vpop.f32.mrb[0].mxu0
  %v396 = vadd.f32 %v307, %v395
  %v397 = vpop.f32.mrb[0].mxu0
  %398 = vmatprep.mubr.f32.mxu0 %v60
  %399 = vmatmul.mubr.f32.gmra.mrb[0].mxu0 %v59
  %v400 = vpop.f32.mrb[0].mxu0
  %v401 = vadd.f32 %v307, %v400
  %v402 = vpop.f32.mrb[0].mxu0
  %403 = vmatprep.mubr.f32.mxu0 %v69
  %404 = vmatmul.mubr.f32.gmra.mrb[0].mxu0 %v68
  %v405 = vpop.f32.mrb[0].mxu0
  %v406 = vadd.f32 %v307, %v405
  %v407 = vpop.f32.mrb[0].mxu0
  %408 = vmatprep.mubr.f32.mxu0 %v78
  %409 = vmatmul.mubr.f32.gmra.mrb[0].mxu0 %v77
  %v410 = vpop.f32.mrb[0].mxu0
  %v411 = vadd.f32 %v307, %v410
  %v412 = vpop.f32.mrb[0].mxu0
  %413 = vmatprep.mubr.f32.mxu0 %v87
  %414 = vmatmul.mubr.f32.gmra.mrb[0].mxu0 %v86
  %v415 = vpop.f32.mrb[0].mxu0
  %v416 = vadd.f32 %v307, %v415
  %v417 = vpop.f32.mrb[0].mxu0
  %418 = vmatprep.mubr.f32.mxu0 %v96
  %419 = vmatmul.mubr.f32.gmra.mrb[0].mxu0 %v95
  %v420 = vpop.f32.mrb[0].mxu0
  %v421 = vadd.f32 %v307, %v420
  %v422 = vpop.f32.mrb[0].mxu0
  %423 = vmatprep.mubr.f32.mxu0 %v105
  %424 = vmatmul.mubr.f32.gmra.mrb[0].mxu0 %v104
  %v425 = vpop.f32.mrb[0].mxu0
  %v426 = vadd.f32 %v307, %v425
  %v427 = vpop.f32.mrb[0].mxu0
  %428 = vmatprep.mubr.f32.mxu0 %v114
  %429 = vmatmul.mubr.f32.gmra.mrb[0].mxu0 %v113
  %v430 = vpop.f32.mrb[0].mxu0
  %v431 = vadd.f32 %v307, %v430
  %v432 = vpop.f32.mrb[0].mxu0
  %433 = vmatprep.mubr.f32.mxu0 %v123
  %434 = vmatmul.mubr.f32.gmra.mrb[0].mxu0 %v122
  %v435 = vpop.f32.mrb[0].mxu0
  %v436 = vadd.f32 %v307, %v435
  %v437 = vpop.f32.mrb[0].mxu0
  %438 = vmatprep.mubr.f32.mxu0 %v132
  %439 = vmatmul.mubr.f32.gmra.mrb[0].mxu0 %v131
  %v440 = vpop.f32.mrb[0].mxu0
  %v441 = vadd.f32 %v307, %v440
  %v442 = vpop.f32.mrb[0].mxu0
  %443 = vmatprep.mubr.f32.mxu0 %v141
  %444 = vmatmul.mubr.f32.gmra.mrb[0].mxu0 %v140
  %v445 = vpop.f32.mrb[0].mxu0
  %v446 = vadd.f32 %v307, %v445
  %v447 = vpop.f32.mrb[0].mxu0
  %448 = vmatprep.mubr.f32.mxu0 %v150
  %449 = vmatmul.mubr.f32.gmra.mrb[0].mxu0 %v149
  %v450 = vpop.f32.mrb[0].mxu0
  %v451 = vadd.f32 %v307, %v450
  %v452 = vpop.f32.mrb[0].mxu0
  %453 = vdwg.mxu0
  %454 = vmatprep.subr.mxu0 0.0
  %455 = vmatpush1.msra.mxu0 %v190
  %456 = vmatprep.subr.mxu0 0.0
  %457 = vmatpush1.msra.mxu0 %v191
  %458 = vmatprep.subr.mxu0 0.0
  %459 = vmatpush1.msra.mxu0 %v192
  %460 = vmatprep.subr.mxu0 0.0
  %461 = vmatpush1.msra.mxu0 %v193
  %462 = vmatprep.subr.mxu0 0.0
  %463 = vmatpush1.msra.mxu0 %v194
  %464 = vmatprep.subr.mxu0 0.0
  %465 = vmatpush1.msra.mxu0 %v195
  %466 = vmatprep.subr.mxu0 0.0
  %467 = vmatpush1.msra.mxu0 %v196
  %468 = vmatprep.subr.mxu0 0.0
  %469 = vmatpush1.msra.mxu0 %v197
  %470 = vmatprep.subr.mxu0 0.0
  %471 = vmatpush1.msra.mxu0 %v198
  %472 = vmatprep.subr.mxu0 0.0
  %473 = vmatpush1.msra.mxu0 %v199
  %474 = vmatprep.subr.mxu0 0.0
  %475 = vmatpush1.msra.mxu0 %v200
  %476 = vmatprep.subr.mxu0 0.0
  %477 = vmatpush1.msra.mxu0 %v201
  %478 = vmatprep.subr.mxu0 0.0
  %479 = vmatpush1.msra.mxu0 %v202
  %480 = vmatprep.subr.mxu0 0.0
  %481 = vmatpush1.msra.mxu0 %v203
  %482 = vmatprep.subr.mxu0 0.0
  %483 = vmatpush1.msra.mxu0 %v204
  %484 = vmatprep.subr.mxu0 0.0
  %485 = vmatpush1.msra.mxu0 %v205
  %486 = vmatprep.subr.mxu0 0.0
  %487 = vmatpush1.msra.mxu0 %v206
  %488 = vmatprep.subr.mxu0 0.0
  %489 = vmatpush1.msra.mxu0 %v207
  %490 = vmatprep.subr.mxu0 0.0
  %491 = vmatpush1.msra.mxu0 %v208
  %492 = vmatprep.subr.mxu0 0.0
  %493 = vmatpush1.msra.mxu0 %v209
  %494 = vmatprep.subr.mxu0 0.0
  %495 = vmatpush1.msra.mxu0 %v210
  %496 = vmatprep.subr.mxu0 0.0
  %497 = vmatpush1.msra.mxu0 %v211
  %498 = vmatprep.subr.mxu0 0.0
  %499 = vmatpush1.msra.mxu0 %v212
  %500 = vmatprep.subr.mxu0 0.0
  %501 = vmatpush1.msra.mxu0 %v213
  %502 = vmatprep.subr.mxu0 0.0
  %503 = vmatpush1.msra.mxu0 %v214
  %504 = vmatprep.subr.mxu0 0.0
  %505 = vmatpush1.msra.mxu0 %v215
  %506 = vmatprep.subr.mxu0 0.0
  %507 = vmatpush1.msra.mxu0 %v216
  %508 = vmatprep.subr.mxu0 0.0
  %509 = vmatpush1.msra.mxu0 %v217
  %510 = vmatprep.subr.mxu0 0.0
  %511 = vmatpush1.msra.mxu0 %v218
  %512 = vmatprep.subr.mxu0 0.0
  %513 = vmatpush1.msra.mxu0 %v219
  %514 = vmatprep.subr.mxu0 0.0
  %515 = vmatpush1.msra.mxu0 %v220
  %516 = vmatprep.subr.mxu0 0.0
  %517 = vmatpush1.msra.mxu0 %v221
  %518 = vmatprep.mubr.f32.mxu0 %v17
  %519 = vmatmul.mubr.f32.gmra.mrb[0].mxu0 %v16
  %v520 = vpop.f32.mrb[0].mxu0
  %v521 = vadd.f32 %v376, %v520
  %v522 = vpop.f32.mrb[0].mxu0
  %523 = vmatprep.mubr.f32.mxu0 %v26
  %524 = vmatmul.mubr.f32.gmra.mrb[0].mxu0 %v25
  %v525 = vpop.f32.mrb[0].mxu0
  %v526 = vadd.f32 %v381, %v525
  %v527 = vpop.f32.mrb[0].mxu0
  %528 = vmatprep.mubr.f32.mxu0 %v35
  %529 = vmatmul.mubr.f32.gmra.mrb[0].mxu0 %v34
  %v530 = vpop.f32.mrb[0].mxu0
  %v531 = vadd.f32 %v386, %v530
  %v532 = vpop.f32.mrb[0].mxu0
  %533 = vmatprep.mubr.f32.mxu0 %v44
  %534 = vmatmul.mubr.f32.gmra.mrb[0].mxu0 %v43
  %v535 = vpop.f32.mrb[0].mxu0
  %v536 = vadd.f32 %v391, %v535
  %v537 = vpop.f32.mrb[0].mxu0
  %538 = vmatprep.mubr.f32.mxu0 %v53
  %539 = vmatmul.mubr.f32.gmra.mrb[0].mxu0 %v52
  %v540 = vpop.f32.mrb[0].mxu0
  %v541 = vadd.f32 %v396, %v540
  %v542 = vpop.f32.mrb[0].mxu0
  %543 = vmatprep.mubr.f32.mxu0 %v62
  %544 = vmatmul.mubr.f32.gmra.mrb[0].mxu0 %v61
  %v545 = vpop.f32.mrb[0].mxu0
  %v546 = vadd.f32 %v401, %v545
  %v547 = vpop.f32.mrb[0].mxu0
  %548 = vmatprep.mubr.f32.mxu0 %v71
  %549 = vmatmul.mubr.f32.gmra.mrb[0].mxu0 %v70
  %v550 = vpop.f32.mrb[0].mxu0
  %v551 = vadd.f32 %v406, %v550
  %v552 = vpop.f32.mrb[0].mxu0
  %553 = vmatprep.mubr.f32.mxu0 %v80
  %554 = vmatmul.mubr.f32.gmra.mrb[0].mxu0 %v79
  %v555 = vpop.f32.mrb[0].mxu0
  %v556 = vadd.f32 %v411, %v555
  %v557 = vpop.f32.mrb[0].mxu0
  %558 = vmatprep.mubr.f32.mxu0 %v89
  %559 = vmatmul.mubr.f32.gmra.mrb[0].mxu0 %v88
  %v560 = vpop.f32.mrb[0].mxu0
  %v561 = vadd.f32 %v416, %v560
  %v562 = vpop.f32.mrb[0].mxu0
  %563 = vmatprep.mubr.f32.mxu0 %v98
  %564 = vmatmul.mubr.f32.gmra.mrb[0].mxu0 %v97
  %v565 = vpop.f32.mrb[0].mxu0
  %v566 = vadd.f32 %v421, %v565
  %v567 = vpop.f32.mrb[0].mxu0
  %568 = vmatprep.mubr.f32.mxu0 %v107
  %569 = vmatmul.mubr.f32.gmra.mrb[0].mxu0 %v106
  %v570 = vpop.f32.mrb[0].mxu0
  %v571 = vadd.f32 %v426, %v570
  %v572 = vpop.f32.mrb[0].mxu0
  %573 = vmatprep.mubr.f32.mxu0 %v116
  %574 = vmatmul.mubr.f32.gmra.mrb[0].mxu0 %v115
  %v575 = vpop.f32.mrb[0].mxu0
  %v576 = vadd.f32 %v431, %v575
  %v577 = vpop.f32.mrb[0].mxu0
  %578 = vmatprep.mubr.f32.mxu0 %v125
  %579 = vmatmul.mubr.f32.gmra.mrb[0].mxu0 %v124
  %v580 = vpop.f32.mrb[0].mxu0
  %v581 = vadd.f32 %v436, %v580
  %v582 = vpop.f32.mrb[0].mxu0
  %583 = vmatprep.mubr.f32.mxu0 %v134
  %584 = vmatmul.mubr.f32.gmra.mrb[0].mxu0 %v133
  %v585 = vpop.f32.mrb[0].mxu0
  %v586 = vadd.f32 %v441, %v585
  %v587 = vpop.f32.mrb[0].mxu0
  %588 = vmatprep.mubr.f32.mxu0 %v143
  %589 = vmatmul.mubr.f32.gmra.mrb[0].mxu0 %v142
  %v590 = vpop.f32.mrb[0].mxu0
  %v591 = vadd.f32 %v446, %v590
  %v592 = vpop.f32.mrb[0].mxu0
  %593 = vmatprep.mubr.f32.mxu0 %v152
  %594 = vmatmul.mubr.f32.gmra.mrb[0].mxu0 %v151
  %v595 = vpop.f32.mrb[0].mxu0
  %v596 = vadd.f32 %v451, %v595
  %v597 = vpop.f32.mrb[0].mxu0
  %598 = vdwg.mxu0
  %599 = vmatprep.subr.mxu0 0.0
  %600 = vmatpush1.msra.mxu0 %v222
  %601 = vmatprep.subr.mxu0 0.0
  %602 = vmatpush1.msra.mxu0 %v223
  %603 = vmatprep.subr.mxu0 0.0
  %604 = vmatpush1.msra.mxu0 %v224
  %605 = vmatprep.subr.mxu0 0.0
  %606 = vmatpush1.msra.mxu0 %v225
  %607 = vmatprep.subr.mxu0 0.0
  %608 = vmatpush1.msra.mxu0 %v226
  %609 = vmatprep.subr.mxu0 0.0
  %610 = vmatpush1.msra.mxu0 %v227
  %611 = vmatprep.subr.mxu0 0.0
  %612 = vmatpush1.msra.mxu0 %v228
  %613 = vmatprep.subr.mxu0 0.0
  %614 = vmatpush1.msra.mxu0 %v229
  %615 = vmatprep.subr.mxu0 0.0
  %616 = vmatpush1.msra.mxu0 %v230
  %617 = vmatprep.subr.mxu0 0.0
  %618 = vmatpush1.msra.mxu0 %v231
  %619 = vmatprep.subr.mxu0 0.0
  %620 = vmatpush1.msra.mxu0 %v232
  %621 = vmatprep.subr.mxu0 0.0
  %622 = vmatpush1.msra.mxu0 %v233
  %623 = vmatprep.subr.mxu0 0.0
  %624 = vmatpush1.msra.mxu0 %v234
  %625 = vmatprep.subr.mxu0 0.0
  %626 = vmatpush1.msra.mxu0 %v235
  %627 = vmatprep.subr.mxu0 0.0
  %628 = vmatpush1.msra.mxu0 %v236
  %629 = vmatprep.subr.mxu0 0.0
  %630 = vmatpush1.msra.mxu0 %v237
  %631 = vmatprep.subr.mxu0 0.0
  %632 = vmatpush1.msra.mxu0 %v238
  %633 = vmatprep.subr.mxu0 0.0
  %634 = vmatpush1.msra.mxu0 %v239
  %635 = vmatprep.subr.mxu0 0.0
  %636 = vmatpush1.msra.mxu0 %v240
  %637 = vmatprep.subr.mxu0 0.0
  %638 = vmatpush1.msra.mxu0 %v241
  %639 = vmatprep.subr.mxu0 0.0
  %640 = vmatpush1.msra.mxu0 %v242
  %641 = vmatprep.subr.mxu0 0.0
  %642 = vmatpush1.msra.mxu0 %v243
  %643 = vmatprep.subr.mxu0 0.0
  %644 = vmatpush1.msra.mxu0 %v244
  %645 = vmatprep.subr.mxu0 0.0
  %646 = vmatpush1.msra.mxu0 %v245
  %647 = vmatprep.subr.mxu0 0.0
  %648 = vmatpush1.msra.mxu0 %v246
  %649 = vmatprep.subr.mxu0 0.0
  %650 = vmatpush1.msra.mxu0 %v247
  %651 = vmatprep.subr.mxu0 0.0
  %652 = vmatpush1.msra.mxu0 %v248
  %653 = vmatprep.subr.mxu0 0.0
  %654 = vmatpush1.msra.mxu0 %v249
  %655 = vmatprep.subr.mxu0 0.0
  %656 = vmatpush1.msra.mxu0 %v250
  %657 = vmatprep.subr.mxu0 0.0
  %658 = vmatpush1.msra.mxu0 %v251
  %659 = vmatprep.subr.mxu0 0.0
  %660 = vmatpush1.msra.mxu0 %v252
  %661 = vmatprep.subr.mxu0 0.0
  %662 = vmatpush1.msra.mxu0 %v253
  %663 = vmatprep.mubr.f32.mxu0 %v19
  %664 = vmatmul.mubr.f32.gmra.mrb[0].mxu0 %v18
  %v665 = vpop.f32.mrb[0].mxu0
  %v666 = vadd.f32 %v521, %v665
  %v667 = vpop.f32.mrb[0].mxu0
  %668 = vmatprep.mubr.f32.mxu0 %v28
  %669 = vmatmul.mubr.f32.gmra.mrb[0].mxu0 %v27
  %v670 = vpop.f32.mrb[0].mxu0
  %v671 = vadd.f32 %v526, %v670
  %v672 = vpop.f32.mrb[0].mxu0
  %673 = vmatprep.mubr.f32.mxu0 %v37
  %674 = vmatmul.mubr.f32.gmra.mrb[0].mxu0 %v36
  %v675 = vpop.f32.mrb[0].mxu0
  %v676 = vadd.f32 %v531, %v675
  %v677 = vpop.f32.mrb[0].mxu0
  %678 = vmatprep.mubr.f32.mxu0 %v46
  %679 = vmatmul.mubr.f32.gmra.mrb[0].mxu0 %v45
  %v680 = vpop.f32.mrb[0].mxu0
  %v681 = vadd.f32 %v536, %v680
  %v682 = vpop.f32.mrb[0].mxu0
  %683 = vmatprep.mubr.f32.mxu0 %v55
  %684 = vmatmul.mubr.f32.gmra.mrb[0].mxu0 %v54
  %v685 = vpop.f32.mrb[0].mxu0
  %v686 = vadd.f32 %v541, %v685
  %v687 = vpop.f32.mrb[0].mxu0
  %688 = vmatprep.mubr.f32.mxu0 %v64
  %689 = vmatmul.mubr.f32.gmra.mrb[0].mxu0 %v63
  %v690 = vpop.f32.mrb[0].mxu0
  %v691 = vadd.f32 %v546, %v690
  %v692 = vpop.f32.mrb[0].mxu0
  %693 = vmatprep.mubr.f32.mxu0 %v73
  %694 = vmatmul.mubr.f32.gmra.mrb[0].mxu0 %v72
  %v695 = vpop.f32.mrb[0].mxu0
  %v696 = vadd.f32 %v551, %v695
  %v697 = vpop.f32.mrb[0].mxu0
  %698 = vmatprep.mubr.f32.mxu0 %v82
  %699 = vmatmul.mubr.f32.gmra.mrb[0].mxu0 %v81
  %v700 = vpop.f32.mrb[0].mxu0
  %v701 = vadd.f32 %v556, %v700
  %v702 = vpop.f32.mrb[0].mxu0
  %703 = vmatprep.mubr.f32.mxu0 %v91
  %704 = vmatmul.mubr.f32.gmra.mrb[0].mxu0 %v90
  %v705 = vpop.f32.mrb[0].mxu0
  %v706 = vadd.f32 %v561, %v705
  %v707 = vpop.f32.mrb[0].mxu0
  %708 = vmatprep.mubr.f32.mxu0 %v100
  %709 = vmatmul.mubr.f32.gmra.mrb[0].mxu0 %v99
  %v710 = vpop.f32.mrb[0].mxu0
  %v711 = vadd.f32 %v566, %v710
  %v712 = vpop.f32.mrb[0].mxu0
  %713 = vmatprep.mubr.f32.mxu0 %v109
  %714 = vmatmul.mubr.f32.gmra.mrb[0].mxu0 %v108
  %v715 = vpop.f32.mrb[0].mxu0
  %v716 = vadd.f32 %v571, %v715
  %v717 = vpop.f32.mrb[0].mxu0
  %718 = vmatprep.mubr.f32.mxu0 %v118
  %719 = vmatmul.mubr.f32.gmra.mrb[0].mxu0 %v117
  %v720 = vpop.f32.mrb[0].mxu0
  %v721 = vadd.f32 %v576, %v720
  %v722 = vpop.f32.mrb[0].mxu0
  %723 = vmatprep.mubr.f32.mxu0 %v127
  %724 = vmatmul.mubr.f32.gmra.mrb[0].mxu0 %v126
  %v725 = vpop.f32.mrb[0].mxu0
  %v726 = vadd.f32 %v581, %v725
  %v727 = vpop.f32.mrb[0].mxu0
  %728 = vmatprep.mubr.f32.mxu0 %v136
  %729 = vmatmul.mubr.f32.gmra.mrb[0].mxu0 %v135
  %v730 = vpop.f32.mrb[0].mxu0
  %v731 = vadd.f32 %v586, %v730
  %v732 = vpop.f32.mrb[0].mxu0
  %733 = vmatprep.mubr.f32.mxu0 %v145
  %734 = vmatmul.mubr.f32.gmra.mrb[0].mxu0 %v144
  %v735 = vpop.f32.mrb[0].mxu0
  %v736 = vadd.f32 %v591, %v735
  %v737 = vpop.f32.mrb[0].mxu0
  %738 = vmatprep.mubr.f32.mxu0 %v154
  %739 = vmatmul.mubr.f32.gmra.mrb[0].mxu0 %v153
  %v740 = vpop.f32.mrb[0].mxu0
  %v741 = vadd.f32 %v596, %v740
  %v742 = vpop.f32.mrb[0].mxu0
  %743 = vdwg.mxu0
  %744 = vmatprep.subr.mxu0 0.0
  %745 = vmatpush1.msra.mxu0 %v254
  %746 = vmatprep.subr.mxu0 0.0
  %747 = vmatpush1.msra.mxu0 %v255
  %748 = vmatprep.subr.mxu0 0.0
  %749 = vmatpush1.msra.mxu0 %v256
  %750 = vmatprep.subr.mxu0 0.0
  %751 = vmatpush1.msra.mxu0 %v257
  %752 = vmatprep.subr.mxu0 0.0
  %753 = vmatpush1.msra.mxu0 %v258
  %754 = vmatprep.subr.mxu0 0.0
  %755 = vmatpush1.msra.mxu0 %v259
  %756 = vmatprep.subr.mxu0 0.0
  %757 = vmatpush1.msra.mxu0 %v260
  %758 = vmatprep.subr.mxu0 0.0
  %759 = vmatpush1.msra.mxu0 %v261
  %760 = vmatprep.subr.mxu0 0.0
  %761 = vmatpush1.msra.mxu0 %v262
  %762 = vmatprep.subr.mxu0 0.0
  %763 = vmatpush1.msra.mxu0 %v263
  %764 = vmatprep.subr.mxu0 0.0
  %765 = vmatpush1.msra.mxu0 %v264
  %766 = vmatprep.subr.mxu0 0.0
  %767 = vmatpush1.msra.mxu0 %v265
  %768 = vmatprep.subr.mxu0 0.0
  %769 = vmatpush1.msra.mxu0 %v266
  %770 = vmatprep.subr.mxu0 0.0
  %771 = vmatpush1.msra.mxu0 %v267
  %772 = vmatprep.subr.mxu0 0.0
  %773 = vmatpush1.msra.mxu0 %v268
  %774 = vmatprep.subr.mxu0 0.0
  %775 = vmatpush1.msra.mxu0 %v269
  %776 = vmatprep.subr.mxu0 0.0
  %777 = vmatpush1.msra.mxu0 %v270
  %778 = vmatprep.subr.mxu0 0.0
  %779 = vmatpush1.msra.mxu0 %v271
  %780 = vmatprep.subr.mxu0 0.0
  %781 = vmatpush1.msra.mxu0 %v272
  %782 = vmatprep.subr.mxu0 0.0
  %783 = vmatpush1.msra.mxu0 %v273
  %784 = vmatprep.subr.mxu0 0.0
  %785 = vmatpush1.msra.mxu0 %v274
  %786 = vmatprep.subr.mxu0 0.0
  %787 = vmatpush1.msra.mxu0 %v275
  %788 = vmatprep.subr.mxu0 0.0
  %789 = vmatpush1.msra.mxu0 %v276
  %790 = vmatprep.subr.mxu0 0.0
  %791 = vmatpush1.msra.mxu0 %v277
  %792 = vmatprep.subr.mxu0 0.0
  %793 = vmatpush1.msra.mxu0 %v278
  %794 = vmatprep.subr.mxu0 0.0
  %795 = vmatpush1.msra.mxu0 %v279
  %796 = vmatprep.subr.mxu0 0.0
  %797 = vmatpush1.msra.mxu0 %v280
  %798 = vmatprep.subr.mxu0 0.0
  %799 = vmatpush1.msra.mxu0 %v281
  %800 = vmatprep.subr.mxu0 0.0
  %801 = vmatpush1.msra.mxu0 %v282
  %802 = vmatprep.subr.mxu0 0.0
  %803 = vmatpush1.msra.mxu0 %v283
  %804 = vmatprep.subr.mxu0 0.0
  %805 = vmatpush1.msra.mxu0 %v284
  %806 = vmatprep.subr.mxu0 0.0
  %807 = vmatpush1.msra.mxu0 %v285
  %808 = vmatprep.mubr.f32.mxu0 %v21
  %809 = vmatmul.mubr.f32.gmra.mrb[0].mxu0 %v20
  %v810 = vpop.f32.mrb[0].mxu0
  %v811 = vadd.f32 %v666, %v810
  %v812 = vpop.f32.mrb[0].mxu0
  %813 = vmatprep.mubr.f32.mxu0 %v30
  %814 = vmatmul.mubr.f32.gmra.mrb[0].mxu0 %v29
  %v815 = vpop.f32.mrb[0].mxu0
  %v816 = vadd.f32 %v671, %v815
  %v817 = vpop.f32.mrb[0].mxu0
  %818 = vmatprep.mubr.f32.mxu0 %v39
  %819 = vmatmul.mubr.f32.gmra.mrb[0].mxu0 %v38
  %v820 = vpop.f32.mrb[0].mxu0
  %v821 = vadd.f32 %v676, %v820
  %v822 = vpop.f32.mrb[0].mxu0
  %823 = vmatprep.mubr.f32.mxu0 %v48
  %824 = vmatmul.mubr.f32.gmra.mrb[0].mxu0 %v47
  %v825 = vpop.f32.mrb[0].mxu0
  %v826 = vadd.f32 %v681, %v825
  %v827 = vpop.f32.mrb[0].mxu0
  %828 = vmatprep.mubr.f32.mxu0 %v57
  %829 = vmatmul.mubr.f32.gmra.mrb[0].mxu0 %v56
  %v830 = vpop.f32.mrb[0].mxu0
  %v831 = vadd.f32 %v686, %v830
  %v832 = vpop.f32.mrb[0].mxu0
  %833 = vmatprep.mubr.f32.mxu0 %v66
  %834 = vmatmul.mubr.f32.gmra.mrb[0].mxu0 %v65
  %v835 = vpop.f32.mrb[0].mxu0
  %v836 = vadd.f32 %v691, %v835
  %v837 = vpop.f32.mrb[0].mxu0
  %838 = vmatprep.mubr.f32.mxu0 %v75
  %839 = vmatmul.mubr.f32.gmra.mrb[0].mxu0 %v74
  %v840 = vpop.f32.mrb[0].mxu0
  %v841 = vadd.f32 %v696, %v840
  %v842 = vpop.f32.mrb[0].mxu0
  %843 = vmatprep.mubr.f32.mxu0 %v84
  %844 = vmatmul.mubr.f32.gmra.mrb[0].mxu0 %v83
  %v845 = vpop.f32.mrb[0].mxu0
  %v846 = vadd.f32 %v701, %v845
  %v847 = vpop.f32.mrb[0].mxu0
  %848 = vmatprep.mubr.f32.mxu0 %v93
  %849 = vmatmul.mubr.f32.gmra.mrb[0].mxu0 %v92
  %v850 = vpop.f32.mrb[0].mxu0
  %v851 = vadd.f32 %v706, %v850
  %v852 = vpop.f32.mrb[0].mxu0
  %853 = vmatprep.mubr.f32.mxu0 %v102
  %854 = vmatmul.mubr.f32.gmra.mrb[0].mxu0 %v101
  %v855 = vpop.f32.mrb[0].mxu0
  %v856 = vadd.f32 %v711, %v855
  %v857 = vpop.f32.mrb[0].mxu0
  %858 = vmatprep.mubr.f32.mxu0 %v111
  %859 = vmatmul.mubr.f32.gmra.mrb[0].mxu0 %v110
  %v860 = vpop.f32.mrb[0].mxu0
  %v861 = vadd.f32 %v716, %v860
  %v862 = vpop.f32.mrb[0].mxu0
  %863 = vmatprep.mubr.f32.mxu0 %v120
  %864 = vmatmul.mubr.f32.gmra.mrb[0].mxu0 %v119
  %v865 = vpop.f32.mrb[0].mxu0
  %v866 = vadd.f32 %v721, %v865
  %v867 = vpop.f32.mrb[0].mxu0
  %868 = vmatprep.mubr.f32.mxu0 %v129
  %869 = vmatmul.mubr.f32.gmra.mrb[0].mxu0 %v128
  %v870 = vpop.f32.mrb[0].mxu0
  %v871 = vadd.f32 %v726, %v870
  %v872 = vpop.f32.mrb[0].mxu0
  %873 = vmatprep.mubr.f32.mxu0 %v138
  %874 = vmatmul.mubr.f32.gmra.mrb[0].mxu0 %v137
  %v875 = vpop.f32.mrb[0].mxu0
  %v876 = vadd.f32 %v731, %v875
  %v877 = vpop.f32.mrb[0].mxu0
  %878 = vmatprep.mubr.f32.mxu0 %v147
  %879 = vmatmul.mubr.f32.gmra.mrb[0].mxu0 %v146
  %v880 = vpop.f32.mrb[0].mxu0
  %v881 = vadd.f32 %v736, %v880
  %v882 = vpop.f32.mrb[0].mxu0
  %883 = vmatprep.mubr.f32.mxu0 %v156
  %884 = vmatmul.mubr.f32.gmra.mrb[0].mxu0 %v155
  %v885 = vpop.f32.mrb[0].mxu0
  %v886 = vadd.f32 %v741, %v885
  %v887 = vpop.f32.mrb[0].mxu0
  %888 = vdwg.mxu0
  %889 = vmatprep.subr.mxu0 0.0
  %890 = vmatpush1.msra.mxu0 %v286
  %891 = vmatprep.subr.mxu0 0.0
  %892 = vmatpush1.msra.mxu0 %v287
  %893 = vmatprep.subr.mxu0 0.0
  %894 = vmatpush1.msra.mxu0 %v288
  %895 = vmatprep.subr.mxu0 0.0
  %896 = vmatpush1.msra.mxu0 %v289
  %897 = vmatprep.subr.mxu0 0.0
  %898 = vmatpush1.msra.mxu0 %v290
  %899 = vmatprep.subr.mxu0 0.0
  %900 = vmatpush1.msra.mxu0 %v291
  %901 = vmatprep.subr.mxu0 0.0
  %902 = vmatpush1.msra.mxu0 %v292
  %903 = vmatprep.subr.mxu0 0.0
  %904 = vmatpush1.msra.mxu0 %v293
  %905 = vmatprep.subr.mxu0 0.0
  %906 = vmatpush1.msra.mxu0 %v294
  %907 = vmatprep.subr.mxu0 0.0
  %908 = vmatpush1.msra.mxu0 %v295
  %909 = vmatprep.subr.mxu0 0.0
  %910 = vmatpush1.msra.mxu0 %v296
  %911 = vmatprep.subr.mxu0 0.0
  %912 = vmatpush1.msra.mxu0 %v297
  %913 = vmatprep.subr.mxu0 0.0
  %914 = vmatpush1.msra.mxu0 %v298
  %915 = vmatprep.subr.mxu0 0.0
  %916 = vmatpush1.msra.mxu0 %v299
  %917 = vmatprep.subr.mxu0 0.0
  %918 = vmatpush1.msra.mxu0 %v300
  %919 = vmatprep.subr.mxu0 0.0
  %920 = vmatpush1.msra.mxu0 %v301
  %921 = vmatprep.subr.mxu0 0.0
  %922 = vmatpush1.msra.mxu0 0.0
  %923 = vmatprep.subr.mxu0 0.0
  %924 = vmatpush1.msra.mxu0 0.0
  %925 = vmatprep.subr.mxu0 0.0
  %926 = vmatpush1.msra.mxu0 0.0
  %927 = vmatprep.subr.mxu0 0.0
  %928 = vmatpush1.msra.mxu0 0.0
  %929 = vmatprep.subr.mxu0 0.0
  %930 = vmatpush1.msra.mxu0 0.0
  %931 = vmatprep.subr.mxu0 0.0
  %932 = vmatpush1.msra.mxu0 0.0
  %933 = vmatprep.subr.mxu0 0.0
  %934 = vmatpush1.msra.mxu0 0.0
  %935 = vmatprep.subr.mxu0 0.0
  %936 = vmatpush1.msra.mxu0 0.0
  %937 = vmatprep.subr.mxu0 0.0
  %938 = vmatpush1.msra.mxu0 0.0
  %939 = vmatprep.subr.mxu0 0.0
  %940 = vmatpush1.msra.mxu0 0.0
  %941 = vmatprep.subr.mxu0 0.0
  %942 = vmatpush1.msra.mxu0 0.0
  %943 = vmatprep.subr.mxu0 0.0
  %944 = vmatpush1.msra.mxu0 0.0
  %945 = vmatprep.subr.mxu0 0.0
  %946 = vmatpush1.msra.mxu0 0.0
  %947 = vmatprep.subr.mxu0 0.0
  %948 = vmatpush1.msra.mxu0 0.0
  %949 = vmatprep.subr.mxu0 0.0
  %950 = vmatpush1.msra.mxu0 0.0
  %951 = vmatprep.subr.mxu0 0.0
  %952 = vmatpush1.msra.mxu0 0.0
  %953 = vmatprep.mubr.f32.mxu0 0.0
  %954 = vmatmul.mubr.f32.gmra.mrb[0].mxu0 %v22
  %v955 = vpop.f32.mrb[0].mxu0
  %v956 = vadd.f32 %v811, %v955
  %v957 = vpop.f32.mrb[0].mxu0
  %958 = vmatprep.mubr.f32.mxu0 0.0
  %959 = vmatmul.mubr.f32.gmra.mrb[0].mxu0 %v31
  %v960 = vpop.f32.mrb[0].mxu0
  %v961 = vadd.f32 %v816, %v960
  %v962 = vpop.f32.mrb[0].mxu0
  %963 = vmatprep.mubr.f32.mxu0 0.0
  %964 = vmatmul.mubr.f32.gmra.mrb[0].mxu0 %v40
  %v965 = vpop.f32.mrb[0].mxu0
  %v966 = vadd.f32 %v821, %v965
  %v967 = vpop.f32.mrb[0].mxu0
  %968 = vmatprep.mubr.f32.mxu0 0.0
  %969 = vmatmul.mubr.f32.gmra.mrb[0].mxu0 %v49
  %v970 = vpop.f32.mrb[0].mxu0
  %v971 = vadd.f32 %v826, %v970
  %v972 = vpop.f32.mrb[0].mxu0
  %973 = vmatprep.mubr.f32.mxu0 0.0
  %974 = vmatmul.mubr.f32.gmra.mrb[0].mxu0 %v58
  %v975 = vpop.f32.mrb[0].mxu0
  %v976 = vadd.f32 %v831, %v975
  %v977 = vpop.f32.mrb[0].mxu0
  %978 = vmatprep.mubr.f32.mxu0 0.0
  %979 = vmatmul.mubr.f32.gmra.mrb[0].mxu0 %v67
  %v980 = vpop.f32.mrb[0].mxu0
  %v981 = vadd.f32 %v836, %v980
  %v982 = vpop.f32.mrb[0].mxu0
  %983 = vmatprep.mubr.f32.mxu0 0.0
  %984 = vmatmul.mubr.f32.gmra.mrb[0].mxu0 %v76
  %v985 = vpop.f32.mrb[0].mxu0
  %v986 = vadd.f32 %v841, %v985
  %v987 = vpop.f32.mrb[0].mxu0
  %988 = vmatprep.mubr.f32.mxu0 0.0
  %989 = vmatmul.mubr.f32.gmra.mrb[0].mxu0 %v85
  %v990 = vpop.f32.mrb[0].mxu0
  %v991 = vadd.f32 %v846, %v990
  %v992 = vpop.f32.mrb[0].mxu0
  %993 = vmatprep.mubr.f32.mxu0 0.0
  %994 = vmatmul.mubr.f32.gmra.mrb[0].mxu0 %v94
  %v995 = vpop.f32.mrb[0].mxu0
  %v996 = vadd.f32 %v851, %v995
  %v997 = vpop.f32.mrb[0].mxu0
  %998 = vmatprep.mubr.f32.mxu0 0.0
  %999 = vmatmul.mubr.f32.gmra.mrb[0].mxu0 %v103
  %v1000 = vpop.f32.mrb[0].mxu0
  %v1001 = vadd.f32 %v856, %v1000
  %v1002 = vpop.f32.mrb[0].mxu0
  %1003 = vmatprep.mubr.f32.mxu0 0.0
  %1004 = vmatmul.mubr.f32.gmra.mrb[0].mxu0 %v112
  %v1005 = vpop.f32.mrb[0].mxu0
  %v1006 = vadd.f32 %v861, %v1005
  %v1007 = vpop.f32.mrb[0].mxu0
  %1008 = vmatprep.mubr.f32.mxu0 0.0
  %1009 = vmatmul.mubr.f32.gmra.mrb[0].mxu0 %v121
  %v1010 = vpop.f32.mrb[0].mxu0
  %v1011 = vadd.f32 %v866, %v1010
  %v1012 = vpop.f32.mrb[0].mxu0
  %1013 = vmatprep.mubr.f32.mxu0 0.0
  %1014 = vmatmul.mubr.f32.gmra.mrb[0].mxu0 %v130
  %v1015 = vpop.f32.mrb[0].mxu0
  %v1016 = vadd.f32 %v871, %v1015
  %v1017 = vpop.f32.mrb[0].mxu0
  %1018 = vmatprep.mubr.f32.mxu0 0.0
  %1019 = vmatmul.mubr.f32.gmra.mrb[0].mxu0 %v139
  %v1020 = vpop.f32.mrb[0].mxu0
  %v1021 = vadd.f32 %v876, %v1020
  %v1022 = vpop.f32.mrb[0].mxu0
  %1023 = vmatprep.mubr.f32.mxu0 0.0
  %1024 = vmatmul.mubr.f32.gmra.mrb[0].mxu0 %v148
  %v1025 = vpop.f32.mrb[0].mxu0
  %v1026 = vadd.f32 %v881, %v1025
  %v1027 = vpop.f32.mrb[0].mxu0
  %1028 = vmatprep.mubr.f32.mxu0 0.0
  %1029 = vmatmul.mubr.f32.gmra.mrb[0].mxu0 %v157
  %v1030 = vpop.f32.mrb[0].mxu0
  %v1031 = vadd.f32 %v886, %v1030
  %v1032 = vpop.f32.mrb[0].mxu0
  %1033 = vdwg.mxu0
  %v1034 = vmax.f32 %v956, 0.0
  %v1035 = vmax.f32 %v961, 0.0
  %v1036 = vmax.f32 %v966, 0.0
  %v1037 = vmax.f32 %v971, 0.0
  %v1038 = vmax.f32 %v976, 0.0
  %v1039 = vmax.f32 %v981, 0.0
  %v1040 = vmax.f32 %v986, 0.0
  %v1041 = vmax.f32 %v991, 0.0
  %v1042 = vmax.f32 %v996, 0.0
  %v1043 = vmax.f32 %v1001, 0.0
  %v1044 = vmax.f32 %v1006, 0.0
  %v1045 = vmax.f32 %v1011, 0.0
  %v1046 = vmax.f32 %v1016, 0.0
  %v1047 = vmax.f32 %v1021, 0.0
  %v1048 = vmax.f32 %v1026, 0.0
  %v1049 = vmax.f32 %v1031, 0.0
  %v1050 = vmax.f32 %v1034, %v1038
  %v1051 = vmax.f32 %v1035, %v1039
  %v1052 = vmax.f32 %v1036, %v1040
  %v1053 = vmax.f32 %v1037, %v1041
  %v1054 = vmax.f32 %v1050, %v1042
  %v1055 = vmax.f32 %v1051, %v1043
  %v1056 = vmax.f32 %v1052, %v1044
  %v1057 = vmax.f32 %v1053, %v1045
  %v1058 = vmax.f32 %v1054, %v1046
  %v1059 = vmax.f32 %v1055, %v1047
  %v1060 = vmax.f32 %v1056, %v1048
  %v1061 = vmax.f32 %v1057, %v1049
  %1062 = vst [vmem:[%s3] sm:$0xff] %v1058
  %1063 = vst [vmem:[%s3 + $0x8] sm:$0xff] %v1059
  %1064 = vst [vmem:[%s3 + $0x10] sm:$0xff] %v1060
  %1065 = vst [vmem:[%s3 + $0x18] sm:$0xff] %v1061
  // Predicated region
  $region14: #{forward.6} parent=0 // pred_check
    _
  $region15: #{forward.6} parent=0 // pred_check_branch
    %1067 = sbr.rel (0) target = $region17
  $region16: #{forward.6} parent=0 // pred_region
    _
  $region17: #{forward.6} parent=0 // pred_fallthru
    _
  // Predicated region
  $region18: #{forward.6} parent=0 // pred_check
    _
  $region19: #{forward.6} parent=0 // pred_check_branch
    %1069 = sbr.rel (0) target = $region21
  $region20: #{forward.6} parent=0 // pred_region
    _
  $region21: #{forward.6} parent=0 // pred_fallthru
    _

// kernel: forward.7
$region0: #{forward.7}
  #allocation0 [shape = 'u32[]', space=smem, size = 0x4, offset = 0x4, fixed_abs, tag = 'smem constant byte address 0x4 - core index']
  #allocation1 [shape = 'u32[144,128]{1,0:T(1,128)}', space=vmem, size = 0x12000, scoped, tag = 'internal scratch']
  %s0 = inlined_call_operand.vmem [shape: f32[32,1152], index: 0, kind: input, shape index: {}]
  %s1 = inlined_call_operand.vmem [shape: f32[1152,128], index: 1, kind: input, shape index: {}]
  %s2 = inlined_call_operand.vmem [shape: f32[1,128], index: 2, kind: input, shape index: {}]
  %s3 = inlined_call_operand.vmem [shape: f32[128,128], index: 3, kind: input, shape index: {}]
  %s4 = inlined_call_operand.vmem [shape: f32[1,128], index: 4, kind: input, shape index: {}]
  %s5 = inlined_call_operand.vmem [shape: f32[128,128], index: 5, kind: input, shape index: {}]
  %s6 = inlined_call_operand.vmem [shape: f32[1,128], index: 6, kind: input, shape index: {}]
  %s7 = inlined_call_operand.hbm [shape: f32[2,128], index: 7, kind: output, shape index: {0}]
  %s8 = inlined_call_operand.hbm [shape: f32[2,128], index: 8, kind: output, shape index: {1}]
  %9 = xla_tuple %s7, %s8
  %s10 = sld [smem:[#allocation0]]
  $region46: #{forward.7} parent=0
    _
  %s12 = ssub.s32 1, %s10
  %s13 = scalar_select 0, %s12, %s10
  $region1: #{forward.7} parent=0
    #allocation2 [shape = 'u8[1024]{0}', space=vmem, size = 0x400, scoped, tag = 'output window, operand 0, single buffered']
    #allocation3 [shape = 's32[1]{0}', space=sflag, size = 0x4, scoped, tag = 'scoped memory for forward.7']
    #allocation4 [shape = 'u8[1024]{0}', space=vmem, size = 0x400, scoped, tag = 'output window, operand 1, single buffered']
    #allocation5 [shape = 's32[1]{0}', space=sflag, size = 0x4, scoped, tag = 'scoped memory for forward.7']
    %14 = vsyncpa [#allocation3], 0
    %15 = vsyncpa [#allocation5], 0
    // Predicated region
    $region2: #{forward.7} parent=1 // pred_check
      _
    $region3: #{forward.7} parent=1 // pred_check_branch
      %17 = sbr.rel (0) target = $region5
    $region4: #{forward.7} parent=1 // pred_region
      _
    $region5: #{forward.7} parent=1 // pred_fallthru
      _
    // Predicated region
    $region6: #{forward.7} parent=1 // pred_check
      _
    $region7: #{forward.7} parent=1 // pred_check_branch
      %19 = sbr.rel (0) target = $region9
    $region8: #{forward.7} parent=1 // pred_region
      _
    $region9: #{forward.7} parent=1 // pred_fallthru
      _
    // Predicated region
    $region10: #{forward.7} parent=1 // pred_check
      _
    $region11: #{forward.7} parent=1 // pred_check_branch
      %21 = sbr.rel (0) target = $region13
    $region12: #{forward.7} parent=1 // pred_region
      _
    $region13: #{forward.7} parent=1 // pred_fallthru
      _
    // Predicated region
    $region14: #{forward.7} parent=1 // pred_check
      _
    $region15: #{forward.7} parent=1 // pred_check_branch
      %23 = sbr.rel (0) target = $region17
    $region16: #{forward.7} parent=1 // pred_region
      _
    $region17: #{forward.7} parent=1 // pred_fallthru
      _
    // Predicated region
    $region18: #{forward.7} parent=1 // pred_check
      _
    $region19: #{forward.7} parent=1 // pred_check_branch
      %25 = sbr.rel (0) target = $region21
    $region20: #{forward.7} parent=1 // pred_region
      _
    $region21: #{forward.7} parent=1 // pred_fallthru
      _
    // Predicated region
    $region22: #{forward.7} parent=1 // pred_check
      _
    $region23: #{forward.7} parent=1 // pred_check_branch
      %27 = sbr.rel (0) target = $region25
    $region24: #{forward.7} parent=1 // pred_region
      _
    $region25: #{forward.7} parent=1 // pred_fallthru
      _
    // Predicated region
    $region26: #{forward.7} parent=1 // pred_check
      _
    $region27: #{forward.7} parent=1 // pred_check_branch
      %29 = sbr.rel (0) target = $region29
    $region28: #{forward.7} parent=1 // pred_region
      _
    $region29: #{forward.7} parent=1 // pred_fallthru
      _
    %v30 = vld [vmem:[%s0] sm:$0xff]
    %v31 = vld [vmem:[%s0 + $0x8] sm:$0xff]
    %v32 = vld [vmem:[%s0 + $0x10] sm:$0xff]
    %v33 = vld [vmem:[%s0 + $0x18] sm:$0xff]
    %v34 = vld [vmem:[%s0 + $0x20] sm:$0xff]
    %v35 = vld [vmem:[%s0 + $0x28] sm:$0xff]
    %v36 = vld [vmem:[%s0 + $0x30] sm:$0xff]
    %v37 = vld [vmem:[%s0 + $0x38] sm:$0xff]
    %v38 = vld [vmem:[%s0 + $0x40] sm:$0xff]
    %v39 = vld [vmem:[%s0 + $0x48] sm:$0xff]
    %v40 = vld [vmem:[%s0 + $0x50] sm:$0xff]
    %v41 = vld [vmem:[%s0 + $0x58] sm:$0xff]
    %v42 = vld [vmem:[%s0 + $0x60] sm:$0xff]
    %v43 = vld [vmem:[%s0 + $0x68] sm:$0xff]
    %v44 = vld [vmem:[%s0 + $0x70] sm:$0xff]
    %v45 = vld [vmem:[%s0 + $0x78] sm:$0xff]
    %v46 = vld [vmem:[%s0 + $0x80] sm:$0xff]
    %v47 = vld [vmem:[%s0 + $0x88] sm:$0xff]
    %v48 = vld [vmem:[%s0 + $0x90] sm:$0xff]
    %v49 = vld [vmem:[%s0 + $0x98] sm:$0xff]
    %v50 = vld [vmem:[%s0 + $0xa0] sm:$0xff]
    %v51 = vld [vmem:[%s0 + $0xa8] sm:$0xff]
    %v52 = vld [vmem:[%s0 + $0xb0] sm:$0xff]
    %v53 = vld [vmem:[%s0 + $0xb8] sm:$0xff]
    %v54 = vld [vmem:[%s0 + $0xc0] sm:$0xff]
    %v55 = vld [vmem:[%s0 + $0xc8] sm:$0xff]
    %v56 = vld [vmem:[%s0 + $0xd0] sm:$0xff]
    %v57 = vld [vmem:[%s0 + $0xd8] sm:$0xff]
    %v58 = vld [vmem:[%s0 + $0xe0] sm:$0xff]
    %v59 = vld [vmem:[%s0 + $0xe8] sm:$0xff]
    %v60 = vld [vmem:[%s0 + $0xf0] sm:$0xff]
    %v61 = vld [vmem:[%s0 + $0xf8] sm:$0xff]
    %v62 = vld [vmem:[%s0 + $0x100] sm:$0xff]
    %v63 = vld [vmem:[%s0 + $0x108] sm:$0xff]
    %v64 = vld [vmem:[%s0 + $0x110] sm:$0xff]
    %v65 = vld [vmem:[%s0 + $0x118] sm:$0xff]
    %v66 = vld [vmem:[%s1] sm:$0xff]
    %v67 = vld [vmem:[%s1 + $0x8] sm:$0xff]
    %v68 = vld [vmem:[%s1 + $0x10] sm:$0xff]
    %v69 = vld [vmem:[%s1 + $0x18] sm:$0xff]
    %v70 = vld [vmem:[%s1 + $0x20] sm:$0xff]
    %v71 = vld [vmem:[%s1 + $0x28] sm:$0xff]
    %v72 = vld [vmem:[%s1 + $0x30] sm:$0xff]
    %v73 = vld [vmem:[%s1 + $0x38] sm:$0xff]
    %v74 = vld [vmem:[%s1 + $0x40] sm:$0xff]
    %v75 = vld [vmem:[%s1 + $0x48] sm:$0xff]
    %v76 = vld [vmem:[%s1 + $0x50] sm:$0xff]
    %v77 = vld [vmem:[%s1 + $0x58] sm:$0xff]
    %v78 = vld [vmem:[%s1 + $0x60] sm:$0xff]
    %v79 = vld [vmem:[%s1 + $0x68] sm:$0xff]
    %v80 = vld [vmem:[%s1 + $0x70] sm:$0xff]
    %v81 = vld [vmem:[%s1 + $0x78] sm:$0xff]
    %v82 = vld [vmem:[%s1 + $0x80] sm:$0xff]
    %v83 = vld [vmem:[%s1 + $0x88] sm:$0xff]
    %v84 = vld [vmem:[%s1 + $0x90] sm:$0xff]
    %v85 = vld [vmem:[%s1 + $0x98] sm:$0xff]
    %v86 = vld [vmem:[%s1 + $0xa0] sm:$0xff]
    %v87 = vld [vmem:[%s1 + $0xa8] sm:$0xff]
    %v88 = vld [vmem:[%s1 + $0xb0] sm:$0xff]
    %v89 = vld [vmem:[%s1 + $0xb8] sm:$0xff]
    %v90 = vld [vmem:[%s1 + $0xc0] sm:$0xff]
    %v91 = vld [vmem:[%s1 + $0xc8] sm:$0xff]
    %v92 = vld [vmem:[%s1 + $0xd0] sm:$0xff]
    %v93 = vld [vmem:[%s1 + $0xd8] sm:$0xff]
    %v94 = vld [vmem:[%s1 + $0xe0] sm:$0xff]
    %v95 = vld [vmem:[%s1 + $0xe8] sm:$0xff]
    %v96 = vld [vmem:[%s1 + $0xf0] sm:$0xff]
    %v97 = vld [vmem:[%s1 + $0xf8] sm:$0xff]
    %v98 = vld [vmem:[%s1 + $0x100] sm:$0xff]
    %v99 = vld [vmem:[%s1 + $0x108] sm:$0xff]
    %v100 = vld [vmem:[%s1 + $0x110] sm:$0xff]
    %v101 = vld [vmem:[%s1 + $0x118] sm:$0xff]
    %v102 = vld [vmem:[%s1 + $0x120] sm:$0xff]
    %v103 = vld [vmem:[%s1 + $0x128] sm:$0xff]
    %v104 = vld [vmem:[%s1 + $0x130] sm:$0xff]
    %v105 = vld [vmem:[%s1 + $0x138] sm:$0xff]
    %v106 = vld [vmem:[%s1 + $0x140] sm:$0xff]
    %v107 = vld [vmem:[%s1 + $0x148] sm:$0xff]
    %v108 = vld [vmem:[%s1 + $0x150] sm:$0xff]
    %v109 = vld [vmem:[%s1 + $0x158] sm:$0xff]
    %v110 = vld [vmem:[%s1 + $0x160] sm:$0xff]
    %v111 = vld [vmem:[%s1 + $0x168] sm:$0xff]
    %v112 = vld [vmem:[%s1 + $0x170] sm:$0xff]
    %v113 = vld [vmem:[%s1 + $0x178] sm:$0xff]
    %v114 = vld [vmem:[%s1 + $0x180] sm:$0xff]
    %v115 = vld [vmem:[%s1 + $0x188] sm:$0xff]
    %v116 = vld [vmem:[%s1 + $0x190] sm:$0xff]
    %v117 = vld [vmem:[%s1 + $0x198] sm:$0xff]
    %v118 = vld [vmem:[%s1 + $0x1a0] sm:$0xff]
    %v119 = vld [vmem:[%s1 + $0x1a8] sm:$0xff]
    %v120 = vld [vmem:[%s1 + $0x1b0] sm:$0xff]
    %v121 = vld [vmem:[%s1 + $0x1b8] sm:$0xff]
    %v122 = vld [vmem:[%s1 + $0x1c0] sm:$0xff]
    %v123 = vld [vmem:[%s1 + $0x1c8] sm:$0xff]
    %v124 = vld [vmem:[%s1 + $0x1d0] sm:$0xff]
    %v125 = vld [vmem:[%s1 + $0x1d8] sm:$0xff]
    %v126 = vld [vmem:[%s1 + $0x1e0] sm:$0xff]
    %v127 = vld [vmem:[%s1 + $0x1e8] sm:$0xff]
    %v128 = vld [vmem:[%s1 + $0x1f0] sm:$0xff]
    %v129 = vld [vmem:[%s1 + $0x1f8] sm:$0xff]
    %v130 = vld [vmem:[%s1 + $0x200] sm:$0xff]
    %v131 = vld [vmem:[%s1 + $0x208] sm:$0xff]
    %v132 = vld [vmem:[%s1 + $0x210] sm:$0xff]
    %v133 = vld [vmem:[%s1 + $0x218] sm:$0xff]
    %v134 = vld [vmem:[%s1 + $0x220] sm:$0xff]
    %v135 = vld [vmem:[%s1 + $0x228] sm:$0xff]
    %v136 = vld [vmem:[%s1 + $0x230] sm:$0xff]
    %v137 = vld [vmem:[%s1 + $0x238] sm:$0xff]
    %v138 = vld [vmem:[%s1 + $0x240] sm:$0xff]
    %v139 = vld [vmem:[%s1 + $0x248] sm:$0xff]
    %v140 = vld [vmem:[%s1 + $0x250] sm:$0xff]
    %v141 = vld [vmem:[%s1 + $0x258] sm:$0xff]
    %v142 = vld [vmem:[%s1 + $0x260] sm:$0xff]
    %v143 = vld [vmem:[%s1 + $0x268] sm:$0xff]
    %v144 = vld [vmem:[%s1 + $0x270] sm:$0xff]
    %v145 = vld [vmem:[%s1 + $0x278] sm:$0xff]
    %v146 = vld [vmem:[%s1 + $0x280] sm:$0xff]
    %v147 = vld [vmem:[%s1 + $0x288] sm:$0xff]
    %v148 = vld [vmem:[%s1 + $0x290] sm:$0xff]
    %v149 = vld [vmem:[%s1 + $0x298] sm:$0xff]
    %v150 = vld [vmem:[%s1 + $0x2a0] sm:$0xff]
    %v151 = vld [vmem:[%s1 + $0x2a8] sm:$0xff]
    %v152 = vld [vmem:[%s1 + $0x2b0] sm:$0xff]
    %v153 = vld [vmem:[%s1 + $0x2b8] sm:$0xff]
    %v154 = vld [vmem:[%s1 + $0x2c0] sm:$0xff]
    %v155 = vld [vmem:[%s1 + $0x2c8] sm:$0xff]
    %v156 = vld [vmem:[%s1 + $0x2d0] sm:$0xff]
    %v157 = vld [vmem:[%s1 + $0x2d8] sm:$0xff]
    %v158 = vld [vmem:[%s1 + $0x2e0] sm:$0xff]
    %v159 = vld [vmem:[%s1 + $0x2e8] sm:$0xff]
    %v160 = vld [vmem:[%s1 + $0x2f0] sm:$0xff]
    %v161 = vld [vmem:[%s1 + $0x2f8] sm:$0xff]
    %v162 = vld [vmem:[%s1 + $0x300] sm:$0xff]
    %v163 = vld [vmem:[%s1 + $0x308] sm:$0xff]
    %v164 = vld [vmem:[%s1 + $0x310] sm:$0xff]
    %v165 = vld [vmem:[%s1 + $0x318] sm:$0xff]
    %v166 = vld [vmem:[%s1 + $0x320] sm:$0xff]
    %v167 = vld [vmem:[%s1 + $0x328] sm:$0xff]
    %v168 = vld [vmem:[%s1 + $0x330] sm:$0xff]
    %v169 = vld [vmem:[%s1 + $0x338] sm:$0xff]
    %v170 = vld [vmem:[%s1 + $0x340] sm:$0xff]
    %v171 = vld [vmem:[%s1 + $0x348] sm:$0xff]
    %v172 = vld [vmem:[%s1 + $0x350] sm:$0xff]
    %v173 = vld [vmem:[%s1 + $0x358] sm:$0xff]
    %v174 = vld [vmem:[%s1 + $0x360] sm:$0xff]
    %v175 = vld [vmem:[%s1 + $0x368] sm:$0xff]
    %v176 = vld [vmem:[%s1 + $0x370] sm:$0xff]
    %v177 = vld [vmem:[%s1 + $0x378] sm:$0xff]
    %v178 = vld [vmem:[%s1 + $0x380] sm:$0xff]
    %v179 = vld [vmem:[%s1 + $0x388] sm:$0xff]
    %v180 = vld [vmem:[%s1 + $0x390] sm:$0xff]
    %v181 = vld [vmem:[%s1 + $0x398] sm:$0xff]
    %v182 = vld [vmem:[%s1 + $0x3a0] sm:$0xff]
    %v183 = vld [vmem:[%s1 + $0x3a8] sm:$0xff]
    %v184 = vld [vmem:[%s1 + $0x3b0] sm:$0xff]
    %v185 = vld [vmem:[%s1 + $0x3b8] sm:$0xff]
    %v186 = vld [vmem:[%s1 + $0x3c0] sm:$0xff]
    %v187 = vld [vmem:[%s1 + $0x3c8] sm:$0xff]
    %v188 = vld [vmem:[%s1 + $0x3d0] sm:$0xff]
    %v189 = vld [vmem:[%s1 + $0x3d8] sm:$0xff]
    %v190 = vld [vmem:[%s1 + $0x3e0] sm:$0xff]
    %v191 = vld [vmem:[%s1 + $0x3e8] sm:$0xff]
    %v192 = vld [vmem:[%s1 + $0x3f0] sm:$0xff]
    %v193 = vld [vmem:[%s1 + $0x3f8] sm:$0xff]
    %v194 = vld [vmem:[%s1 + $0x400] sm:$0xff]
    %v195 = vld [vmem:[%s1 + $0x408] sm:$0xff]
    %v196 = vld [vmem:[%s1 + $0x410] sm:$0xff]
    %v197 = vld [vmem:[%s1 + $0x418] sm:$0xff]
    %v198 = vld [vmem:[%s1 + $0x420] sm:$0xff]
    %v199 = vld [vmem:[%s1 + $0x428] sm:$0xff]
    %v200 = vld [vmem:[%s1 + $0x430] sm:$0xff]
    %v201 = vld [vmem:[%s1 + $0x438] sm:$0xff]
    %v202 = vld [vmem:[%s1 + $0x440] sm:$0xff]
    %v203 = vld [vmem:[%s1 + $0x448] sm:$0xff]
    %v204 = vld [vmem:[%s1 + $0x450] sm:$0xff]
    %v205 = vld [vmem:[%s1 + $0x458] sm:$0xff]
    %v206 = vld [vmem:[%s1 + $0x460] sm:$0xff]
    %v207 = vld [vmem:[%s1 + $0x468] sm:$0xff]
    %v208 = vld [vmem:[%s1 + $0x470] sm:$0xff]
    %v209 = vld [vmem:[%s1 + $0x478] sm:$0xff]
    %v210 = vld [vmem:[%s2] sm:$0x1]
    %v212 = vlaneseq
    %v213 = vshrl.u32 %v212, 7
    %v214 = vsub.s32 0, %v213
    %v215 = vrot.slane %v210, %v214
    %217 = vmatprep.subr.mxu0 0.0
    %218 = vmatpush1.msra.mxu0 %v66
    %219 = vmatprep.subr.mxu0 0.0
    %220 = vmatpush1.msra.mxu0 %v67
    %221 = vmatprep.subr.mxu0 0.0
    %222 = vmatpush1.msra.mxu0 %v68
    %223 = vmatprep.subr.mxu0 0.0
    %224 = vmatpush1.msra.mxu0 %v69
    %225 = vmatprep.subr.mxu0 0.0
    %226 = vmatpush1.msra.mxu0 %v70
    %227 = vmatprep.subr.mxu0 0.0
    %228 = vmatpush1.msra.mxu0 %v71
    %229 = vmatprep.subr.mxu0 0.0
    %230 = vmatpush1.msra.mxu0 %v72
    %231 = vmatprep.subr.mxu0 0.0
    %232 = vmatpush1.msra.mxu0 %v73
    %233 = vmatprep.subr.mxu0 0.0
    %234 = vmatpush1.msra.mxu0 %v74
    %235 = vmatprep.subr.mxu0 0.0
    %236 = vmatpush1.msra.mxu0 %v75
    %237 = vmatprep.subr.mxu0 0.0
    %238 = vmatpush1.msra.mxu0 %v76
    %239 = vmatprep.subr.mxu0 0.0
    %240 = vmatpush1.msra.mxu0 %v77
    %241 = vmatprep.subr.mxu0 0.0
    %242 = vmatpush1.msra.mxu0 %v78
    %243 = vmatprep.subr.mxu0 0.0
    %244 = vmatpush1.msra.mxu0 %v79
    %245 = vmatprep.subr.mxu0 0.0
    %246 = vmatpush1.msra.mxu0 %v80
    %247 = vmatprep.subr.mxu0 0.0
    %248 = vmatpush1.msra.mxu0 %v81
    %249 = vmatprep.subr.mxu0 0.0
    %250 = vmatpush1.msra.mxu0 %v82
    %251 = vmatprep.subr.mxu0 0.0
    %252 = vmatpush1.msra.mxu0 %v83
    %253 = vmatprep.subr.mxu0 0.0
    %254 = vmatpush1.msra.mxu0 %v84
    %255 = vmatprep.subr.mxu0 0.0
    %256 = vmatpush1.msra.mxu0 %v85
    %257 = vmatprep.subr.mxu0 0.0
    %258 = vmatpush1.msra.mxu0 %v86
    %259 = vmatprep.subr.mxu0 0.0
    %260 = vmatpush1.msra.mxu0 %v87
    %261 = vmatprep.subr.mxu0 0.0
    %262 = vmatpush1.msra.mxu0 %v88
    %263 = vmatprep.subr.mxu0 0.0
    %264 = vmatpush1.msra.mxu0 %v89
    %265 = vmatprep.subr.mxu0 0.0
    %266 = vmatpush1.msra.mxu0 %v90
    %267 = vmatprep.subr.mxu0 0.0
    %268 = vmatpush1.msra.mxu0 %v91
    %269 = vmatprep.subr.mxu0 0.0
    %270 = vmatpush1.msra.mxu0 %v92
    %271 = vmatprep.subr.mxu0 0.0
    %272 = vmatpush1.msra.mxu0 %v93
    %273 = vmatprep.subr.mxu0 0.0
    %274 = vmatpush1.msra.mxu0 %v94
    %275 = vmatprep.subr.mxu0 0.0
    %276 = vmatpush1.msra.mxu0 %v95
    %277 = vmatprep.subr.mxu0 0.0
    %278 = vmatpush1.msra.mxu0 %v96
    %279 = vmatprep.subr.mxu0 0.0
    %280 = vmatpush1.msra.mxu0 %v97
    %281 = vmatprep.mubr.f32.mxu0 %v31
    %282 = vmatmul.mubr.f32.gmra.mrb[0].mxu0 %v30
    %v283 = vpop.f32.mrb[0].mxu0
    %v284 = vadd.f32 %v215, %v283
    %v285 = vpop.f32.mrb[0].mxu0
    %286 = vmatprep.mubr.f32.mxu0 %v40
    %287 = vmatmul.mubr.f32.gmra.mrb[0].mxu0 %v39
    %v288 = vpop.f32.mrb[0].mxu0
    %v289 = vadd.f32 %v215, %v288
    %v290 = vpop.f32.mrb[0].mxu0
    %291 = vmatprep.mubr.f32.mxu0 %v49
    %292 = vmatmul.mubr.f32.gmra.mrb[0].mxu0 %v48
    %v293 = vpop.f32.mrb[0].mxu0
    %v294 = vadd.f32 %v215, %v293
    %v295 = vpop.f32.mrb[0].mxu0
    %296 = vmatprep.mubr.f32.mxu0 %v58
    %297 = vmatmul.mubr.f32.gmra.mrb[0].mxu0 %v57
    %v298 = vpop.f32.mrb[0].mxu0
    %v299 = vadd.f32 %v215, %v298
    %v300 = vpop.f32.mrb[0].mxu0
    %301 = vdwg.mxu0
    %302 = vmatprep.subr.mxu0 0.0
    %303 = vmatpush1.msra.mxu0 %v98
    %304 = vmatprep.subr.mxu0 0.0
    %305 = vmatpush1.msra.mxu0 %v99
    %306 = vmatprep.subr.mxu0 0.0
    %307 = vmatpush1.msra.mxu0 %v100
    %308 = vmatprep.subr.mxu0 0.0
    %309 = vmatpush1.msra.mxu0 %v101
    %310 = vmatprep.subr.mxu0 0.0
    %311 = vmatpush1.msra.mxu0 %v102
    %312 = vmatprep.subr.mxu0 0.0
    %313 = vmatpush1.msra.mxu0 %v103
    %314 = vmatprep.subr.mxu0 0.0
    %315 = vmatpush1.msra.mxu0 %v104
    %316 = vmatprep.subr.mxu0 0.0
    %317 = vmatpush1.msra.mxu0 %v105
    %318 = vmatprep.subr.mxu0 0.0
    %319 = vmatpush1.msra.mxu0 %v106
    %320 = vmatprep.subr.mxu0 0.0
    %321 = vmatpush1.msra.mxu0 %v107
    %322 = vmatprep.subr.mxu0 0.0
    %323 = vmatpush1.msra.mxu0 %v108
    %324 = vmatprep.subr.mxu0 0.0
    %325 = vmatpush1.msra.mxu0 %v109
    %326 = vmatprep.subr.mxu0 0.0
    %327 = vmatpush1.msra.mxu0 %v110
    %328 = vmatprep.subr.mxu0 0.0
    %329 = vmatpush1.msra.mxu0 %v111
    %330 = vmatprep.subr.mxu0 0.0
    %331 = vmatpush1.msra.mxu0 %v112
    %332 = vmatprep.subr.mxu0 0.0
    %333 = vmatpush1.msra.mxu0 %v113
    %334 = vmatprep.subr.mxu0 0.0
    %335 = vmatpush1.msra.mxu0 %v114
    %336 = vmatprep.subr.mxu0 0.0
    %337 = vmatpush1.msra.mxu0 %v115
    %338 = vmatprep.subr.mxu0 0.0
    %339 = vmatpush1.msra.mxu0 %v116
    %340 = vmatprep.subr.mxu0 0.0
    %341 = vmatpush1.msra.mxu0 %v117
    %342 = vmatprep.subr.mxu0 0.0
    %343 = vmatpush1.msra.mxu0 %v118
    %344 = vmatprep.subr.mxu0 0.0
    %345 = vmatpush1.msra.mxu0 %v119
    %346 = vmatprep.subr.mxu0 0.0
    %347 = vmatpush1.msra.mxu0 %v120
    %348 = vmatprep.subr.mxu0 0.0
    %349 = vmatpush1.msra.mxu0 %v121
    %350 = vmatprep.subr.mxu0 0.0
    %351 = vmatpush1.msra.mxu0 %v122
    %352 = vmatprep.subr.mxu0 0.0
    %353 = vmatpush1.msra.mxu0 %v123
    %354 = vmatprep.subr.mxu0 0.0
    %355 = vmatpush1.msra.mxu0 %v124
    %356 = vmatprep.subr.mxu0 0.0
    %357 = vmatpush1.msra.mxu0 %v125
    %358 = vmatprep.subr.mxu0 0.0
    %359 = vmatpush1.msra.mxu0 %v126
    %360 = vmatprep.subr.mxu0 0.0
    %361 = vmatpush1.msra.mxu0 %v127
    %362 = vmatprep.subr.mxu0 0.0
    %363 = vmatpush1.msra.mxu0 %v128
    %364 = vmatprep.subr.mxu0 0.0
    %365 = vmatpush1.msra.mxu0 %v129
    %366 = vmatprep.mubr.f32.mxu0 %v33
    %367 = vmatmul.mubr.f32.gmra.mrb[0].mxu0 %v32
    %v368 = vpop.f32.mrb[0].mxu0
    %v369 = vadd.f32 %v284, %v368
    %v370 = vpop.f32.mrb[0].mxu0
    %371 = vmatprep.mubr.f32.mxu0 %v42
    %372 = vmatmul.mubr.f32.gmra.mrb[0].mxu0 %v41
    %v373 = vpop.f32.mrb[0].mxu0
    %v374 = vadd.f32 %v289, %v373
    %v375 = vpop.f32.mrb[0].mxu0
    %376 = vmatprep.mubr.f32.mxu0 %v51
    %377 = vmatmul.mubr.f32.gmra.mrb[0].mxu0 %v50
    %v378 = vpop.f32.mrb[0].mxu0
    %v379 = vadd.f32 %v294, %v378
    %v380 = vpop.f32.mrb[0].mxu0
    %381 = vmatprep.mubr.f32.mxu0 %v60
    %382 = vmatmul.mubr.f32.gmra.mrb[0].mxu0 %v59
    %v383 = vpop.f32.mrb[0].mxu0
    %v384 = vadd.f32 %v299, %v383
    %v385 = vpop.f32.mrb[0].mxu0
    %386 = vdwg.mxu0
    %387 = vmatprep.subr.mxu0 0.0
    %388 = vmatpush1.msra.mxu0 %v130
    %389 = vmatprep.subr.mxu0 0.0
    %390 = vmatpush1.msra.mxu0 %v131
    %391 = vmatprep.subr.mxu0 0.0
    %392 = vmatpush1.msra.mxu0 %v132
    %393 = vmatprep.subr.mxu0 0.0
    %394 = vmatpush1.msra.mxu0 %v133
    %395 = vmatprep.subr.mxu0 0.0
    %396 = vmatpush1.msra.mxu0 %v134
    %397 = vmatprep.subr.mxu0 0.0
    %398 = vmatpush1.msra.mxu0 %v135
    %399 = vmatprep.subr.mxu0 0.0
    %400 = vmatpush1.msra.mxu0 %v136
    %401 = vmatprep.subr.mxu0 0.0
    %402 = vmatpush1.msra.mxu0 %v137
    %403 = vmatprep.subr.mxu0 0.0
    %404 = vmatpush1.msra.mxu0 %v138
    %405 = vmatprep.subr.mxu0 0.0
    %406 = vmatpush1.msra.mxu0 %v139
    %407 = vmatprep.subr.mxu0 0.0
    %408 = vmatpush1.msra.mxu0 %v140
    %409 = vmatprep.subr.mxu0 0.0
    %410 = vmatpush1.msra.mxu0 %v141
    %411 = vmatprep.subr.mxu0 0.0
    %412 = vmatpush1.msra.mxu0 %v142
    %413 = vmatprep.subr.mxu0 0.0
    %414 = vmatpush1.msra.mxu0 %v143
    %415 = vmatprep.subr.mxu0 0.0
    %416 = vmatpush1.msra.mxu0 %v144
    %417 = vmatprep.subr.mxu0 0.0
    %418 = vmatpush1.msra.mxu0 %v145
    %419 = vmatprep.subr.mxu0 0.0
    %420 = vmatpush1.msra.mxu0 %v146
    %421 = vmatprep.subr.mxu0 0.0
    %422 = vmatpush1.msra.mxu0 %v147
    %423 = vmatprep.subr.mxu0 0.0
    %424 = vmatpush1.msra.mxu0 %v148
    %425 = vmatprep.subr.mxu0 0.0
    %426 = vmatpush1.msra.mxu0 %v149
    %427 = vmatprep.subr.mxu0 0.0
    %428 = vmatpush1.msra.mxu0 %v150
    %429 = vmatprep.subr.mxu0 0.0
    %430 = vmatpush1.msra.mxu0 %v151
    %431 = vmatprep.subr.mxu0 0.0
    %432 = vmatpush1.msra.mxu0 %v152
    %433 = vmatprep.subr.mxu0 0.0
    %434 = vmatpush1.msra.mxu0 %v153
    %435 = vmatprep.subr.mxu0 0.0
    %436 = vmatpush1.msra.mxu0 %v154
    %437 = vmatprep.subr.mxu0 0.0
    %438 = vmatpush1.msra.mxu0 %v155
    %439 = vmatprep.subr.mxu0 0.0
    %440 = vmatpush1.msra.mxu0 %v156
    %441 = vmatprep.subr.mxu0 0.0
    %442 = vmatpush1.msra.mxu0 %v157
    %443 = vmatprep.subr.mxu0 0.0
    %444 = vmatpush1.msra.mxu0 %v158
    %445 = vmatprep.subr.mxu0 0.0
    %446 = vmatpush1.msra.mxu0 %v159
    %447 = vmatprep.subr.mxu0 0.0
    %448 = vmatpush1.msra.mxu0 %v160
    %449 = vmatprep.subr.mxu0 0.0
    %450 = vmatpush1.msra.mxu0 %v161
    %451 = vmatprep.mubr.f32.mxu0 %v35
    %452 = vmatmul.mubr.f32.gmra.mrb[0].mxu0 %v34
    %v453 = vpop.f32.mrb[0].mxu0
    %v454 = vadd.f32 %v369, %v453
    %v455 = vpop.f32.mrb[0].mxu0
    %456 = vmatprep.mubr.f32.mxu0 %v44
    %457 = vmatmul.mubr.f32.gmra.mrb[0].mxu0 %v43
    %v458 = vpop.f32.mrb[0].mxu0
    %v459 = vadd.f32 %v374, %v458
    %v460 = vpop.f32.mrb[0].mxu0
    %461 = vmatprep.mubr.f32.mxu0 %v53
    %462 = vmatmul.mubr.f32.gmra.mrb[0].mxu0 %v52
    %v463 = vpop.f32.mrb[0].mxu0
    %v464 = vadd.f32 %v379, %v463
    %v465 = vpop.f32.mrb[0].mxu0
    %466 = vmatprep.mubr.f32.mxu0 %v62
    %467 = vmatmul.mubr.f32.gmra.mrb[0].mxu0 %v61
    %v468 = vpop.f32.mrb[0].mxu0
    %v469 = vadd.f32 %v384, %v468
    %v470 = vpop.f32.mrb[0].mxu0
    %471 = vdwg.mxu0
    %472 = vmatprep.subr.mxu0 0.0
    %473 = vmatpush1.msra.mxu0 %v162
    %474 = vmatprep.subr.mxu0 0.0
    %475 = vmatpush1.msra.mxu0 %v163
    %476 = vmatprep.subr.mxu0 0.0
    %477 = vmatpush1.msra.mxu0 %v164
    %478 = vmatprep.subr.mxu0 0.0
    %479 = vmatpush1.msra.mxu0 %v165
    %480 = vmatprep.subr.mxu0 0.0
    %481 = vmatpush1.msra.mxu0 %v166
    %482 = vmatprep.subr.mxu0 0.0
    %483 = vmatpush1.msra.mxu0 %v167
    %484 = vmatprep.subr.mxu0 0.0
    %485 = vmatpush1.msra.mxu0 %v168
    %486 = vmatprep.subr.mxu0 0.0
    %487 = vmatpush1.msra.mxu0 %v169
    %488 = vmatprep.subr.mxu0 0.0
    %489 = vmatpush1.msra.mxu0 %v170
    %490 = vmatprep.subr.mxu0 0.0
    %491 = vmatpush1.msra.mxu0 %v171
    %492 = vmatprep.subr.mxu0 0.0
    %493 = vmatpush1.msra.mxu0 %v172
    %494 = vmatprep.subr.mxu0 0.0
    %495 = vmatpush1.msra.mxu0 %v173
    %496 = vmatprep.subr.mxu0 0.0
    %497 = vmatpush1.msra.mxu0 %v174
    %498 = vmatprep.subr.mxu0 0.0
    %499 = vmatpush1.msra.mxu0 %v175
    %500 = vmatprep.subr.mxu0 0.0
    %501 = vmatpush1.msra.mxu0 %v176
    %502 = vmatprep.subr.mxu0 0.0
    %503 = vmatpush1.msra.mxu0 %v177
    %504 = vmatprep.subr.mxu0 0.0
    %505 = vmatpush1.msra.mxu0 %v178
    %506 = vmatprep.subr.mxu0 0.0
    %507 = vmatpush1.msra.mxu0 %v179
    %508 = vmatprep.subr.mxu0 0.0
    %509 = vmatpush1.msra.mxu0 %v180
    %510 = vmatprep.subr.mxu0 0.0
    %511 = vmatpush1.msra.mxu0 %v181
    %512 = vmatprep.subr.mxu0 0.0
    %513 = vmatpush1.msra.mxu0 %v182
    %514 = vmatprep.subr.mxu0 0.0
    %515 = vmatpush1.msra.mxu0 %v183
    %516 = vmatprep.subr.mxu0 0.0
    %517 = vmatpush1.msra.mxu0 %v184
    %518 = vmatprep.subr.mxu0 0.0
    %519 = vmatpush1.msra.mxu0 %v185
    %520 = vmatprep.subr.mxu0 0.0
    %521 = vmatpush1.msra.mxu0 %v186
    %522 = vmatprep.subr.mxu0 0.0
    %523 = vmatpush1.msra.mxu0 %v187
    %524 = vmatprep.subr.mxu0 0.0
    %525 = vmatpush1.msra.mxu0 %v188
    %526 = vmatprep.subr.mxu0 0.0
    %527 = vmatpush1.msra.mxu0 %v189
    %528 = vmatprep.subr.mxu0 0.0
    %529 = vmatpush1.msra.mxu0 %v190
    %530 = vmatprep.subr.mxu0 0.0
    %531 = vmatpush1.msra.mxu0 %v191
    %532 = vmatprep.subr.mxu0 0.0
    %533 = vmatpush1.msra.mxu0 %v192
    %534 = vmatprep.subr.mxu0 0.0
    %535 = vmatpush1.msra.mxu0 %v193
    %536 = vmatprep.mubr.f32.mxu0 %v37
    %537 = vmatmul.mubr.f32.gmra.mrb[0].mxu0 %v36
    %v538 = vpop.f32.mrb[0].mxu0
    %v539 = vadd.f32 %v454, %v538
    %v540 = vpop.f32.mrb[0].mxu0
    %541 = vmatprep.mubr.f32.mxu0 %v46
    %542 = vmatmul.mubr.f32.gmra.mrb[0].mxu0 %v45
    %v543 = vpop.f32.mrb[0].mxu0
    %v544 = vadd.f32 %v459, %v543
    %v545 = vpop.f32.mrb[0].mxu0
    %546 = vmatprep.mubr.f32.mxu0 %v55
    %547 = vmatmul.mubr.f32.gmra.mrb[0].mxu0 %v54
    %v548 = vpop.f32.mrb[0].mxu0
    %v549 = vadd.f32 %v464, %v548
    %v550 = vpop.f32.mrb[0].mxu0
    %551 = vmatprep.mubr.f32.mxu0 %v64
    %552 = vmatmul.mubr.f32.gmra.mrb[0].mxu0 %v63
    %v553 = vpop.f32.mrb[0].mxu0
    %v554 = vadd.f32 %v469, %v553
    %v555 = vpop.f32.mrb[0].mxu0
    %556 = vdwg.mxu0
    %557 = vmatprep.subr.mxu0 0.0
    %558 = vmatpush1.msra.mxu0 %v194
    %559 = vmatprep.subr.mxu0 0.0
    %560 = vmatpush1.msra.mxu0 %v195
    %561 = vmatprep.subr.mxu0 0.0
    %562 = vmatpush1.msra.mxu0 %v196
    %563 = vmatprep.subr.mxu0 0.0
    %564 = vmatpush1.msra.mxu0 %v197
    %565 = vmatprep.subr.mxu0 0.0
    %566 = vmatpush1.msra.mxu0 %v198
    %567 = vmatprep.subr.mxu0 0.0
    %568 = vmatpush1.msra.mxu0 %v199
    %569 = vmatprep.subr.mxu0 0.0
    %570 = vmatpush1.msra.mxu0 %v200
    %571 = vmatprep.subr.mxu0 0.0
    %572 = vmatpush1.msra.mxu0 %v201
    %573 = vmatprep.subr.mxu0 0.0
    %574 = vmatpush1.msra.mxu0 %v202
    %575 = vmatprep.subr.mxu0 0.0
    %576 = vmatpush1.msra.mxu0 %v203
    %577 = vmatprep.subr.mxu0 0.0
    %578 = vmatpush1.msra.mxu0 %v204
    %579 = vmatprep.subr.mxu0 0.0
    %580 = vmatpush1.msra.mxu0 %v205
    %581 = vmatprep.subr.mxu0 0.0
    %582 = vmatpush1.msra.mxu0 %v206
    %583 = vmatprep.subr.mxu0 0.0
    %584 = vmatpush1.msra.mxu0 %v207
    %585 = vmatprep.subr.mxu0 0.0
    %586 = vmatpush1.msra.mxu0 %v208
    %587 = vmatprep.subr.mxu0 0.0
    %588 = vmatpush1.msra.mxu0 %v209
    %589 = vmatprep.subr.mxu0 0.0
    %590 = vmatpush1.msra.mxu0 0.0
    %591 = vmatprep.subr.mxu0 0.0
    %592 = vmatpush1.msra.mxu0 0.0
    %593 = vmatprep.subr.mxu0 0.0
    %594 = vmatpush1.msra.mxu0 0.0
    %595 = vmatprep.subr.mxu0 0.0
    %596 = vmatpush1.msra.mxu0 0.0
    %597 = vmatprep.subr.mxu0 0.0
    %598 = vmatpush1.msra.mxu0 0.0
    %599 = vmatprep.subr.mxu0 0.0
    %600 = vmatpush1.msra.mxu0 0.0
    %601 = vmatprep.subr.mxu0 0.0
    %602 = vmatpush1.msra.mxu0 0.0
    %603 = vmatprep.subr.mxu0 0.0
    %604 = vmatpush1.msra.mxu0 0.0
    %605 = vmatprep.subr.mxu0 0.0
    %606 = vmatpush1.msra.mxu0 0.0
    %607 = vmatprep.subr.mxu0 0.0
    %608 = vmatpush1.msra.mxu0 0.0
    %609 = vmatprep.subr.mxu0 0.0
    %610 = vmatpush1.msra.mxu0 0.0
    %611 = vmatprep.subr.mxu0 0.0
    %612 = vmatpush1.msra.mxu0 0.0
    %613 = vmatprep.subr.mxu0 0.0
    %614 = vmatpush1.msra.mxu0 0.0
    %615 = vmatprep.subr.mxu0 0.0
    %616 = vmatpush1.msra.mxu0 0.0
    %617 = vmatprep.subr.mxu0 0.0
    %618 = vmatpush1.msra.mxu0 0.0
    %619 = vmatprep.subr.mxu0 0.0
    %620 = vmatpush1.msra.mxu0 0.0
    %621 = vmatprep.mubr.f32.mxu0 0.0
    %622 = vmatmul.mubr.f32.gmra.mrb[0].mxu0 %v38
    %v623 = vpop.f32.mrb[0].mxu0
    %v624 = vadd.f32 %v539, %v623
    %v625 = vpop.f32.mrb[0].mxu0
    %626 = vmatprep.mubr.f32.mxu0 0.0
    %627 = vmatmul.mubr.f32.gmra.mrb[0].mxu0 %v47
    %v628 = vpop.f32.mrb[0].mxu0
    %v629 = vadd.f32 %v544, %v628
    %v630 = vpop.f32.mrb[0].mxu0
    %631 = vmatprep.mubr.f32.mxu0 0.0
    %632 = vmatmul.mubr.f32.gmra.mrb[0].mxu0 %v56
    %v633 = vpop.f32.mrb[0].mxu0
    %v634 = vadd.f32 %v549, %v633
    %v635 = vpop.f32.mrb[0].mxu0
    %636 = vmatprep.mubr.f32.mxu0 0.0
    %637 = vmatmul.mubr.f32.gmra.mrb[0].mxu0 %v65
    %v638 = vpop.f32.mrb[0].mxu0
    %v639 = vadd.f32 %v554, %v638
    %v640 = vpop.f32.mrb[0].mxu0
    %641 = vdwg.mxu0
    %v642 = vmax.f32 %v624, 0.0
    %v643 = vmax.f32 %v629, 0.0
    %v644 = vmax.f32 %v634, 0.0
    %v645 = vmax.f32 %v639, 0.0
    %v647 = vrot.slane %v642, 2
    %v649 = vmax.f32 %v642, %v647
    %v650 = vrot.slane %v642, 4
    %v652 = vmax.f32 %v649, %v650
    %v653 = vrot.slane %v642, 6
    %v655 = vmax.f32 %v652, %v653
    %v656 = vmax.f32 %v655, %v643
    %v658 = vrot.slane %v643, 2
    %v660 = vmax.f32 %v656, %v658
    %v661 = vrot.slane %v643, 4
    %v663 = vmax.f32 %v660, %v661
    %v664 = vrot.slane %v643, 6
    %v666 = vmax.f32 %v663, %v664
    %v667 = vmax.f32 %v666, %v644
    %v669 = vrot.slane %v644, 2
    %v671 = vmax.f32 %v667, %v669
    %v672 = vrot.slane %v644, 4
    %v674 = vmax.f32 %v671, %v672
    %v675 = vrot.slane %v644, 6
    %v677 = vmax.f32 %v674, %v675
    %v678 = vmax.f32 %v677, %v645
    %v680 = vrot.slane %v645, 2
    %v682 = vmax.f32 %v678, %v680
    %v683 = vrot.slane %v645, 4
    %v685 = vmax.f32 %v682, %v683
    %v686 = vrot.slane %v645, 6
    %v688 = vmax.f32 %v685, %v686
    %689 = vst [vmem:[#allocation2] sm:$0x3] %v688
    %v690 = vld [vmem:[%s3] sm:$0xff]
    %v691 = vld [vmem:[%s3 + $0x8] sm:$0xff]
    %v692 = vld [vmem:[%s3 + $0x10] sm:$0xff]
    %v693 = vld [vmem:[%s3 + $0x18] sm:$0xff]
    %v694 = vld [vmem:[%s3 + $0x20] sm:$0xff]
    %v695 = vld [vmem:[%s3 + $0x28] sm:$0xff]
    %v696 = vld [vmem:[%s3 + $0x30] sm:$0xff]
    %v697 = vld [vmem:[%s3 + $0x38] sm:$0xff]
    %v698 = vld [vmem:[%s3 + $0x40] sm:$0xff]
    %v699 = vld [vmem:[%s3 + $0x48] sm:$0xff]
    %v700 = vld [vmem:[%s3 + $0x50] sm:$0xff]
    %v701 = vld [vmem:[%s3 + $0x58] sm:$0xff]
    %v702 = vld [vmem:[%s3 + $0x60] sm:$0xff]
    %v703 = vld [vmem:[%s3 + $0x68] sm:$0xff]
    %v704 = vld [vmem:[%s3 + $0x70] sm:$0xff]
    %v705 = vld [vmem:[%s3 + $0x78] sm:$0xff]
    %v706 = vld [vmem:[%s4] sm:$0x1]
    %v708 = vlaneseq
    %v709 = vshrl.u32 %v708, 7
    %v710 = vsub.s32 0, %v709
    %v711 = vrot.slane %v706, %v710
    %713 = vmatprep.subr.mxu0 0.0
    %714 = vmatpush1.msra.mxu0 %v690
    %715 = vmatprep.subr.mxu0 0.0
    %716 = vmatpush1.msra.mxu0 %v691
    %717 = vmatprep.subr.mxu0 0.0
    %718 = vmatpush1.msra.mxu0 %v692
    %719 = vmatprep.subr.mxu0 0.0
    %720 = vmatpush1.msra.mxu0 %v693
    %721 = vmatprep.subr.mxu0 0.0
    %722 = vmatpush1.msra.mxu0 %v694
    %723 = vmatprep.subr.mxu0 0.0
    %724 = vmatpush1.msra.mxu0 %v695
    %725 = vmatprep.subr.mxu0 0.0
    %726 = vmatpush1.msra.mxu0 %v696
    %727 = vmatprep.subr.mxu0 0.0
    %728 = vmatpush1.msra.mxu0 %v697
    %729 = vmatprep.subr.mxu0 0.0
    %730 = vmatpush1.msra.mxu0 %v698
    %731 = vmatprep.subr.mxu0 0.0
    %732 = vmatpush1.msra.mxu0 %v699
    %733 = vmatprep.subr.mxu0 0.0
    %734 = vmatpush1.msra.mxu0 %v700
    %735 = vmatprep.subr.mxu0 0.0
    %736 = vmatpush1.msra.mxu0 %v701
    %737 = vmatprep.subr.mxu0 0.0
    %738 = vmatpush1.msra.mxu0 %v702
    %739 = vmatprep.subr.mxu0 0.0
    %740 = vmatpush1.msra.mxu0 %v703
    %741 = vmatprep.subr.mxu0 0.0
    %742 = vmatpush1.msra.mxu0 %v704
    %743 = vmatprep.subr.mxu0 0.0
    %744 = vmatpush1.msra.mxu0 %v705
    %745 = vmatprep.subr.mxu0 0.0
    %746 = vmatpush1.msra.mxu0 0.0
    %747 = vmatprep.subr.mxu0 0.0
    %748 = vmatpush1.msra.mxu0 0.0
    %749 = vmatprep.subr.mxu0 0.0
    %750 = vmatpush1.msra.mxu0 0.0
    %751 = vmatprep.subr.mxu0 0.0
    %752 = vmatpush1.msra.mxu0 0.0
    %753 = vmatprep.subr.mxu0 0.0
    %754 = vmatpush1.msra.mxu0 0.0
    %755 = vmatprep.subr.mxu0 0.0
    %756 = vmatpush1.msra.mxu0 0.0
    %757 = vmatprep.subr.mxu0 0.0
    %758 = vmatpush1.msra.mxu0 0.0
    %759 = vmatprep.subr.mxu0 0.0
    %760 = vmatpush1.msra.mxu0 0.0
    %761 = vmatprep.subr.mxu0 0.0
    %762 = vmatpush1.msra.mxu0 0.0
    %763 = vmatprep.subr.mxu0 0.0
    %764 = vmatpush1.msra.mxu0 0.0
    %765 = vmatprep.subr.mxu0 0.0
    %766 = vmatpush1.msra.mxu0 0.0
    %767 = vmatprep.subr.mxu0 0.0
    %768 = vmatpush1.msra.mxu0 0.0
    %769 = vmatprep.subr.mxu0 0.0
    %770 = vmatpush1.msra.mxu0 0.0
    %771 = vmatprep.subr.mxu0 0.0
    %772 = vmatpush1.msra.mxu0 0.0
    %773 = vmatprep.subr.mxu0 0.0
    %774 = vmatpush1.msra.mxu0 0.0
    %775 = vmatprep.subr.mxu0 0.0
    %776 = vmatpush1.msra.mxu0 0.0
    %777 = vmatprep.mubr.f32.mxu0 0.0
    %778 = vmatmul.mubr.f32.gmra.mrb[0].mxu0 %v688
    %v779 = vpop.f32.mrb[0].mxu0
    %v780 = vadd.f32 %v711, %v779
    %v781 = vpop.f32.mrb[0].mxu0
    %782 = vdwg.mxu0
    %v783 = vmax.f32 %v780, 0.0
    %v784 = vld [vmem:[%s5] sm:$0xff]
    %v785 = vld [vmem:[%s5 + $0x8] sm:$0xff]
    %v786 = vld [vmem:[%s5 + $0x10] sm:$0xff]
    %v787 = vld [vmem:[%s5 + $0x18] sm:$0xff]
    %v788 = vld [vmem:[%s5 + $0x20] sm:$0xff]
    %v789 = vld [vmem:[%s5 + $0x28] sm:$0xff]
    %v790 = vld [vmem:[%s5 + $0x30] sm:$0xff]
    %v791 = vld [vmem:[%s5 + $0x38] sm:$0xff]
    %v792 = vld [vmem:[%s5 + $0x40] sm:$0xff]
    %v793 = vld [vmem:[%s5 + $0x48] sm:$0xff]
    %v794 = vld [vmem:[%s5 + $0x50] sm:$0xff]
    %v795 = vld [vmem:[%s5 + $0x58] sm:$0xff]
    %v796 = vld [vmem:[%s5 + $0x60] sm:$0xff]
    %v797 = vld [vmem:[%s5 + $0x68] sm:$0xff]
    %v798 = vld [vmem:[%s5 + $0x70] sm:$0xff]
    %v799 = vld [vmem:[%s5 + $0x78] sm:$0xff]
    %v800 = vld [vmem:[%s6] sm:$0x1]
    %v802 = vlaneseq
    %v803 = vshrl.u32 %v802, 7
    %v804 = vsub.s32 0, %v803
    %v805 = vrot.slane %v800, %v804
    %807 = vmatprep.subr.mxu0 0.0
    %808 = vmatpush1.msra.mxu0 %v784
    %809 = vmatprep.subr.mxu0 0.0
    %810 = vmatpush1.msra.mxu0 %v785
    %811 = vmatprep.subr.mxu0 0.0
    %812 = vmatpush1.msra.mxu0 %v786
    %813 = vmatprep.subr.mxu0 0.0
    %814 = vmatpush1.msra.mxu0 %v787
    %815 = vmatprep.subr.mxu0 0.0
    %816 = vmatpush1.msra.mxu0 %v788
    %817 = vmatprep.subr.mxu0 0.0
    %818 = vmatpush1.msra.mxu0 %v789
    %819 = vmatprep.subr.mxu0 0.0
    %820 = vmatpush1.msra.mxu0 %v790
    %821 = vmatprep.subr.mxu0 0.0
    %822 = vmatpush1.msra.mxu0 %v791
    %823 = vmatprep.subr.mxu0 0.0
    %824 = vmatpush1.msra.mxu0 %v792
    %825 = vmatprep.subr.mxu0 0.0
    %826 = vmatpush1.msra.mxu0 %v793
    %827 = vmatprep.subr.mxu0 0.0
    %828 = vmatpush1.msra.mxu0 %v794
    %829 = vmatprep.subr.mxu0 0.0
    %830 = vmatpush1.msra.mxu0 %v795
    %831 = vmatprep.subr.mxu0 0.0
    %832 = vmatpush1.msra.mxu0 %v796
    %833 = vmatprep.subr.mxu0 0.0
    %834 = vmatpush1.msra.mxu0 %v797
    %835 = vmatprep.subr.mxu0 0.0
    %836 = vmatpush1.msra.mxu0 %v798
    %837 = vmatprep.subr.mxu0 0.0
    %838 = vmatpush1.msra.mxu0 %v799
    %839 = vmatprep.subr.mxu0 0.0
    %840 = vmatpush1.msra.mxu0 0.0
    %841 = vmatprep.subr.mxu0 0.0
    %842 = vmatpush1.msra.mxu0 0.0
    %843 = vmatprep.subr.mxu0 0.0
    %844 = vmatpush1.msra.mxu0 0.0
    %845 = vmatprep.subr.mxu0 0.0
    %846 = vmatpush1.msra.mxu0 0.0
    %847 = vmatprep.subr.mxu0 0.0
    %848 = vmatpush1.msra.mxu0 0.0
    %849 = vmatprep.subr.mxu0 0.0
    %850 = vmatpush1.msra.mxu0 0.0
    %851 = vmatprep.subr.mxu0 0.0
    %852 = vmatpush1.msra.mxu0 0.0
    %853 = vmatprep.subr.mxu0 0.0
    %854 = vmatpush1.msra.mxu0 0.0
    %855 = vmatprep.subr.mxu0 0.0
    %856 = vmatpush1.msra.mxu0 0.0
    %857 = vmatprep.subr.mxu0 0.0
    %858 = vmatpush1.msra.mxu0 0.0
    %859 = vmatprep.subr.mxu0 0.0
    %860 = vmatpush1.msra.mxu0 0.0
    %861 = vmatprep.subr.mxu0 0.0
    %862 = vmatpush1.msra.mxu0 0.0
    %863 = vmatprep.subr.mxu0 0.0
    %864 = vmatpush1.msra.mxu0 0.0
    %865 = vmatprep.subr.mxu0 0.0
    %866 = vmatpush1.msra.mxu0 0.0
    %867 = vmatprep.subr.mxu0 0.0
    %868 = vmatpush1.msra.mxu0 0.0
    %869 = vmatprep.subr.mxu0 0.0
    %870 = vmatpush1.msra.mxu0 0.0
    %871 = vmatprep.mubr.f32.mxu0 0.0
    %872 = vmatmul.mubr.f32.gmra.mrb[0].mxu0 %v783
    %v873 = vpop.f32.mrb[0].mxu0
    %v874 = vadd.f32 %v805, %v873
    %v875 = vpop.f32.mrb[0].mxu0
    %876 = vdwg.mxu0
    %877 = vst [vmem:[#allocation4] sm:$0x3] %v874
    // Predicated region
    $region30: #{forward.7} parent=1 // pred_check
      _
    $region31: #{forward.7} parent=1 // pred_check_branch
      %879 = sbr.rel (0) target = $region33
    $region32: #{forward.7} parent=1 // pred_region
      %s881 = ssub.s32 32, 32
      %882 = vsyncadd [#allocation3], %s881
      %s884 = sshll.u32 [#allocation2], 4
      %s885 = int_to_ptr.vmem [resolvable:$true] %s884
      %887 = dma.vmem_to_hbm [thread:$0]  %s885, 32, %s7, [#allocation3]
    $region33: #{forward.7} parent=1 // pred_fallthru
      _
    // Predicated region
    $region34: #{forward.7} parent=1 // pred_check
      _
    $region35: #{forward.7} parent=1 // pred_check_branch
      %889 = sbr.rel (0) target = $region37
    $region36: #{forward.7} parent=1 // pred_region
      %s891 = ssub.s32 32, 32
      %892 = vsyncadd [#allocation5], %s891
      %s894 = sshll.u32 [#allocation4], 4
      %s895 = int_to_ptr.vmem [resolvable:$true] %s894
      %897 = dma.vmem_to_hbm [thread:$0]  %s895, 32, %s8, [#allocation5]
    $region37: #{forward.7} parent=1 // pred_fallthru
      _
    // Predicated region
    $region38: #{forward.7} parent=1 // pred_check
      _
    $region39: #{forward.7} parent=1 // pred_check_branch
      %899 = sbr.rel (0) target = $region41
    $region40: #{forward.7} parent=1 // pred_region
      %900 = dma.done [#allocation3], 32
    $region41: #{forward.7} parent=1 // pred_fallthru
      _
    // Predicated region
    $region42: #{forward.7} parent=1 // pred_check
      _
    $region43: #{forward.7} parent=1 // pred_check_branch
      %902 = sbr.rel (0) target = $region45
    $region44: #{forward.7} parent=1 // pred_region
      %903 = dma.done [#allocation5], 32
    $region45: #{forward.7} parent=1 // pred_fallthru
      _
    %904 = vsyncpa [#allocation3], 1
    %905 = vsyncpa [#allocation5], 1

</llo_original>
